<compile_context>
chip_gen: v7x
topology: tpu7x:2x2x1
jax: 0.10.0
libtpu: 0.0.40
codegen_flags: <defaults>
</compile_context>

<pallas_src>
import functools

import numpy as np
import jax
import jax.numpy as jnp
from jax.experimental import pallas as pl
from jax.experimental.pallas import tpu as pltpu

_BN_EPS = 1e-5


# ----------------------------------------------------------------------------
# Conv2d(3x3, padding=1, bias=False) + BatchNorm (folded) + ReLU
# ----------------------------------------------------------------------------

def conv3x3_bn_relu(x, w, scale, bias):
    """x: (N,H,W,Cin) f32, w: (3,3,Cin,Cout), scale/bias: (Cout,). Returns (N,H,W,Cout) f32.

    The padded image is flattened over spatial so that every (dy,dx) tap is a
    contiguous flat row-offset `dy*(W+2)+dx` — the 9 taps become 9 shifted
    2-D loads of the same VMEM block, each feeding an accumulated MXU matmul.
    Columns w >= W of each flat output row are garbage and sliced away.
    """
    N, H, W, Cin = x.shape
    Cout = w.shape[-1]
    Wp = W + 2              # padded width
    Hp = H + 3              # pad 1 top, 2 bottom (extra row keeps shifted flat reads in-slab)
    Mout = H * Wp           # flat output rows computed per image

    xp = jnp.pad(x, ((0, 0), (1, 2), (1, 1), (0, 0))).astype(jnp.bfloat16)
    xf = xp.reshape(N, Hp * Wp, Cin)                   # (N, S, Cin), one padded slab per image
    wt = w.reshape(9, Cin, Cout).astype(jnp.bfloat16)  # (9, Cin, Cout)
    s2 = scale.reshape(1, Cout).astype(jnp.float32)
    b2 = bias.reshape(1, Cout).astype(jnp.float32)

    def kernel(x_ref, w_ref, s_ref, b_ref, o_ref):
        # x_ref: (1, Hp*Wp, Cin) bf16; w_ref: (9, Cin, Cout) bf16
        acc = jnp.zeros((Mout, Cout), jnp.float32)
        for dy in range(3):                       # statically unrolled 9 taps
            for dx in range(3):
                off = dy * Wp + dx
                tap = x_ref[0, pl.ds(off, Mout), :]          # (Mout, Cin) bf16
                acc = acc + jnp.dot(tap, w_ref[dy * 3 + dx],
                                    preferred_element_type=jnp.float32)
        y = acc * s_ref[...] + b_ref[...]                    # folded BN (f32)
        o_ref[0] = jnp.maximum(y, 0.0).astype(o_ref.dtype)   # ReLU

    flops = 2 * N * Mout * Cin * Cout * 9
    bytes_accessed = xf.size * 2 + wt.size * 2 + N * Mout * Cout * 4 + 2 * Cout * 4

    out = pl.pallas_call(
        kernel,
        out_shape=jax.ShapeDtypeStruct((N, Mout, Cout), jnp.float32),
        grid=(N,),
        in_specs=[
            pl.BlockSpec((1, Hp * Wp, Cin), lambda n: (n, 0, 0)),
            pl.BlockSpec((9, Cin, Cout), lambda n: (0, 0, 0)),
            pl.BlockSpec((1, Cout), lambda n: (0, 0)),
            pl.BlockSpec((1, Cout), lambda n: (0, 0)),
        ],
        out_specs=pl.BlockSpec((1, Mout, Cout), lambda n: (n, 0, 0)),
        compiler_params=pltpu.CompilerParams(
            dimension_semantics=("parallel",)),
        cost_estimate=pl.CostEstimate(flops=flops, transcendentals=0,
                                      bytes_accessed=bytes_accessed),
    )(xf, wt, s2, b2)
    # TODO(synk): tile over output rows (and cap vmem_limit_bytes) for large
    #             resolutions so per-step VMEM stays under v7x's 64 MiB; full-image
    #             blocks are well within budget at these feature-map sizes.
    return out.reshape(N, H, Wp, Cout)[:, :, :W, :]


# ----------------------------------------------------------------------------
# MaxPool2d(k, k, ceil_mode=True)
# ----------------------------------------------------------------------------

def _maxpool_kernel(x_ref, o_ref):
    # x_ref: (k*k, 1, Ho, Wo, C) -> elementwise max over the tap axis.
    kk = x_ref.shape[0]
    r = x_ref[0, 0]
    for i in range(1, kk):
        r = jnp.maximum(r, x_ref[i, 0])
    o_ref[0] = r


def maxpool2d(x, k):
    """MaxPool2d(k, k, ceil_mode=True).
    # TODO(synk): general ceil_mode padding path not implemented; spatial dims here
    #             are exactly divisible by the pool size so ceil_mode is a no-op.
    # TODO(synk): could be fused into the following conv kernel to skip the pooled
    #             HBM intermediate; kept separate for robustness.
    """
    N, H, W, C = x.shape
    Ho, Wo = H // k, W // k
    # Strided tap extraction partitions the input (no data inflation).
    taps = [x[:, i::k, j::k, :] for i in range(k) for j in range(k)]
    xt = jnp.stack(taps, axis=0)                      # (k*k, N, Ho, Wo, C)
    return pl.pallas_call(
        _maxpool_kernel,
        out_shape=jax.ShapeDtypeStruct((N, Ho, Wo, C), x.dtype),
        grid=(N,),
        in_specs=[pl.BlockSpec((k * k, 1, Ho, Wo, C),
                               lambda n: (0, n, 0, 0, 0))],
        out_specs=pl.BlockSpec((1, Ho, Wo, C), lambda n: (n, 0, 0, 0)),
        compiler_params=pltpu.CompilerParams(
            dimension_semantics=("parallel",)),
    )(xt)


# ----------------------------------------------------------------------------
# Bilinear upsample (align_corners=True), separable: two 1-D interpolation matmuls
# ----------------------------------------------------------------------------

@functools.lru_cache(maxsize=None)
def _upsample_matrix(out_size, in_size):
    """1-D bilinear interpolation matrix (align_corners=True), matching PyTorch."""
    A = np.zeros((out_size, in_size), np.float32)
    if in_size == 1 or out_size == 1:
        A[:, 0] = 1.0
        return A
    step = (in_size - 1) / (out_size - 1)
    for o in range(out_size):
        src = o * step
        i0 = int(np.floor(src))
        i1 = min(i0 + 1, in_size - 1)
        f = src - i0
        A[o, i0] += 1.0 - f
        A[o, i1] += f
    return A


def _resize_kernel(a_ref, x_ref, o_ref):
    o_ref[0] = jnp.dot(a_ref[...], x_ref[0],
                       preferred_element_type=jnp.float32).astype(o_ref.dtype)


def _resize_axis1(x, A):
    """x: (N, Lin, M) f32, A: (Lout, Lin) f32 -> (N, Lout, M) f32 (per-image matmul)."""
    N, Lin, M = x.shape
    Lout = A.shape[0]
    return pl.pallas_call(
        _resize_kernel,
        out_shape=jax.ShapeDtypeStruct((N, Lout, M), jnp.float32),
        grid=(N,),
        in_specs=[pl.BlockSpec((Lout, Lin), lambda n: (0, 0)),
                  pl.BlockSpec((1, Lin, M), lambda n: (n, 0, 0))],
        out_specs=pl.BlockSpec((1, Lout, M), lambda n: (n, 0, 0)),
        compiler_params=pltpu.CompilerParams(
            dimension_semantics=("parallel",)),
    )(A, x)


def bilinear_upsample(x, scale):
    """nn.Upsample(scale_factor=scale, mode='bilinear', align_corners=True), separable.

    Two tiny 1-D interpolation matmuls (rows then columns) replace the previous
    dense Kronecker-product matrix; kept in f32 for interpolation accuracy.
    """
    N, Hi, Wi, C = x.shape
    Ho, Wo = Hi * scale, Wi * scale
    Ah = jnp.asarray(_upsample_matrix(Ho, Hi))        # (Ho, Hi)
    Aw = jnp.asarray(_upsample_matrix(Wo, Wi))        # (Wo, Wi)
    x = x.astype(jnp.float32)
    # Row (H) pass: (Ho,Hi) @ (Hi, Wi*C)
    y = _resize_axis1(x.reshape(N, Hi, Wi * C), Ah)   # (N, Ho, Wi*C)
    # Column (W) pass: bring W to the matmul M axis.
    y = y.reshape(N, Ho, Wi, C).transpose(0, 2, 1, 3).reshape(N, Wi, Ho * C)
    z = _resize_axis1(y, Aw)                          # (N, Wo, Ho*C)
    return z.reshape(N, Wo, Ho, C).transpose(0, 2, 1, 3)   # (N, Ho, Wo, C)


# ----------------------------------------------------------------------------
# Parameters (deterministic synthetic init) and decoder forward
# ----------------------------------------------------------------------------

def _init_conv_bn(key, cin, cout):
    """Conv2d(cin, cout, 3, bias=False) + BatchNorm2d(cout), folded for eval mode."""
    kw, kg, kb, km, kv = jax.random.split(key, 5)
    w = jax.random.normal(kw, (3, 3, cin, cout), jnp.float32) / np.sqrt(9.0 * cin)
    gamma = 1.0 + 0.1 * jax.random.normal(kg, (cout,), jnp.float32)
    beta = 0.1 * jax.random.normal(kb, (cout,), jnp.float32)
    running_mean = 0.1 * jax.random.normal(km, (cout,), jnp.float32)
    running_var = 1.0 + 0.1 * jnp.abs(jax.random.normal(kv, (cout,), jnp.float32))
    scale = gamma / jnp.sqrt(running_var + _BN_EPS)
    bias = beta - running_mean * scale
    return dict(w=w, scale=scale, bias=bias)


def init_decoder_params(key, en_channels=(64, 128, 256, 512, 1024), skip_ch=64):
    en_channels = list(en_channels)[::-1]             # deepest first: [1024, 512, ...]
    n = len(en_channels)
    keys = iter(jax.random.split(key, 256))
    params = {}
    for ii in range(1, n):
        en_chs = en_channels[ii:]
        en_scales = [2 ** k for k in range(n - ii)]
        num_dec = ii
        concat_ch = skip_ch * (len(en_chs) + num_dec)
        en_layers = [(s, _init_conv_bn(next(keys), ch, skip_ch))
                     for ch, s in zip(en_chs, en_scales)]
        dec_scales = [2 ** (k + 1) for k in reversed(range(num_dec))]
        dec_layers = []
        for jj, s in enumerate(dec_scales):
            dec_ch = en_channels[0] if jj == 0 else concat_ch
            dec_layers.append((s, _init_conv_bn(next(keys), dec_ch, skip_ch)))
        fuse = _init_conv_bn(next(keys), concat_ch, concat_ch)
        params[f'decoder{ii + 1}'] = dict(en=en_layers, dec=dec_layers, fuse=fuse)
    return params


def _full_scale_skip_connect(p, en_maps, dec_maps):
    outs = []
    for (scale, cp), x in zip(p['en'], en_maps):
        if scale != 1:
            x = maxpool2d(x, scale)
        outs.append(conv3x3_bn_relu(x, cp['w'], cp['scale'], cp['bias']))
    for (scale, cp), x in zip(p['dec'], dec_maps):
        # fast_up=True: conv block first, then bilinear upsample.
        y = conv3x3_bn_relu(x, cp['w'], cp['scale'], cp['bias'])
        if scale != 1:
            y = bilinear_upsample(y, scale)
        outs.append(y)
    # TODO(synk): the HBM concat could be avoided by accumulating the fuse conv
    #             over per-branch channel groups (or aliasing branch outputs into
    #             a shared buffer); kept explicit for robustness.
    cat = jnp.concatenate(outs, axis=-1)
    # Dropout(p=0.3) is the identity in eval mode.
    fp = p['fuse']
    return conv3x3_bn_relu(cat, fp['w'], fp['scale'], fp['bias'])


def u3p_effnet_decoder_forward(params, enc_map_list):
    """Mirrors U3PEfficientNetDecoder.forward (encoder maps given shallow -> deep)."""
    enc = enc_map_list[::-1]
    dec = [enc[0]]                                    # decoder1 = Identity
    for ii in range(1, len(enc)):
        dec.append(_full_scale_skip_connect(params[f'decoder{ii + 1}'],
                                            enc[ii:], dec))
    return dec


# ----------------------------------------------------------------------------
# Demo
# ----------------------------------------------------------------------------

if __name__ == "__main__":
    key = jax.random.PRNGKey(0)
    en_channels = [64, 128, 256, 512, 1024]
    skip_ch = 64
    N, S = 2, 32                                      # batch 2, base spatial 32x32

    pkey, xkey = jax.random.split(key)
    params = init_decoder_params(pkey, en_channels, skip_ch)

    # Encoder feature maps, shallow -> deep (spatial halves, channels grow), NHWC.
    enc_maps = []
    xkeys = jax.random.split(xkey, len(en_channels))
    for i, ch in enumerate(en_channels):
        sp = S // (2 ** i)
        enc_maps.append(jax.random.normal(xkeys[i], (N, sp, sp, ch), jnp.float32))

    dec_maps = u3p_effnet_decoder_forward(params, enc_maps)
    dec_maps = jax.block_until_ready(dec_maps)

    # Shape / sanity checks matching the PyTorch module semantics.
    concat_ch = skip_ch * len(en_channels)            # 320
    expected = [(N, S // 16, S // 16, en_channels[-1])]
    for k in range(1, len(en_channels)):
        sp = S // 2 ** (4 - k)
        expected.append((N, sp, sp, concat_ch))
    for out, shp in zip(dec_maps, expected):
        assert out.shape == shp, (out.shape, shp)
        assert bool(jnp.all(jnp.isfinite(out)))

    print("KERNEL_OK")
</pallas_src>

<mosaic_0001>
module attributes {stable_mosaic.version = 11 : i64} {
  func.func @kernel(%arg0: i32, %arg1: memref<1x42x512xbf16, #tpu.memory_space<vmem>>, %arg2: memref<9x512x64xbf16, #tpu.memory_space<vmem>>, %arg3: memref<1x64xf32, #tpu.memory_space<vmem>>, %arg4: memref<1x64xf32, #tpu.memory_space<vmem>>, %arg5: memref<1x24x64xf32, #tpu.memory_space<vmem>>) attributes {dimension_semantics = [#tpu.dimension_semantics<parallel>], iteration_bounds = array<i64: 2>, scalar_prefetch = 0 : i64, scratch_operands = 0 : i64, tpu.core_type = #tpu.core_type<tc>, window_params = [{transform_indices = @transform_0, window_bounds = array<i64: 1, 42, 512>}, {pipeline_mode = #tpu.pipeline_mode<synchronous>, transform_indices = @transform_1, window_bounds = array<i64: 9, 512, 64>}, {pipeline_mode = #tpu.pipeline_mode<synchronous>, transform_indices = @transform_2, window_bounds = array<i64: 1, 64>}, {pipeline_mode = #tpu.pipeline_mode<synchronous>, transform_indices = @transform_3, window_bounds = array<i64: 1, 64>}, {transform_indices = @transform_4, window_bounds = array<i64: 1, 24, 64>}]} {
    %cst = arith.constant 0.000000e+00 : f32
    %0 = vector.broadcast %cst : f32 to vector<24x64xf32>
    %c0 = arith.constant 0 : index
    %c0_0 = arith.constant 0 : index
    %c0_1 = arith.constant 0 : index
    %1 = vector.load %arg1[%c0, %c0_0, %c0_1] : memref<1x42x512xbf16, #tpu.memory_space<vmem>>, vector<1x24x512xbf16>
    %2 = vector.shape_cast %1 : vector<1x24x512xbf16> to vector<24x512xbf16>
    %c0_2 = arith.constant 0 : index
    %c0_3 = arith.constant 0 : index
    %c0_4 = arith.constant 0 : index
    %3 = vector.load %arg2[%c0_2, %c0_3, %c0_4] : memref<9x512x64xbf16, #tpu.memory_space<vmem>>, vector<1x512x64xbf16>
    %4 = vector.shape_cast %3 : vector<1x512x64xbf16> to vector<512x64xbf16>
    %cst_5 = arith.constant dense<0.000000e+00> : vector<24x64xf32>
    %5 = tpu.matmul %2, %4, %cst_5 {dimension_numbers = #tpu.dot_dimension_numbers<[1], [0], [0], [1], [0, 0, 1, 1], [], []>} : vector<24x512xbf16>, vector<512x64xbf16>, vector<24x64xf32> -> vector<24x64xf32>
    %6 = arith.addf %0, %5 : vector<24x64xf32>
    %c0_6 = arith.constant 0 : index
    %c1 = arith.constant 1 : index
    %c0_7 = arith.constant 0 : index
    %7 = vector.load %arg1[%c0_6, %c1, %c0_7] : memref<1x42x512xbf16, #tpu.memory_space<vmem>>, vector<1x24x512xbf16>
    %8 = vector.shape_cast %7 : vector<1x24x512xbf16> to vector<24x512xbf16>
    %c1_8 = arith.constant 1 : index
    %c0_9 = arith.constant 0 : index
    %c0_10 = arith.constant 0 : index
    %9 = vector.load %arg2[%c1_8, %c0_9, %c0_10] : memref<9x512x64xbf16, #tpu.memory_space<vmem>>, vector<1x512x64xbf16>
    %10 = vector.shape_cast %9 : vector<1x512x64xbf16> to vector<512x64xbf16>
    %cst_11 = arith.constant dense<0.000000e+00> : vector<24x64xf32>
    %11 = tpu.matmul %8, %10, %cst_11 {dimension_numbers = #tpu.dot_dimension_numbers<[1], [0], [0], [1], [0, 0, 1, 1], [], []>} : vector<24x512xbf16>, vector<512x64xbf16>, vector<24x64xf32> -> vector<24x64xf32>
    %12 = arith.addf %6, %11 : vector<24x64xf32>
    %c0_12 = arith.constant 0 : index
    %c2 = arith.constant 2 : index
    %c0_13 = arith.constant 0 : index
    %13 = vector.load %arg1[%c0_12, %c2, %c0_13] : memref<1x42x512xbf16, #tpu.memory_space<vmem>>, vector<1x24x512xbf16>
    %14 = vector.shape_cast %13 : vector<1x24x512xbf16> to vector<24x512xbf16>
    %c2_14 = arith.constant 2 : index
    %c0_15 = arith.constant 0 : index
    %c0_16 = arith.constant 0 : index
    %15 = vector.load %arg2[%c2_14, %c0_15, %c0_16] : memref<9x512x64xbf16, #tpu.memory_space<vmem>>, vector<1x512x64xbf16>
    %16 = vector.shape_cast %15 : vector<1x512x64xbf16> to vector<512x64xbf16>
    %cst_17 = arith.constant dense<0.000000e+00> : vector<24x64xf32>
    %17 = tpu.matmul %14, %16, %cst_17 {dimension_numbers = #tpu.dot_dimension_numbers<[1], [0], [0], [1], [0, 0, 1, 1], [], []>} : vector<24x512xbf16>, vector<512x64xbf16>, vector<24x64xf32> -> vector<24x64xf32>
    %18 = arith.addf %12, %17 : vector<24x64xf32>
    %c0_18 = arith.constant 0 : index
    %c6 = arith.constant 6 : index
    %c0_19 = arith.constant 0 : index
    %19 = vector.load %arg1[%c0_18, %c6, %c0_19] : memref<1x42x512xbf16, #tpu.memory_space<vmem>>, vector<1x24x512xbf16>
    %20 = vector.shape_cast %19 : vector<1x24x512xbf16> to vector<24x512xbf16>
    %c3 = arith.constant 3 : index
    %c0_20 = arith.constant 0 : index
    %c0_21 = arith.constant 0 : index
    %21 = vector.load %arg2[%c3, %c0_20, %c0_21] : memref<9x512x64xbf16, #tpu.memory_space<vmem>>, vector<1x512x64xbf16>
    %22 = vector.shape_cast %21 : vector<1x512x64xbf16> to vector<512x64xbf16>
    %cst_22 = arith.constant dense<0.000000e+00> : vector<24x64xf32>
    %23 = tpu.matmul %20, %22, %cst_22 {dimension_numbers = #tpu.dot_dimension_numbers<[1], [0], [0], [1], [0, 0, 1, 1], [], []>} : vector<24x512xbf16>, vector<512x64xbf16>, vector<24x64xf32> -> vector<24x64xf32>
    %24 = arith.addf %18, %23 : vector<24x64xf32>
    %c0_23 = arith.constant 0 : index
    %c7 = arith.constant 7 : index
    %c0_24 = arith.constant 0 : index
    %25 = vector.load %arg1[%c0_23, %c7, %c0_24] : memref<1x42x512xbf16, #tpu.memory_space<vmem>>, vector<1x24x512xbf16>
    %26 = vector.shape_cast %25 : vector<1x24x512xbf16> to vector<24x512xbf16>
    %c4 = arith.constant 4 : index
    %c0_25 = arith.constant 0 : index
    %c0_26 = arith.constant 0 : index
    %27 = vector.load %arg2[%c4, %c0_25, %c0_26] : memref<9x512x64xbf16, #tpu.memory_space<vmem>>, vector<1x512x64xbf16>
    %28 = vector.shape_cast %27 : vector<1x512x64xbf16> to vector<512x64xbf16>
    %cst_27 = arith.constant dense<0.000000e+00> : vector<24x64xf32>
    %29 = tpu.matmul %26, %28, %cst_27 {dimension_numbers = #tpu.dot_dimension_numbers<[1], [0], [0], [1], [0, 0, 1, 1], [], []>} : vector<24x512xbf16>, vector<512x64xbf16>, vector<24x64xf32> -> vector<24x64xf32>
    %30 = arith.addf %24, %29 : vector<24x64xf32>
    %c0_28 = arith.constant 0 : index
    %c8 = arith.constant 8 : index
    %c0_29 = arith.constant 0 : index
    %31 = vector.load %arg1[%c0_28, %c8, %c0_29] : memref<1x42x512xbf16, #tpu.memory_space<vmem>>, vector<1x24x512xbf16>
    %32 = vector.shape_cast %31 : vector<1x24x512xbf16> to vector<24x512xbf16>
    %c5 = arith.constant 5 : index
    %c0_30 = arith.constant 0 : index
    %c0_31 = arith.constant 0 : index
    %33 = vector.load %arg2[%c5, %c0_30, %c0_31] : memref<9x512x64xbf16, #tpu.memory_space<vmem>>, vector<1x512x64xbf16>
    %34 = vector.shape_cast %33 : vector<1x512x64xbf16> to vector<512x64xbf16>
    %cst_32 = arith.constant dense<0.000000e+00> : vector<24x64xf32>
    %35 = tpu.matmul %32, %34, %cst_32 {dimension_numbers = #tpu.dot_dimension_numbers<[1], [0], [0], [1], [0, 0, 1, 1], [], []>} : vector<24x512xbf16>, vector<512x64xbf16>, vector<24x64xf32> -> vector<24x64xf32>
    %36 = arith.addf %30, %35 : vector<24x64xf32>
    %c0_33 = arith.constant 0 : index
    %c12 = arith.constant 12 : index
    %c0_34 = arith.constant 0 : index
    %37 = vector.load %arg1[%c0_33, %c12, %c0_34] : memref<1x42x512xbf16, #tpu.memory_space<vmem>>, vector<1x24x512xbf16>
    %38 = vector.shape_cast %37 : vector<1x24x512xbf16> to vector<24x512xbf16>
    %c6_35 = arith.constant 6 : index
    %c0_36 = arith.constant 0 : index
    %c0_37 = arith.constant 0 : index
    %39 = vector.load %arg2[%c6_35, %c0_36, %c0_37] : memref<9x512x64xbf16, #tpu.memory_space<vmem>>, vector<1x512x64xbf16>
    %40 = vector.shape_cast %39 : vector<1x512x64xbf16> to vector<512x64xbf16>
    %cst_38 = arith.constant dense<0.000000e+00> : vector<24x64xf32>
    %41 = tpu.matmul %38, %40, %cst_38 {dimension_numbers = #tpu.dot_dimension_numbers<[1], [0], [0], [1], [0, 0, 1, 1], [], []>} : vector<24x512xbf16>, vector<512x64xbf16>, vector<24x64xf32> -> vector<24x64xf32>
    %42 = arith.addf %36, %41 : vector<24x64xf32>
    %c0_39 = arith.constant 0 : index
    %c13 = arith.constant 13 : index
    %c0_40 = arith.constant 0 : index
    %43 = vector.load %arg1[%c0_39, %c13, %c0_40] : memref<1x42x512xbf16, #tpu.memory_space<vmem>>, vector<1x24x512xbf16>
    %44 = vector.shape_cast %43 : vector<1x24x512xbf16> to vector<24x512xbf16>
    %c7_41 = arith.constant 7 : index
    %c0_42 = arith.constant 0 : index
    %c0_43 = arith.constant 0 : index
    %45 = vector.load %arg2[%c7_41, %c0_42, %c0_43] : memref<9x512x64xbf16, #tpu.memory_space<vmem>>, vector<1x512x64xbf16>
    %46 = vector.shape_cast %45 : vector<1x512x64xbf16> to vector<512x64xbf16>
    %cst_44 = arith.constant dense<0.000000e+00> : vector<24x64xf32>
    %47 = tpu.matmul %44, %46, %cst_44 {dimension_numbers = #tpu.dot_dimension_numbers<[1], [0], [0], [1], [0, 0, 1, 1], [], []>} : vector<24x512xbf16>, vector<512x64xbf16>, vector<24x64xf32> -> vector<24x64xf32>
    %48 = arith.addf %42, %47 : vector<24x64xf32>
    %c0_45 = arith.constant 0 : index
    %c14 = arith.constant 14 : index
    %c0_46 = arith.constant 0 : index
    %49 = vector.load %arg1[%c0_45, %c14, %c0_46] : memref<1x42x512xbf16, #tpu.memory_space<vmem>>, vector<1x24x512xbf16>
    %50 = vector.shape_cast %49 : vector<1x24x512xbf16> to vector<24x512xbf16>
    %c8_47 = arith.constant 8 : index
    %c0_48 = arith.constant 0 : index
    %c0_49 = arith.constant 0 : index
    %51 = vector.load %arg2[%c8_47, %c0_48, %c0_49] : memref<9x512x64xbf16, #tpu.memory_space<vmem>>, vector<1x512x64xbf16>
    %52 = vector.shape_cast %51 : vector<1x512x64xbf16> to vector<512x64xbf16>
    %cst_50 = arith.constant dense<0.000000e+00> : vector<24x64xf32>
    %53 = tpu.matmul %50, %52, %cst_50 {dimension_numbers = #tpu.dot_dimension_numbers<[1], [0], [0], [1], [0, 0, 1, 1], [], []>} : vector<24x512xbf16>, vector<512x64xbf16>, vector<24x64xf32> -> vector<24x64xf32>
    %54 = arith.addf %48, %53 : vector<24x64xf32>
    %c0_51 = arith.constant 0 : index
    %c0_52 = arith.constant 0 : index
    %55 = vector.load %arg3[%c0_51, %c0_52] : memref<1x64xf32, #tpu.memory_space<vmem>>, vector<1x64xf32>
    %56 = vector.broadcast %55 : vector<1x64xf32> to vector<24x64xf32>
    %57 = arith.mulf %54, %56 : vector<24x64xf32>
    %c0_53 = arith.constant 0 : index
    %c0_54 = arith.constant 0 : index
    %58 = vector.load %arg4[%c0_53, %c0_54] : memref<1x64xf32, #tpu.memory_space<vmem>>, vector<1x64xf32>
    %59 = vector.broadcast %58 : vector<1x64xf32> to vector<24x64xf32>
    %60 = arith.addf %57, %59 : vector<24x64xf32>
    %cst_55 = arith.constant 0.000000e+00 : f32
    %61 = vector.broadcast %cst_55 : f32 to vector<24x64xf32>
    %62 = arith.maximumf %60, %61 : vector<24x64xf32>
    %c0_56 = arith.constant 0 : index
    %c0_57 = arith.constant 0 : index
    %c0_58 = arith.constant 0 : index
    %63 = vector.load %arg5[%c0_56, %c0_57, %c0_58] : memref<1x24x64xf32, #tpu.memory_space<vmem>>, vector<1x24x64xf32>
    %64 = vector.shape_cast %63 : vector<1x24x64xf32> to vector<24x64xf32>
    %65 = vector.shape_cast %62 : vector<24x64xf32> to vector<1x24x64xf32>
    tpu.vector_store %arg5[%c0_56, %c0_57, %c0_58], %65 {strides = array<i32>} : memref<1x24x64xf32, #tpu.memory_space<vmem>>, vector<1x24x64xf32>,
    return
  }
  func.func @transform_0(%arg0: i32) -> (i32, i32, i32) {
    %c0_i32 = arith.constant 0 : i32
    %c0_i32_0 = arith.constant 0 : i32
    %c0_i32_1 = arith.constant 0 : i32
    return %arg0, %c0_i32, %c0_i32_0 : i32, i32, i32
  }
  func.func @transform_1(%arg0: i32) -> (i32, i32, i32) {
    %c0_i32 = arith.constant 0 : i32
    %c0_i32_0 = arith.constant 0 : i32
    %c0_i32_1 = arith.constant 0 : i32
    %c0_i32_2 = arith.constant 0 : i32
    return %c0_i32, %c0_i32_0, %c0_i32_1 : i32, i32, i32
  }
  func.func @transform_2(%arg0: i32) -> (i32, i32) {
    %c0_i32 = arith.constant 0 : i32
    %c0_i32_0 = arith.constant 0 : i32
    %c0_i32_1 = arith.constant 0 : i32
    return %c0_i32, %c0_i32_0 : i32, i32
  }
  func.func @transform_3(%arg0: i32) -> (i32, i32) {
    %c0_i32 = arith.constant 0 : i32
    %c0_i32_0 = arith.constant 0 : i32
    %c0_i32_1 = arith.constant 0 : i32
    return %c0_i32, %c0_i32_0 : i32, i32
  }
  func.func @transform_4(%arg0: i32) -> (i32, i32, i32) {
    %c0_i32 = arith.constant 0 : i32
    %c0_i32_0 = arith.constant 0 : i32
    %c0_i32_1 = arith.constant 0 : i32
    return %arg0, %c0_i32, %c0_i32_0 : i32, i32, i32
  }
}

</mosaic_0001>

<llo_original>
// kernel: tpu_custom_call.1
$region0: #{tpu_custom_call.1}
  #allocation0 [shape = 'u32[]', space=smem, size = 0x4, offset = 0x4, fixed_abs, tag = 'smem constant byte address 0x4 - core index']
  #allocation1 [shape = 'u32[144,128]{1,0:T(1,128)}', space=vmem, size = 0x12000, scoped, tag = 'internal scratch']
  %s0 = inlined_call_operand.vmem [shape: bf16[2,42,512], index: 0, kind: input, shape index: {}]
  %s1 = inlined_call_operand.vmem [shape: bf16[9,512,64], index: 1, kind: input, shape index: {}]
  %s2 = inlined_call_operand.vmem [shape: f32[1,64], index: 2, kind: input, shape index: {}]
  %s3 = inlined_call_operand.vmem [shape: f32[1,64], index: 3, kind: input, shape index: {}]
  %s4 = inlined_call_operand.hbm [shape: f32[2,24,64], index: 4, kind: output, shape index: {}]
  %s5 = sld [smem:[#allocation0]]
  $region49: #{tpu_custom_call.1} parent=0
    _
  %s7 = ssub.s32 1, %s5
  %s8 = scalar_select 0, %s7, %s5
  $region1: #{tpu_custom_call.1} parent=0
    #allocation2 [shape = 'u8[24576]{0}', space=vmem, size = 0x6000, scoped, tag = 'output window, operand 0']
    #allocation3 [shape = 's32[2]{0}', space=sflag, size = 0x8, scoped, tag = 'scoped memory for tpu_custom_call.1']
    %9 = vsyncpa [#allocation3], 0
    %s10 = scalar_lea.sflag [#allocation3], 1
    %11 = vsyncpa %s10, 0
    loop: start=0, step=1, limit=4
    $region2: #{tpu_custom_call.1} parent=1 // loop_pre_header
      _
    $region3: #{tpu_custom_call.1} parent=1 // loop_header
      %s13 = sphi 0, %s17
      %p14 = scmp.ge.s32.totalorder %s13, 4
      %s23 = sphi 0, %s25
      %s26 = sphi 0, %s23
      %s27 = sphi 0, %s26
      %s43 = sphi 0, %s27
      %s47 = sphi 0, %s47
      %s49 = sphi 0, %s47
      %s50 = sphi 0, %s49
      %s64 = sphi 0, %s50
      %s68 = sphi 0, %s68
      %s70 = sphi 0, %s68
      %s71 = sphi 0, %s70
      %s85 = sphi 0, %s71
      %s89 = sphi 0, %s89
      %s91 = sphi 0, %s89
      %s92 = sphi 0, %s91
      %s106 = sphi 0, %s92
      %s112 = sphi 0, %s114
      %s115 = sphi 0, %s112
      %s116 = sphi 0, %s115
      %s132 = sphi 0, %s116
    $region4: #{tpu_custom_call.1} parent=1 // loop_header_branch
      %16 = sbr.rel (%p14) target = $region8
    $region5: #{tpu_custom_call.1} parent=1 // loop_body
      %s18 = ssub.s32 %s13, 1
      %s19 = ssub.s32 %s13, 2
      %s20 = sadd.s32 %s13, 1
      %s21 = ssub.s32 %s13, %s20
      %p22 = scmp.eq.s32.totalorder %s21, 0
      %s24 = sadd.s32 %s23, 1
      %s25 = scalar_select %p22, %s23, %s24
      %p28 = pneg %p22
      %p29 = scmp.eq.s32.totalorder %s13, 1
      %p30 = por %p28, %p29
      %p31 = scmp.ne.s32.totalorder %s23, %s26
      %p32 = scmp.eq.s32.totalorder %s13, 0
      %p33 = por %p31, %p32
      %p34 = scmp.ne.s32.totalorder %s23, %s26
      %p35 = scmp.eq.s32.totalorder %s18, 1
      %p36 = por %p34, %p35
      %p37 = scmp.ne.s32.totalorder %s26, %s27
      %p38 = scmp.eq.s32.totalorder %s18, 0
      %p39 = por %p37, %p38
      %p40 = scmp.ne.s32.totalorder %s26, %s27
      %p41 = scmp.eq.s32.totalorder %s19, 1
      %p42 = por %p40, %p41
      %p44 = scmp.ne.s32.totalorder %s27, %s43
      %p45 = scmp.eq.s32.totalorder %s19, 0
      %p46 = por %p44, %p45
      %s48 = sadd.s32 %s47, 1
      %p51 = scmp.eq.s32.totalorder %s13, 1
      %p52 = scmp.ne.s32.totalorder %s47, %s49
      %p53 = scmp.eq.s32.totalorder %s13, 0
      %p54 = por %p52, %p53
      %p55 = scmp.ne.s32.totalorder %s47, %s49
      %p56 = scmp.eq.s32.totalorder %s18, 1
      %p57 = por %p55, %p56
      %p58 = scmp.ne.s32.totalorder %s49, %s50
      %p59 = scmp.eq.s32.totalorder %s18, 0
      %p60 = por %p58, %p59
      %p61 = scmp.ne.s32.totalorder %s49, %s50
      %p62 = scmp.eq.s32.totalorder %s19, 1
      %p63 = por %p61, %p62
      %p65 = scmp.ne.s32.totalorder %s50, %s64
      %p66 = scmp.eq.s32.totalorder %s19, 0
      %p67 = por %p65, %p66
      %s69 = sadd.s32 %s68, 1
      %p72 = scmp.eq.s32.totalorder %s13, 1
      %p73 = scmp.ne.s32.totalorder %s68, %s70
      %p74 = scmp.eq.s32.totalorder %s13, 0
      %p75 = por %p73, %p74
      %p76 = scmp.ne.s32.totalorder %s68, %s70
      %p77 = scmp.eq.s32.totalorder %s18, 1
      %p78 = por %p76, %p77
      %p79 = scmp.ne.s32.totalorder %s70, %s71
      %p80 = scmp.eq.s32.totalorder %s18, 0
      %p81 = por %p79, %p80
      %p82 = scmp.ne.s32.totalorder %s70, %s71
      %p83 = scmp.eq.s32.totalorder %s19, 1
      %p84 = por %p82, %p83
      %p86 = scmp.ne.s32.totalorder %s71, %s85
      %p87 = scmp.eq.s32.totalorder %s19, 0
      %p88 = por %p86, %p87
      %s90 = sadd.s32 %s89, 1
      %p93 = scmp.eq.s32.totalorder %s13, 1
      %p94 = scmp.ne.s32.totalorder %s89, %s91
      %p95 = scmp.eq.s32.totalorder %s13, 0
      %p96 = por %p94, %p95
      %p97 = scmp.ne.s32.totalorder %s89, %s91
      %p98 = scmp.eq.s32.totalorder %s18, 1
      %p99 = por %p97, %p98
      %p100 = scmp.ne.s32.totalorder %s91, %s92
      %p101 = scmp.eq.s32.totalorder %s18, 0
      %p102 = por %p100, %p101
      %p103 = scmp.ne.s32.totalorder %s91, %s92
      %p104 = scmp.eq.s32.totalorder %s19, 1
      %p105 = por %p103, %p104
      %p107 = scmp.ne.s32.totalorder %s92, %s106
      %p108 = scmp.eq.s32.totalorder %s19, 0
      %p109 = por %p107, %p108
      %s110 = ssub.s32 %s13, %s20
      %p111 = scmp.eq.s32.totalorder %s110, 0
      %s113 = sadd.s32 %s112, 1
      %s114 = scalar_select %p111, %s112, %s113
      %p117 = pneg %p111
      %p118 = scmp.eq.s32.totalorder %s13, 1
      %p119 = por %p117, %p118
      %p120 = scmp.ne.s32.totalorder %s112, %s115
      %p121 = scmp.eq.s32.totalorder %s13, 0
      %p122 = por %p120, %p121
      %p123 = scmp.ne.s32.totalorder %s112, %s115
      %p124 = scmp.eq.s32.totalorder %s18, 1
      %p125 = por %p123, %p124
      %p126 = scmp.ne.s32.totalorder %s115, %s116
      %p127 = scmp.eq.s32.totalorder %s18, 0
      %p128 = por %p126, %p127
      %p129 = scmp.ne.s32.totalorder %s115, %s116
      %p130 = scmp.eq.s32.totalorder %s19, 1
      %p131 = por %p129, %p130
      %p133 = scmp.ne.s32.totalorder %s116, %s132
      %p134 = scmp.eq.s32.totalorder %s19, 0
      %p135 = por %p133, %p134
      %p136 = scmp.le.s32.totalorder 1, %s13
      %p137 = scmp.lt.s32.totalorder %s13, 3
      %p138 = pnand %p136, %p137
      %p139 = pneg %p138
      // Predicated region
      $region9: #{tpu_custom_call.1} parent=5 // pred_check
        _
      $region10: #{tpu_custom_call.1} parent=5 // pred_check_branch
        %141 = sbr.rel (%p138) target = $region12
      $region11: #{tpu_custom_call.1} parent=5 // pred_region
        %s142 = ssub.s32 %s13, 1
        // Predicated region
        $region13: #{tpu_custom_call.1} parent=11 // pred_check
          %p143 = pneg %p60
        $region14: #{tpu_custom_call.1} parent=11 // pred_check_branch
          %145 = sbr.rel (%p143) target = $region16
        $region15: #{tpu_custom_call.1} parent=11 // pred_region
          _
        $region16: #{tpu_custom_call.1} parent=11 // pred_fallthru
          _
        // Predicated region
        $region17: #{tpu_custom_call.1} parent=11 // pred_check
          %p146 = pneg %p81
        $region18: #{tpu_custom_call.1} parent=11 // pred_check_branch
          %148 = sbr.rel (%p146) target = $region20
        $region19: #{tpu_custom_call.1} parent=11 // pred_region
          _
        $region20: #{tpu_custom_call.1} parent=11 // pred_fallthru
          _
        // Predicated region
        $region21: #{tpu_custom_call.1} parent=11 // pred_check
          %p149 = pneg %p102
        $region22: #{tpu_custom_call.1} parent=11 // pred_check_branch
          %151 = sbr.rel (%p149) target = $region24
        $region23: #{tpu_custom_call.1} parent=11 // pred_region
          _
        $region24: #{tpu_custom_call.1} parent=11 // pred_fallthru
          _
      $region12: #{tpu_custom_call.1} parent=5 // pred_fallthru
        _
      %p152 = scmp.lt.s32.totalorder %s13, 2
      // Predicated region
      $region25: #{tpu_custom_call.1} parent=5 // pred_check
        %p153 = pneg %p152
      $region26: #{tpu_custom_call.1} parent=5 // pred_check_branch
        %155 = sbr.rel (%p153) target = $region28
      $region27: #{tpu_custom_call.1} parent=5 // pred_region
        // Predicated region
        $region29: #{tpu_custom_call.1} parent=27 // pred_check
          %p156 = pneg %p33
        $region30: #{tpu_custom_call.1} parent=27 // pred_check_branch
          %158 = sbr.rel (%p156) target = $region32
        $region31: #{tpu_custom_call.1} parent=27 // pred_region
          %p159 = scmp.lt.s32.totalorder %s13, 1
          %s160 = scalar_select %p159, %s13, 1
          %s161 = smul.addr %s160, 24
          %s162 = smul.addr %s161, 4
          %s163 = scalar_lea.vmem %s0, %s162
        $region32: #{tpu_custom_call.1} parent=27 // pred_fallthru
          _
      $region28: #{tpu_custom_call.1} parent=5 // pred_fallthru
        _
      %p164 = scmp.le.s32.totalorder 1, %s13
      %p165 = scmp.lt.s32.totalorder %s13, 3
      %p166 = pnand %p164, %p165
      %p167 = pneg %p166
      // Predicated region
      $region33: #{tpu_custom_call.1} parent=5 // pred_check
        _
      $region34: #{tpu_custom_call.1} parent=5 // pred_check_branch
        %169 = sbr.rel (%p166) target = $region36
      $region35: #{tpu_custom_call.1} parent=5 // pred_region
        %s170 = ssub.s32 %s13, 1
        %p171 = scmp.lt.s32.totalorder %s18, 1
        %s172 = scalar_select %p171, %s18, 1
        %s173 = smul.addr %s172, 24
        %s174 = smul.addr %s173, 4
        %s175 = scalar_lea.vmem %s0, %s174
        %p176 = pneg %p39
        %p177 = pneg %p36
        %p178 = pneg %p60
        %p179 = pneg %p57
        %p180 = pneg %p81
        %p181 = pneg %p78
        %p182 = pneg %p102
        %p183 = pneg %p99
        %p184 = pneg %p128
        %p185 = pneg %p125
        %s186 = sand.u32 %s115, 1
        %s187 = scalar_lea.sflag [#allocation3], %s186
        %s188 = sand.u32 %s115, 1
        %s189 = smul.addr %s188, 24
        %s190 = scalar_lea.vmem [#allocation2], %s189
        %p191 = scmp.lt.s32.totalorder %s18, 1
        %s192 = scalar_select %p191, %s18, 1
        %s193 = smul.addr %s192, 24
        %s194 = smul.addr %s193, 4
        %s195 = scalar_lea.vmem %s0, %s194
        %v197 = vld [vmem:[%s195] sm:$0xff]
        %v198 = vld [vmem:[%s195 + $0x8] sm:$0xff]
        %v199 = vld [vmem:[%s195 + $0x10] sm:$0xff]
        %v200 = vld [vmem:[%s195 + $0x18] sm:$0xff]
        %v201 = vld [vmem:[%s195 + $0x20] sm:$0xff]
        %v202 = vld [vmem:[%s195 + $0x28] sm:$0xff]
        %v203 = vld [vmem:[%s1] sm:$0xf]
        %v204 = vld [vmem:[%s1 + $0x4] sm:$0xf]
        %v205 = vld [vmem:[%s1 + $0x8] sm:$0xf]
        %v206 = vld [vmem:[%s1 + $0xc] sm:$0xf]
        %v207 = vld [vmem:[%s1 + $0x10] sm:$0xf]
        %v208 = vld [vmem:[%s1 + $0x14] sm:$0xf]
        %v209 = vld [vmem:[%s1 + $0x18] sm:$0xf]
        %v210 = vld [vmem:[%s1 + $0x1c] sm:$0xf]
        %v211 = vld [vmem:[%s1 + $0x20] sm:$0xf]
        %v212 = vld [vmem:[%s1 + $0x24] sm:$0xf]
        %v213 = vld [vmem:[%s1 + $0x28] sm:$0xf]
        %v214 = vld [vmem:[%s1 + $0x2c] sm:$0xf]
        %v215 = vld [vmem:[%s1 + $0x30] sm:$0xf]
        %v216 = vld [vmem:[%s1 + $0x34] sm:$0xf]
        %v217 = vld [vmem:[%s1 + $0x38] sm:$0xf]
        %v218 = vld [vmem:[%s1 + $0x3c] sm:$0xf]
        %v219 = vld [vmem:[%s1 + $0x40] sm:$0xf]
        %v220 = vld [vmem:[%s1 + $0x44] sm:$0xf]
        %v221 = vld [vmem:[%s1 + $0x48] sm:$0xf]
        %v222 = vld [vmem:[%s1 + $0x4c] sm:$0xf]
        %v223 = vld [vmem:[%s1 + $0x50] sm:$0xf]
        %v224 = vld [vmem:[%s1 + $0x54] sm:$0xf]
        %v225 = vld [vmem:[%s1 + $0x58] sm:$0xf]
        %v226 = vld [vmem:[%s1 + $0x5c] sm:$0xf]
        %v227 = vld [vmem:[%s1 + $0x60] sm:$0xf]
        %v228 = vld [vmem:[%s1 + $0x64] sm:$0xf]
        %v229 = vld [vmem:[%s1 + $0x68] sm:$0xf]
        %v230 = vld [vmem:[%s1 + $0x6c] sm:$0xf]
        %v231 = vld [vmem:[%s1 + $0x70] sm:$0xf]
        %v232 = vld [vmem:[%s1 + $0x74] sm:$0xf]
        %v233 = vld [vmem:[%s1 + $0x78] sm:$0xf]
        %v234 = vld [vmem:[%s1 + $0x7c] sm:$0xf]
        %v235 = vld [vmem:[%s1 + $0x80] sm:$0xf]
        %v236 = vld [vmem:[%s1 + $0x84] sm:$0xf]
        %v237 = vld [vmem:[%s1 + $0x88] sm:$0xf]
        %v238 = vld [vmem:[%s1 + $0x8c] sm:$0xf]
        %v239 = vld [vmem:[%s1 + $0x90] sm:$0xf]
        %v240 = vld [vmem:[%s1 + $0x94] sm:$0xf]
        %v241 = vld [vmem:[%s1 + $0x98] sm:$0xf]
        %v242 = vld [vmem:[%s1 + $0x9c] sm:$0xf]
        %v243 = vld [vmem:[%s1 + $0xa0] sm:$0xf]
        %v244 = vld [vmem:[%s1 + $0xa4] sm:$0xf]
        %v245 = vld [vmem:[%s1 + $0xa8] sm:$0xf]
        %v246 = vld [vmem:[%s1 + $0xac] sm:$0xf]
        %v247 = vld [vmem:[%s1 + $0xb0] sm:$0xf]
        %v248 = vld [vmem:[%s1 + $0xb4] sm:$0xf]
        %v249 = vld [vmem:[%s1 + $0xb8] sm:$0xf]
        %v250 = vld [vmem:[%s1 + $0xbc] sm:$0xf]
        %v251 = vld [vmem:[%s1 + $0xc0] sm:$0xf]
        %v252 = vld [vmem:[%s1 + $0xc4] sm:$0xf]
        %v253 = vld [vmem:[%s1 + $0xc8] sm:$0xf]
        %v254 = vld [vmem:[%s1 + $0xcc] sm:$0xf]
        %v255 = vld [vmem:[%s1 + $0xd0] sm:$0xf]
        %v256 = vld [vmem:[%s1 + $0xd4] sm:$0xf]
        %v257 = vld [vmem:[%s1 + $0xd8] sm:$0xf]
        %v258 = vld [vmem:[%s1 + $0xdc] sm:$0xf]
        %v259 = vld [vmem:[%s1 + $0xe0] sm:$0xf]
        %v260 = vld [vmem:[%s1 + $0xe4] sm:$0xf]
        %v261 = vld [vmem:[%s1 + $0xe8] sm:$0xf]
        %v262 = vld [vmem:[%s1 + $0xec] sm:$0xf]
        %v263 = vld [vmem:[%s1 + $0xf0] sm:$0xf]
        %v264 = vld [vmem:[%s1 + $0xf4] sm:$0xf]
        %v265 = vld [vmem:[%s1 + $0xf8] sm:$0xf]
        %v266 = vld [vmem:[%s1 + $0xfc] sm:$0xf]
        %v267 = vld [vmem:[%s195 + $0x30] sm:$0x11]
        %v268 = vld [vmem:[%s195 + $0x38] sm:$0x11]
        %s269 = scalar_lea.vmem %s1, 256
        %v270 = vld [vmem:[%s269] sm:$0xf]
        %v271 = vld [vmem:[%s269 + $0x4] sm:$0xf]
        %v272 = vld [vmem:[%s269 + $0x8] sm:$0xf]
        %v273 = vld [vmem:[%s269 + $0xc] sm:$0xf]
        %v274 = vld [vmem:[%s269 + $0x10] sm:$0xf]
        %v275 = vld [vmem:[%s269 + $0x14] sm:$0xf]
        %v276 = vld [vmem:[%s269 + $0x18] sm:$0xf]
        %v277 = vld [vmem:[%s269 + $0x1c] sm:$0xf]
        %v278 = vld [vmem:[%s269 + $0x20] sm:$0xf]
        %v279 = vld [vmem:[%s269 + $0x24] sm:$0xf]
        %v280 = vld [vmem:[%s269 + $0x28] sm:$0xf]
        %v281 = vld [vmem:[%s269 + $0x2c] sm:$0xf]
        %v282 = vld [vmem:[%s269 + $0x30] sm:$0xf]
        %v283 = vld [vmem:[%s269 + $0x34] sm:$0xf]
        %v284 = vld [vmem:[%s269 + $0x38] sm:$0xf]
        %v285 = vld [vmem:[%s269 + $0x3c] sm:$0xf]
        %v286 = vld [vmem:[%s269 + $0x40] sm:$0xf]
        %v287 = vld [vmem:[%s269 + $0x44] sm:$0xf]
        %v288 = vld [vmem:[%s269 + $0x48] sm:$0xf]
        %v289 = vld [vmem:[%s269 + $0x4c] sm:$0xf]
        %v290 = vld [vmem:[%s269 + $0x50] sm:$0xf]
        %v291 = vld [vmem:[%s269 + $0x54] sm:$0xf]
        %v292 = vld [vmem:[%s269 + $0x58] sm:$0xf]
        %v293 = vld [vmem:[%s269 + $0x5c] sm:$0xf]
        %v294 = vld [vmem:[%s269 + $0x60] sm:$0xf]
        %v295 = vld [vmem:[%s269 + $0x64] sm:$0xf]
        %v296 = vld [vmem:[%s269 + $0x68] sm:$0xf]
        %v297 = vld [vmem:[%s269 + $0x6c] sm:$0xf]
        %v298 = vld [vmem:[%s269 + $0x70] sm:$0xf]
        %v299 = vld [vmem:[%s269 + $0x74] sm:$0xf]
        %v300 = vld [vmem:[%s269 + $0x78] sm:$0xf]
        %v301 = vld [vmem:[%s269 + $0x7c] sm:$0xf]
        %v302 = vld [vmem:[%s269 + $0x80] sm:$0xf]
        %v303 = vld [vmem:[%s269 + $0x84] sm:$0xf]
        %v304 = vld [vmem:[%s269 + $0x88] sm:$0xf]
        %v305 = vld [vmem:[%s269 + $0x8c] sm:$0xf]
        %v306 = vld [vmem:[%s269 + $0x90] sm:$0xf]
        %v307 = vld [vmem:[%s269 + $0x94] sm:$0xf]
        %v308 = vld [vmem:[%s269 + $0x98] sm:$0xf]
        %v309 = vld [vmem:[%s269 + $0x9c] sm:$0xf]
        %v310 = vld [vmem:[%s269 + $0xa0] sm:$0xf]
        %v311 = vld [vmem:[%s269 + $0xa4] sm:$0xf]
        %v312 = vld [vmem:[%s269 + $0xa8] sm:$0xf]
        %v313 = vld [vmem:[%s269 + $0xac] sm:$0xf]
        %v314 = vld [vmem:[%s269 + $0xb0] sm:$0xf]
        %v315 = vld [vmem:[%s269 + $0xb4] sm:$0xf]
        %v316 = vld [vmem:[%s269 + $0xb8] sm:$0xf]
        %v317 = vld [vmem:[%s269 + $0xbc] sm:$0xf]
        %v318 = vld [vmem:[%s269 + $0xc0] sm:$0xf]
        %v319 = vld [vmem:[%s269 + $0xc4] sm:$0xf]
        %v320 = vld [vmem:[%s269 + $0xc8] sm:$0xf]
        %v321 = vld [vmem:[%s269 + $0xcc] sm:$0xf]
        %v322 = vld [vmem:[%s269 + $0xd0] sm:$0xf]
        %v323 = vld [vmem:[%s269 + $0xd4] sm:$0xf]
        %v324 = vld [vmem:[%s269 + $0xd8] sm:$0xf]
        %v325 = vld [vmem:[%s269 + $0xdc] sm:$0xf]
        %v326 = vld [vmem:[%s269 + $0xe0] sm:$0xf]
        %v327 = vld [vmem:[%s269 + $0xe4] sm:$0xf]
        %v328 = vld [vmem:[%s269 + $0xe8] sm:$0xf]
        %v329 = vld [vmem:[%s269 + $0xec] sm:$0xf]
        %v330 = vld [vmem:[%s269 + $0xf0] sm:$0xf]
        %v331 = vld [vmem:[%s269 + $0xf4] sm:$0xf]
        %v332 = vld [vmem:[%s269 + $0xf8] sm:$0xf]
        %v333 = vld [vmem:[%s269 + $0xfc] sm:$0xf]
        %v342 = vunpack.c.l.b16 %v197
        %v343 = vunpack.c.h.b16 %v197
        %v344 = vunpack.c.l.b16 %v198
        %v345 = vunpack.c.h.b16 %v198
        %v346 = vunpack.c.l.b16 %v199
        %v347 = vunpack.c.h.b16 %v199
        %v348 = vunpack.c.l.b16 %v200
        %v349 = vunpack.c.h.b16 %v200
        %v350 = vunpack.c.l.b16 %v201
        %v351 = vunpack.c.h.b16 %v201
        %v352 = vunpack.c.l.b16 %v202
        %v353 = vunpack.c.h.b16 %v202
        %v354 = vunpack.c.l.b16 %v267
        %v355 = vunpack.c.h.b16 %v267
        %v356 = vunpack.c.l.b16 %v268
        %v357 = vunpack.c.h.b16 %v268
        %v358 = vpack.c.b16 %v346, %v342
        %v359 = vpack.c.b16 %v347, %v343
        %v360 = vpack.c.b16 %v348, %v344
        %v361 = vpack.c.b16 %v349, %v345
        %v362 = vpack.c.b16 %v354, %v350
        %v363 = vpack.c.b16 %v355, %v351
        %v364 = vpack.c.b16 %v356, %v352
        %v365 = vpack.c.b16 %v357, %v353
        %vm366 = vsmask.f32 7424
        %v368 = vshrl.u32 %v358, 16
        %v370 = vshll.u32 %v358, 16
        %v372 = vrot.slane %v370, 1
        %v373 = vor.u32 %v368, %v372
        %v375 = vshll.u32 %v362, 16
        %v377 = vrot.slane %v375, 1
        %v378 = vsel %vm366, %v373, %v377
        %v380 = vshrl.u32 %v359, 16
        %v382 = vshll.u32 %v359, 16
        %v384 = vrot.slane %v382, 1
        %v385 = vor.u32 %v380, %v384
        %v387 = vshll.u32 %v363, 16
        %v389 = vrot.slane %v387, 1
        %v390 = vsel %vm366, %v385, %v389
        %v392 = vshrl.u32 %v360, 16
        %v394 = vshll.u32 %v360, 16
        %v396 = vrot.slane %v394, 1
        %v397 = vor.u32 %v392, %v396
        %v399 = vshll.u32 %v364, 16
        %v401 = vrot.slane %v399, 1
        %v402 = vsel %vm366, %v397, %v401
        %v404 = vshrl.u32 %v361, 16
        %v406 = vshll.u32 %v361, 16
        %v408 = vrot.slane %v406, 1
        %v409 = vor.u32 %v404, %v408
        %v411 = vshll.u32 %v365, 16
        %v413 = vrot.slane %v411, 1
        %v414 = vsel %vm366, %v409, %v413
        %v415 = vshrl.u32 %v362, 16
        %v417 = vor.u32 %v415, %v377
        %v418 = vshrl.u32 %v363, 16
        %v420 = vor.u32 %v418, %v389
        %v421 = vshrl.u32 %v364, 16
        %v423 = vor.u32 %v421, %v401
        %v424 = vshrl.u32 %v365, 16
        %v426 = vor.u32 %v424, %v413
        %v499 = vunpack.c.l.b16 %v270
        %v500 = vunpack.c.l.b16 %v271
        %v501 = vunpack.c.l.b16 %v272
        %v502 = vunpack.c.l.b16 %v273
        %v503 = vunpack.c.l.b16 %v274
        %v504 = vunpack.c.l.b16 %v275
        %v505 = vunpack.c.l.b16 %v276
        %v506 = vunpack.c.l.b16 %v277
        %v507 = vunpack.c.l.b16 %v278
        %v508 = vunpack.c.l.b16 %v279
        %v509 = vunpack.c.l.b16 %v280
        %v510 = vunpack.c.l.b16 %v281
        %v511 = vunpack.c.l.b16 %v282
        %v512 = vunpack.c.l.b16 %v283
        %v513 = vunpack.c.l.b16 %v284
        %v514 = vunpack.c.l.b16 %v285
        %v515 = vunpack.c.l.b16 %v286
        %v516 = vunpack.c.l.b16 %v287
        %v517 = vunpack.c.l.b16 %v288
        %v518 = vunpack.c.l.b16 %v289
        %v519 = vunpack.c.l.b16 %v290
        %v520 = vunpack.c.l.b16 %v291
        %v521 = vunpack.c.l.b16 %v292
        %v522 = vunpack.c.l.b16 %v293
        %v523 = vunpack.c.l.b16 %v294
        %v524 = vunpack.c.l.b16 %v295
        %v525 = vunpack.c.l.b16 %v296
        %v526 = vunpack.c.l.b16 %v297
        %v527 = vunpack.c.l.b16 %v298
        %v528 = vunpack.c.l.b16 %v299
        %v529 = vunpack.c.l.b16 %v300
        %v530 = vunpack.c.l.b16 %v301
        %v531 = vunpack.c.l.b16 %v302
        %v532 = vunpack.c.l.b16 %v303
        %v533 = vunpack.c.l.b16 %v304
        %v534 = vunpack.c.l.b16 %v305
        %v535 = vunpack.c.l.b16 %v306
        %v536 = vunpack.c.l.b16 %v307
        %v537 = vunpack.c.l.b16 %v308
        %v538 = vunpack.c.l.b16 %v309
        %v539 = vunpack.c.l.b16 %v310
        %v540 = vunpack.c.l.b16 %v311
        %v541 = vunpack.c.l.b16 %v312
        %v542 = vunpack.c.l.b16 %v313
        %v543 = vunpack.c.l.b16 %v314
        %v544 = vunpack.c.l.b16 %v315
        %v545 = vunpack.c.l.b16 %v316
        %v546 = vunpack.c.l.b16 %v317
        %v547 = vunpack.c.l.b16 %v318
        %v548 = vunpack.c.l.b16 %v319
        %v549 = vunpack.c.l.b16 %v320
        %v550 = vunpack.c.l.b16 %v321
        %v551 = vunpack.c.l.b16 %v322
        %v552 = vunpack.c.l.b16 %v323
        %v553 = vunpack.c.l.b16 %v324
        %v554 = vunpack.c.l.b16 %v325
        %v555 = vunpack.c.l.b16 %v326
        %v556 = vunpack.c.l.b16 %v327
        %v557 = vunpack.c.l.b16 %v328
        %v558 = vunpack.c.l.b16 %v329
        %v559 = vunpack.c.l.b16 %v330
        %v560 = vunpack.c.l.b16 %v331
        %v561 = vunpack.c.l.b16 %v332
        %v562 = vunpack.c.l.b16 %v333
        %v563 = vpack.c.b16 %v500, %v499
        %v564 = vpack.c.b16 %v502, %v501
        %v565 = vpack.c.b16 %v504, %v503
        %v566 = vpack.c.b16 %v506, %v505
        %v567 = vpack.c.b16 %v508, %v507
        %v568 = vpack.c.b16 %v510, %v509
        %v569 = vpack.c.b16 %v512, %v511
        %v570 = vpack.c.b16 %v514, %v513
        %v571 = vpack.c.b16 %v516, %v515
        %v572 = vpack.c.b16 %v518, %v517
        %v573 = vpack.c.b16 %v520, %v519
        %v574 = vpack.c.b16 %v522, %v521
        %v575 = vpack.c.b16 %v524, %v523
        %v576 = vpack.c.b16 %v526, %v525
        %v577 = vpack.c.b16 %v528, %v527
        %v578 = vpack.c.b16 %v530, %v529
        %v579 = vpack.c.b16 %v532, %v531
        %v580 = vpack.c.b16 %v534, %v533
        %v581 = vpack.c.b16 %v536, %v535
        %v582 = vpack.c.b16 %v538, %v537
        %v583 = vpack.c.b16 %v540, %v539
        %v584 = vpack.c.b16 %v542, %v541
        %v585 = vpack.c.b16 %v544, %v543
        %v586 = vpack.c.b16 %v546, %v545
        %v587 = vpack.c.b16 %v548, %v547
        %v588 = vpack.c.b16 %v550, %v549
        %v589 = vpack.c.b16 %v552, %v551
        %v590 = vpack.c.b16 %v554, %v553
        %v591 = vpack.c.b16 %v556, %v555
        %v592 = vpack.c.b16 %v558, %v557
        %v593 = vpack.c.b16 %v560, %v559
        %v594 = vpack.c.b16 %v562, %v561
        %627 = vmatprep.subr.bf16.mxu0 0
        %628 = vmatpush1.bf16.msra.mxu0 %v563
        %629 = vmatprep.subr.bf16.mxu0 0
        %630 = vmatpush1.bf16.msra.mxu0 %v564
        %631 = vmatprep.subr.bf16.mxu0 0
        %632 = vmatpush1.bf16.msra.mxu0 %v565
        %633 = vmatprep.subr.bf16.mxu0 0
        %634 = vmatpush1.bf16.msra.mxu0 %v566
        %635 = vmatprep.subr.bf16.mxu0 0
        %636 = vmatpush1.bf16.msra.mxu0 %v567
        %637 = vmatprep.subr.bf16.mxu0 0
        %638 = vmatpush1.bf16.msra.mxu0 %v568
        %639 = vmatprep.subr.bf16.mxu0 0
        %640 = vmatpush1.bf16.msra.mxu0 %v569
        %641 = vmatprep.subr.bf16.mxu0 0
        %642 = vmatpush1.bf16.msra.mxu0 %v570
        %643 = vmatprep.subr.bf16.mxu0 0
        %644 = vmatpush1.bf16.msra.mxu0 %v571
        %645 = vmatprep.subr.bf16.mxu0 0
        %646 = vmatpush1.bf16.msra.mxu0 %v572
        %647 = vmatprep.subr.bf16.mxu0 0
        %648 = vmatpush1.bf16.msra.mxu0 %v573
        %649 = vmatprep.subr.bf16.mxu0 0
        %650 = vmatpush1.bf16.msra.mxu0 %v574
        %651 = vmatprep.subr.bf16.mxu0 0
        %652 = vmatpush1.bf16.msra.mxu0 %v575
        %653 = vmatprep.subr.bf16.mxu0 0
        %654 = vmatpush1.bf16.msra.mxu0 %v576
        %655 = vmatprep.subr.bf16.mxu0 0
        %656 = vmatpush1.bf16.msra.mxu0 %v577
        %657 = vmatprep.subr.bf16.mxu0 0
        %658 = vmatpush1.bf16.msra.mxu0 %v578
        %659 = vmatprep.mubr.bf16.mxu0 %v390
        %660 = vmatmul.mubr.bf16.gmra.mrb[0].mxu0 %v378
        %v661 = vpop.f32.mrb[0].mxu0
        %v662 = vadd.f32 0.0, %v661
        %v663 = vpop.f32.mrb[0].mxu0
        %v664 = vpop.f32.mrb[0].mxu0
        %v665 = vadd.f32 0.0, %v664
        %v666 = vpop.f32.mrb[0].mxu0
        %667 = vmatprep.mubr.bf16.mxu0 %v420
        %668 = vmatmul.mubr.bf16.gmra.mrb[0].mxu0 %v417
        %v669 = vpop.f32.mrb[0].mxu0
        %v670 = vadd.f32 0.0, %v669
        %v671 = vpop.f32.mrb[0].mxu0
        %v672 = vpop.f32.mrb[0].mxu0
        %v673 = vpop.f32.mrb[0].mxu0
        %674 = vdwg.mxu0
        %675 = vmatprep.subr.bf16.mxu0 0
        %676 = vmatpush1.bf16.msra.mxu0 %v579
        %677 = vmatprep.subr.bf16.mxu0 0
        %678 = vmatpush1.bf16.msra.mxu0 %v580
        %679 = vmatprep.subr.bf16.mxu0 0
        %680 = vmatpush1.bf16.msra.mxu0 %v581
        %681 = vmatprep.subr.bf16.mxu0 0
        %682 = vmatpush1.bf16.msra.mxu0 %v582
        %683 = vmatprep.subr.bf16.mxu0 0
        %684 = vmatpush1.bf16.msra.mxu0 %v583
        %685 = vmatprep.subr.bf16.mxu0 0
        %686 = vmatpush1.bf16.msra.mxu0 %v584
        %687 = vmatprep.subr.bf16.mxu0 0
        %688 = vmatpush1.bf16.msra.mxu0 %v585
        %689 = vmatprep.subr.bf16.mxu0 0
        %690 = vmatpush1.bf16.msra.mxu0 %v586
        %691 = vmatprep.subr.bf16.mxu0 0
        %692 = vmatpush1.bf16.msra.mxu0 %v587
        %693 = vmatprep.subr.bf16.mxu0 0
        %694 = vmatpush1.bf16.msra.mxu0 %v588
        %695 = vmatprep.subr.bf16.mxu0 0
        %696 = vmatpush1.bf16.msra.mxu0 %v589
        %697 = vmatprep.subr.bf16.mxu0 0
        %698 = vmatpush1.bf16.msra.mxu0 %v590
        %699 = vmatprep.subr.bf16.mxu0 0
        %700 = vmatpush1.bf16.msra.mxu0 %v591
        %701 = vmatprep.subr.bf16.mxu0 0
        %702 = vmatpush1.bf16.msra.mxu0 %v592
        %703 = vmatprep.subr.bf16.mxu0 0
        %704 = vmatpush1.bf16.msra.mxu0 %v593
        %705 = vmatprep.subr.bf16.mxu0 0
        %706 = vmatpush1.bf16.msra.mxu0 %v594
        %707 = vmatprep.mubr.bf16.mxu0 %v414
        %708 = vmatmul.mubr.bf16.gmra.mrb[0].mxu0 %v402
        %v709 = vpop.f32.mrb[0].mxu0
        %v710 = vadd.f32 %v662, %v709
        %v711 = vpop.f32.mrb[0].mxu0
        %v712 = vpop.f32.mrb[0].mxu0
        %v713 = vadd.f32 %v665, %v712
        %v714 = vpop.f32.mrb[0].mxu0
        %715 = vmatprep.mubr.bf16.mxu0 %v426
        %716 = vmatmul.mubr.bf16.gmra.mrb[0].mxu0 %v423
        %v717 = vpop.f32.mrb[0].mxu0
        %v718 = vadd.f32 %v670, %v717
        %v719 = vpop.f32.mrb[0].mxu0
        %v720 = vpop.f32.mrb[0].mxu0
        %v721 = vpop.f32.mrb[0].mxu0
        %722 = vdwg.mxu0
        %v723 = vpack.c.b16 %v350, %v350
        %v724 = vpack.c.b16 %v351, %v351
        %v725 = vpack.c.b16 %v352, %v352
        %v726 = vpack.c.b16 %v353, %v353
        %v799 = vunpack.c.l.b16 %v203
        %v800 = vunpack.c.l.b16 %v204
        %v801 = vunpack.c.l.b16 %v205
        %v802 = vunpack.c.l.b16 %v206
        %v803 = vunpack.c.l.b16 %v207
        %v804 = vunpack.c.l.b16 %v208
        %v805 = vunpack.c.l.b16 %v209
        %v806 = vunpack.c.l.b16 %v210
        %v807 = vunpack.c.l.b16 %v211
        %v808 = vunpack.c.l.b16 %v212
        %v809 = vunpack.c.l.b16 %v213
        %v810 = vunpack.c.l.b16 %v214
        %v811 = vunpack.c.l.b16 %v215
        %v812 = vunpack.c.l.b16 %v216
        %v813 = vunpack.c.l.b16 %v217
        %v814 = vunpack.c.l.b16 %v218
        %v815 = vunpack.c.l.b16 %v219
        %v816 = vunpack.c.l.b16 %v220
        %v817 = vunpack.c.l.b16 %v221
        %v818 = vunpack.c.l.b16 %v222
        %v819 = vunpack.c.l.b16 %v223
        %v820 = vunpack.c.l.b16 %v224
        %v821 = vunpack.c.l.b16 %v225
        %v822 = vunpack.c.l.b16 %v226
        %v823 = vunpack.c.l.b16 %v227
        %v824 = vunpack.c.l.b16 %v228
        %v825 = vunpack.c.l.b16 %v229
        %v826 = vunpack.c.l.b16 %v230
        %v827 = vunpack.c.l.b16 %v231
        %v828 = vunpack.c.l.b16 %v232
        %v829 = vunpack.c.l.b16 %v233
        %v830 = vunpack.c.l.b16 %v234
        %v831 = vunpack.c.l.b16 %v235
        %v832 = vunpack.c.l.b16 %v236
        %v833 = vunpack.c.l.b16 %v237
        %v834 = vunpack.c.l.b16 %v238
        %v835 = vunpack.c.l.b16 %v239
        %v836 = vunpack.c.l.b16 %v240
        %v837 = vunpack.c.l.b16 %v241
        %v838 = vunpack.c.l.b16 %v242
        %v839 = vunpack.c.l.b16 %v243
        %v840 = vunpack.c.l.b16 %v244
        %v841 = vunpack.c.l.b16 %v245
        %v842 = vunpack.c.l.b16 %v246
        %v843 = vunpack.c.l.b16 %v247
        %v844 = vunpack.c.l.b16 %v248
        %v845 = vunpack.c.l.b16 %v249
        %v846 = vunpack.c.l.b16 %v250
        %v847 = vunpack.c.l.b16 %v251
        %v848 = vunpack.c.l.b16 %v252
        %v849 = vunpack.c.l.b16 %v253
        %v850 = vunpack.c.l.b16 %v254
        %v851 = vunpack.c.l.b16 %v255
        %v852 = vunpack.c.l.b16 %v256
        %v853 = vunpack.c.l.b16 %v257
        %v854 = vunpack.c.l.b16 %v258
        %v855 = vunpack.c.l.b16 %v259
        %v856 = vunpack.c.l.b16 %v260
        %v857 = vunpack.c.l.b16 %v261
        %v858 = vunpack.c.l.b16 %v262
        %v859 = vunpack.c.l.b16 %v263
        %v860 = vunpack.c.l.b16 %v264
        %v861 = vunpack.c.l.b16 %v265
        %v862 = vunpack.c.l.b16 %v266
        %v863 = vpack.c.b16 %v800, %v799
        %v864 = vpack.c.b16 %v802, %v801
        %v865 = vpack.c.b16 %v804, %v803
        %v866 = vpack.c.b16 %v806, %v805
        %v867 = vpack.c.b16 %v808, %v807
        %v868 = vpack.c.b16 %v810, %v809
        %v869 = vpack.c.b16 %v812, %v811
        %v870 = vpack.c.b16 %v814, %v813
        %v871 = vpack.c.b16 %v816, %v815
        %v872 = vpack.c.b16 %v818, %v817
        %v873 = vpack.c.b16 %v820, %v819
        %v874 = vpack.c.b16 %v822, %v821
        %v875 = vpack.c.b16 %v824, %v823
        %v876 = vpack.c.b16 %v826, %v825
        %v877 = vpack.c.b16 %v828, %v827
        %v878 = vpack.c.b16 %v830, %v829
        %v879 = vpack.c.b16 %v832, %v831
        %v880 = vpack.c.b16 %v834, %v833
        %v881 = vpack.c.b16 %v836, %v835
        %v882 = vpack.c.b16 %v838, %v837
        %v883 = vpack.c.b16 %v840, %v839
        %v884 = vpack.c.b16 %v842, %v841
        %v885 = vpack.c.b16 %v844, %v843
        %v886 = vpack.c.b16 %v846, %v845
        %v887 = vpack.c.b16 %v848, %v847
        %v888 = vpack.c.b16 %v850, %v849
        %v889 = vpack.c.b16 %v852, %v851
        %v890 = vpack.c.b16 %v854, %v853
        %v891 = vpack.c.b16 %v856, %v855
        %v892 = vpack.c.b16 %v858, %v857
        %v893 = vpack.c.b16 %v860, %v859
        %v894 = vpack.c.b16 %v862, %v861
        %927 = vmatprep.subr.bf16.mxu0 0
        %928 = vmatpush1.bf16.msra.mxu0 %v863
        %929 = vmatprep.subr.bf16.mxu0 0
        %930 = vmatpush1.bf16.msra.mxu0 %v864
        %931 = vmatprep.subr.bf16.mxu0 0
        %932 = vmatpush1.bf16.msra.mxu0 %v865
        %933 = vmatprep.subr.bf16.mxu0 0
        %934 = vmatpush1.bf16.msra.mxu0 %v866
        %935 = vmatprep.subr.bf16.mxu0 0
        %936 = vmatpush1.bf16.msra.mxu0 %v867
        %937 = vmatprep.subr.bf16.mxu0 0
        %938 = vmatpush1.bf16.msra.mxu0 %v868
        %939 = vmatprep.subr.bf16.mxu0 0
        %940 = vmatpush1.bf16.msra.mxu0 %v869
        %941 = vmatprep.subr.bf16.mxu0 0
        %942 = vmatpush1.bf16.msra.mxu0 %v870
        %943 = vmatprep.subr.bf16.mxu0 0
        %944 = vmatpush1.bf16.msra.mxu0 %v871
        %945 = vmatprep.subr.bf16.mxu0 0
        %946 = vmatpush1.bf16.msra.mxu0 %v872
        %947 = vmatprep.subr.bf16.mxu0 0
        %948 = vmatpush1.bf16.msra.mxu0 %v873
        %949 = vmatprep.subr.bf16.mxu0 0
        %950 = vmatpush1.bf16.msra.mxu0 %v874
        %951 = vmatprep.subr.bf16.mxu0 0
        %952 = vmatpush1.bf16.msra.mxu0 %v875
        %953 = vmatprep.subr.bf16.mxu0 0
        %954 = vmatpush1.bf16.msra.mxu0 %v876
        %955 = vmatprep.subr.bf16.mxu0 0
        %956 = vmatpush1.bf16.msra.mxu0 %v877
        %957 = vmatprep.subr.bf16.mxu0 0
        %958 = vmatpush1.bf16.msra.mxu0 %v878
        %959 = vmatprep.mubr.bf16.mxu0 %v359
        %960 = vmatmul.mubr.bf16.gmra.mrb[0].mxu0 %v358
        %v961 = vpop.f32.mrb[0].mxu0
        %v962 = vadd.f32 %v710, %v961
        %v963 = vpop.f32.mrb[0].mxu0
        %v964 = vpop.f32.mrb[0].mxu0
        %v965 = vadd.f32 %v713, %v964
        %v966 = vpop.f32.mrb[0].mxu0
        %967 = vmatprep.mubr.bf16.mxu0 %v724
        %968 = vmatmul.mubr.bf16.gmra.mrb[0].mxu0 %v723
        %v969 = vpop.f32.mrb[0].mxu0
        %v970 = vadd.f32 %v718, %v969
        %v971 = vpop.f32.mrb[0].mxu0
        %v972 = vpop.f32.mrb[0].mxu0
        %v973 = vpop.f32.mrb[0].mxu0
        %974 = vdwg.mxu0
        %975 = vmatprep.subr.bf16.mxu0 0
        %976 = vmatpush1.bf16.msra.mxu0 %v879
        %977 = vmatprep.subr.bf16.mxu0 0
        %978 = vmatpush1.bf16.msra.mxu0 %v880
        %979 = vmatprep.subr.bf16.mxu0 0
        %980 = vmatpush1.bf16.msra.mxu0 %v881
        %981 = vmatprep.subr.bf16.mxu0 0
        %982 = vmatpush1.bf16.msra.mxu0 %v882
        %983 = vmatprep.subr.bf16.mxu0 0
        %984 = vmatpush1.bf16.msra.mxu0 %v883
        %985 = vmatprep.subr.bf16.mxu0 0
        %986 = vmatpush1.bf16.msra.mxu0 %v884
        %987 = vmatprep.subr.bf16.mxu0 0
        %988 = vmatpush1.bf16.msra.mxu0 %v885
        %989 = vmatprep.subr.bf16.mxu0 0
        %990 = vmatpush1.bf16.msra.mxu0 %v886
        %991 = vmatprep.subr.bf16.mxu0 0
        %992 = vmatpush1.bf16.msra.mxu0 %v887
        %993 = vmatprep.subr.bf16.mxu0 0
        %994 = vmatpush1.bf16.msra.mxu0 %v888
        %995 = vmatprep.subr.bf16.mxu0 0
        %996 = vmatpush1.bf16.msra.mxu0 %v889
        %997 = vmatprep.subr.bf16.mxu0 0
        %998 = vmatpush1.bf16.msra.mxu0 %v890
        %999 = vmatprep.subr.bf16.mxu0 0
        %1000 = vmatpush1.bf16.msra.mxu0 %v891
        %1001 = vmatprep.subr.bf16.mxu0 0
        %1002 = vmatpush1.bf16.msra.mxu0 %v892
        %1003 = vmatprep.subr.bf16.mxu0 0
        %1004 = vmatpush1.bf16.msra.mxu0 %v893
        %1005 = vmatprep.subr.bf16.mxu0 0
        %1006 = vmatpush1.bf16.msra.mxu0 %v894
        %1007 = vmatprep.mubr.bf16.mxu0 %v361
        %1008 = vmatmul.mubr.bf16.gmra.mrb[0].mxu0 %v360
        %v1009 = vpop.f32.mrb[0].mxu0
        %v1010 = vadd.f32 %v962, %v1009
        %v1011 = vpop.f32.mrb[0].mxu0
        %v1012 = vpop.f32.mrb[0].mxu0
        %v1013 = vadd.f32 %v965, %v1012
        %v1014 = vpop.f32.mrb[0].mxu0
        %1015 = vmatprep.mubr.bf16.mxu0 %v726
        %1016 = vmatmul.mubr.bf16.gmra.mrb[0].mxu0 %v725
        %v1017 = vpop.f32.mrb[0].mxu0
        %v1018 = vadd.f32 %v970, %v1017
        %v1019 = vpop.f32.mrb[0].mxu0
        %v1020 = vpop.f32.mrb[0].mxu0
        %v1021 = vpop.f32.mrb[0].mxu0
        %1022 = vdwg.mxu0
        %v1023 = vld [vmem:[%s195] sm:$0xee]
        %v1024 = vld [vmem:[%s195 + $0x8] sm:$0xee]
        %s1025 = scalar_lea.vmem %s1, 512
        %v1026 = vld [vmem:[%s1025] sm:$0xf]
        %v1027 = vld [vmem:[%s1025 + $0x4] sm:$0xf]
        %v1028 = vld [vmem:[%s1025 + $0x8] sm:$0xf]
        %v1029 = vld [vmem:[%s1025 + $0xc] sm:$0xf]
        %v1030 = vld [vmem:[%s1025 + $0x10] sm:$0xf]
        %v1031 = vld [vmem:[%s1025 + $0x14] sm:$0xf]
        %v1032 = vld [vmem:[%s1025 + $0x18] sm:$0xf]
        %v1033 = vld [vmem:[%s1025 + $0x1c] sm:$0xf]
        %v1034 = vld [vmem:[%s1025 + $0x20] sm:$0xf]
        %v1035 = vld [vmem:[%s1025 + $0x24] sm:$0xf]
        %v1036 = vld [vmem:[%s1025 + $0x28] sm:$0xf]
        %v1037 = vld [vmem:[%s1025 + $0x2c] sm:$0xf]
        %v1038 = vld [vmem:[%s1025 + $0x30] sm:$0xf]
        %v1039 = vld [vmem:[%s1025 + $0x34] sm:$0xf]
        %v1040 = vld [vmem:[%s1025 + $0x38] sm:$0xf]
        %v1041 = vld [vmem:[%s1025 + $0x3c] sm:$0xf]
        %v1042 = vld [vmem:[%s1025 + $0x40] sm:$0xf]
        %v1043 = vld [vmem:[%s1025 + $0x44] sm:$0xf]
        %v1044 = vld [vmem:[%s1025 + $0x48] sm:$0xf]
        %v1045 = vld [vmem:[%s1025 + $0x4c] sm:$0xf]
        %v1046 = vld [vmem:[%s1025 + $0x50] sm:$0xf]
        %v1047 = vld [vmem:[%s1025 + $0x54] sm:$0xf]
        %v1048 = vld [vmem:[%s1025 + $0x58] sm:$0xf]
        %v1049 = vld [vmem:[%s1025 + $0x5c] sm:$0xf]
        %v1050 = vld [vmem:[%s1025 + $0x60] sm:$0xf]
        %v1051 = vld [vmem:[%s1025 + $0x64] sm:$0xf]
        %v1052 = vld [vmem:[%s1025 + $0x68] sm:$0xf]
        %v1053 = vld [vmem:[%s1025 + $0x6c] sm:$0xf]
        %v1054 = vld [vmem:[%s1025 + $0x70] sm:$0xf]
        %v1055 = vld [vmem:[%s1025 + $0x74] sm:$0xf]
        %v1056 = vld [vmem:[%s1025 + $0x78] sm:$0xf]
        %v1057 = vld [vmem:[%s1025 + $0x7c] sm:$0xf]
        %v1058 = vld [vmem:[%s1025 + $0x80] sm:$0xf]
        %v1059 = vld [vmem:[%s1025 + $0x84] sm:$0xf]
        %v1060 = vld [vmem:[%s1025 + $0x88] sm:$0xf]
        %v1061 = vld [vmem:[%s1025 + $0x8c] sm:$0xf]
        %v1062 = vld [vmem:[%s1025 + $0x90] sm:$0xf]
        %v1063 = vld [vmem:[%s1025 + $0x94] sm:$0xf]
        %v1064 = vld [vmem:[%s1025 + $0x98] sm:$0xf]
        %v1065 = vld [vmem:[%s1025 + $0x9c] sm:$0xf]
        %v1066 = vld [vmem:[%s1025 + $0xa0] sm:$0xf]
        %v1067 = vld [vmem:[%s1025 + $0xa4] sm:$0xf]
        %v1068 = vld [vmem:[%s1025 + $0xa8] sm:$0xf]
        %v1069 = vld [vmem:[%s1025 + $0xac] sm:$0xf]
        %v1070 = vld [vmem:[%s1025 + $0xb0] sm:$0xf]
        %v1071 = vld [vmem:[%s1025 + $0xb4] sm:$0xf]
        %v1072 = vld [vmem:[%s1025 + $0xb8] sm:$0xf]
        %v1073 = vld [vmem:[%s1025 + $0xbc] sm:$0xf]
        %v1074 = vld [vmem:[%s1025 + $0xc0] sm:$0xf]
        %v1075 = vld [vmem:[%s1025 + $0xc4] sm:$0xf]
        %v1076 = vld [vmem:[%s1025 + $0xc8] sm:$0xf]
        %v1077 = vld [vmem:[%s1025 + $0xcc] sm:$0xf]
        %v1078 = vld [vmem:[%s1025 + $0xd0] sm:$0xf]
        %v1079 = vld [vmem:[%s1025 + $0xd4] sm:$0xf]
        %v1080 = vld [vmem:[%s1025 + $0xd8] sm:$0xf]
        %v1081 = vld [vmem:[%s1025 + $0xdc] sm:$0xf]
        %v1082 = vld [vmem:[%s1025 + $0xe0] sm:$0xf]
        %v1083 = vld [vmem:[%s1025 + $0xe4] sm:$0xf]
        %v1084 = vld [vmem:[%s1025 + $0xe8] sm:$0xf]
        %v1085 = vld [vmem:[%s1025 + $0xec] sm:$0xf]
        %v1086 = vld [vmem:[%s1025 + $0xf0] sm:$0xf]
        %v1087 = vld [vmem:[%s1025 + $0xf4] sm:$0xf]
        %v1088 = vld [vmem:[%s1025 + $0xf8] sm:$0xf]
        %v1089 = vld [vmem:[%s1025 + $0xfc] sm:$0xf]
        %v1092 = vunpack.c.l.b16 %v1023
        %v1093 = vunpack.c.h.b16 %v1023
        %v1094 = vunpack.c.l.b16 %v1024
        %v1095 = vunpack.c.h.b16 %v1024
        %v1096 = vpack.c.b16 %v346, %v1092
        %v1097 = vpack.c.b16 %v347, %v1093
        %v1098 = vpack.c.b16 %v348, %v1094
        %v1099 = vpack.c.b16 %v349, %v1095
        %vm1100 = vcmask 1046528
        %v1101 = vrot.slane %v1096, 1
        %v1102 = vrot.slane %v362, 1
        %v1103 = vsel %vm1100, %v1101, %v1102
        %v1104 = vrot.slane %v1097, 1
        %v1105 = vrot.slane %v363, 1
        %v1106 = vsel %vm1100, %v1104, %v1105
        %v1107 = vrot.slane %v1098, 1
        %v1108 = vrot.slane %v364, 1
        %v1109 = vsel %vm1100, %v1107, %v1108
        %v1110 = vrot.slane %v1099, 1
        %v1111 = vrot.slane %v365, 1
        %v1112 = vsel %vm1100, %v1110, %v1111
        %v1185 = vunpack.c.l.b16 %v1026
        %v1186 = vunpack.c.l.b16 %v1027
        %v1187 = vunpack.c.l.b16 %v1028
        %v1188 = vunpack.c.l.b16 %v1029
        %v1189 = vunpack.c.l.b16 %v1030
        %v1190 = vunpack.c.l.b16 %v1031
        %v1191 = vunpack.c.l.b16 %v1032
        %v1192 = vunpack.c.l.b16 %v1033
        %v1193 = vunpack.c.l.b16 %v1034
        %v1194 = vunpack.c.l.b16 %v1035
        %v1195 = vunpack.c.l.b16 %v1036
        %v1196 = vunpack.c.l.b16 %v1037
        %v1197 = vunpack.c.l.b16 %v1038
        %v1198 = vunpack.c.l.b16 %v1039
        %v1199 = vunpack.c.l.b16 %v1040
        %v1200 = vunpack.c.l.b16 %v1041
        %v1201 = vunpack.c.l.b16 %v1042
        %v1202 = vunpack.c.l.b16 %v1043
        %v1203 = vunpack.c.l.b16 %v1044
        %v1204 = vunpack.c.l.b16 %v1045
        %v1205 = vunpack.c.l.b16 %v1046
        %v1206 = vunpack.c.l.b16 %v1047
        %v1207 = vunpack.c.l.b16 %v1048
        %v1208 = vunpack.c.l.b16 %v1049
        %v1209 = vunpack.c.l.b16 %v1050
        %v1210 = vunpack.c.l.b16 %v1051
        %v1211 = vunpack.c.l.b16 %v1052
        %v1212 = vunpack.c.l.b16 %v1053
        %v1213 = vunpack.c.l.b16 %v1054
        %v1214 = vunpack.c.l.b16 %v1055
        %v1215 = vunpack.c.l.b16 %v1056
        %v1216 = vunpack.c.l.b16 %v1057
        %v1217 = vunpack.c.l.b16 %v1058
        %v1218 = vunpack.c.l.b16 %v1059
        %v1219 = vunpack.c.l.b16 %v1060
        %v1220 = vunpack.c.l.b16 %v1061
        %v1221 = vunpack.c.l.b16 %v1062
        %v1222 = vunpack.c.l.b16 %v1063
        %v1223 = vunpack.c.l.b16 %v1064
        %v1224 = vunpack.c.l.b16 %v1065
        %v1225 = vunpack.c.l.b16 %v1066
        %v1226 = vunpack.c.l.b16 %v1067
        %v1227 = vunpack.c.l.b16 %v1068
        %v1228 = vunpack.c.l.b16 %v1069
        %v1229 = vunpack.c.l.b16 %v1070
        %v1230 = vunpack.c.l.b16 %v1071
        %v1231 = vunpack.c.l.b16 %v1072
        %v1232 = vunpack.c.l.b16 %v1073
        %v1233 = vunpack.c.l.b16 %v1074
        %v1234 = vunpack.c.l.b16 %v1075
        %v1235 = vunpack.c.l.b16 %v1076
        %v1236 = vunpack.c.l.b16 %v1077
        %v1237 = vunpack.c.l.b16 %v1078
        %v1238 = vunpack.c.l.b16 %v1079
        %v1239 = vunpack.c.l.b16 %v1080
        %v1240 = vunpack.c.l.b16 %v1081
        %v1241 = vunpack.c.l.b16 %v1082
        %v1242 = vunpack.c.l.b16 %v1083
        %v1243 = vunpack.c.l.b16 %v1084
        %v1244 = vunpack.c.l.b16 %v1085
        %v1245 = vunpack.c.l.b16 %v1086
        %v1246 = vunpack.c.l.b16 %v1087
        %v1247 = vunpack.c.l.b16 %v1088
        %v1248 = vunpack.c.l.b16 %v1089
        %v1249 = vpack.c.b16 %v1186, %v1185
        %v1250 = vpack.c.b16 %v1188, %v1187
        %v1251 = vpack.c.b16 %v1190, %v1189
        %v1252 = vpack.c.b16 %v1192, %v1191
        %v1253 = vpack.c.b16 %v1194, %v1193
        %v1254 = vpack.c.b16 %v1196, %v1195
        %v1255 = vpack.c.b16 %v1198, %v1197
        %v1256 = vpack.c.b16 %v1200, %v1199
        %v1257 = vpack.c.b16 %v1202, %v1201
        %v1258 = vpack.c.b16 %v1204, %v1203
        %v1259 = vpack.c.b16 %v1206, %v1205
        %v1260 = vpack.c.b16 %v1208, %v1207
        %v1261 = vpack.c.b16 %v1210, %v1209
        %v1262 = vpack.c.b16 %v1212, %v1211
        %v1263 = vpack.c.b16 %v1214, %v1213
        %v1264 = vpack.c.b16 %v1216, %v1215
        %v1265 = vpack.c.b16 %v1218, %v1217
        %v1266 = vpack.c.b16 %v1220, %v1219
        %v1267 = vpack.c.b16 %v1222, %v1221
        %v1268 = vpack.c.b16 %v1224, %v1223
        %v1269 = vpack.c.b16 %v1226, %v1225
        %v1270 = vpack.c.b16 %v1228, %v1227
        %v1271 = vpack.c.b16 %v1230, %v1229
        %v1272 = vpack.c.b16 %v1232, %v1231
        %v1273 = vpack.c.b16 %v1234, %v1233
        %v1274 = vpack.c.b16 %v1236, %v1235
        %v1275 = vpack.c.b16 %v1238, %v1237
        %v1276 = vpack.c.b16 %v1240, %v1239
        %v1277 = vpack.c.b16 %v1242, %v1241
        %v1278 = vpack.c.b16 %v1244, %v1243
        %v1279 = vpack.c.b16 %v1246, %v1245
        %v1280 = vpack.c.b16 %v1248, %v1247
        %1313 = vmatprep.subr.bf16.mxu0 0
        %1314 = vmatpush1.bf16.msra.mxu0 %v1249
        %1315 = vmatprep.subr.bf16.mxu0 0
        %1316 = vmatpush1.bf16.msra.mxu0 %v1250
        %1317 = vmatprep.subr.bf16.mxu0 0
        %1318 = vmatpush1.bf16.msra.mxu0 %v1251
        %1319 = vmatprep.subr.bf16.mxu0 0
        %1320 = vmatpush1.bf16.msra.mxu0 %v1252
        %1321 = vmatprep.subr.bf16.mxu0 0
        %1322 = vmatpush1.bf16.msra.mxu0 %v1253
        %1323 = vmatprep.subr.bf16.mxu0 0
        %1324 = vmatpush1.bf16.msra.mxu0 %v1254
        %1325 = vmatprep.subr.bf16.mxu0 0
        %1326 = vmatpush1.bf16.msra.mxu0 %v1255
        %1327 = vmatprep.subr.bf16.mxu0 0
        %1328 = vmatpush1.bf16.msra.mxu0 %v1256
        %1329 = vmatprep.subr.bf16.mxu0 0
        %1330 = vmatpush1.bf16.msra.mxu0 %v1257
        %1331 = vmatprep.subr.bf16.mxu0 0
        %1332 = vmatpush1.bf16.msra.mxu0 %v1258
        %1333 = vmatprep.subr.bf16.mxu0 0
        %1334 = vmatpush1.bf16.msra.mxu0 %v1259
        %1335 = vmatprep.subr.bf16.mxu0 0
        %1336 = vmatpush1.bf16.msra.mxu0 %v1260
        %1337 = vmatprep.subr.bf16.mxu0 0
        %1338 = vmatpush1.bf16.msra.mxu0 %v1261
        %1339 = vmatprep.subr.bf16.mxu0 0
        %1340 = vmatpush1.bf16.msra.mxu0 %v1262
        %1341 = vmatprep.subr.bf16.mxu0 0
        %1342 = vmatpush1.bf16.msra.mxu0 %v1263
        %1343 = vmatprep.subr.bf16.mxu0 0
        %1344 = vmatpush1.bf16.msra.mxu0 %v1264
        %1345 = vmatprep.mubr.bf16.mxu0 %v1106
        %1346 = vmatmul.mubr.bf16.gmra.mrb[0].mxu0 %v1103
        %v1347 = vpop.f32.mrb[0].mxu0
        %v1348 = vadd.f32 0.0, %v1347
        %v1349 = vpop.f32.mrb[0].mxu0
        %v1350 = vpop.f32.mrb[0].mxu0
        %v1351 = vadd.f32 0.0, %v1350
        %v1352 = vpop.f32.mrb[0].mxu0
        %1353 = vmatprep.mubr.bf16.mxu0 %v1105
        %1354 = vmatmul.mubr.bf16.gmra.mrb[0].mxu0 %v1102
        %v1355 = vpop.f32.mrb[0].mxu0
        %v1356 = vadd.f32 0.0, %v1355
        %v1357 = vpop.f32.mrb[0].mxu0
        %v1358 = vpop.f32.mrb[0].mxu0
        %v1359 = vpop.f32.mrb[0].mxu0
        %1360 = vdwg.mxu0
        %1361 = vmatprep.subr.bf16.mxu0 0
        %1362 = vmatpush1.bf16.msra.mxu0 %v1265
        %1363 = vmatprep.subr.bf16.mxu0 0
        %1364 = vmatpush1.bf16.msra.mxu0 %v1266
        %1365 = vmatprep.subr.bf16.mxu0 0
        %1366 = vmatpush1.bf16.msra.mxu0 %v1267
        %1367 = vmatprep.subr.bf16.mxu0 0
        %1368 = vmatpush1.bf16.msra.mxu0 %v1268
        %1369 = vmatprep.subr.bf16.mxu0 0
        %1370 = vmatpush1.bf16.msra.mxu0 %v1269
        %1371 = vmatprep.subr.bf16.mxu0 0
        %1372 = vmatpush1.bf16.msra.mxu0 %v1270
        %1373 = vmatprep.subr.bf16.mxu0 0
        %1374 = vmatpush1.bf16.msra.mxu0 %v1271
        %1375 = vmatprep.subr.bf16.mxu0 0
        %1376 = vmatpush1.bf16.msra.mxu0 %v1272
        %1377 = vmatprep.subr.bf16.mxu0 0
        %1378 = vmatpush1.bf16.msra.mxu0 %v1273
        %1379 = vmatprep.subr.bf16.mxu0 0
        %1380 = vmatpush1.bf16.msra.mxu0 %v1274
        %1381 = vmatprep.subr.bf16.mxu0 0
        %1382 = vmatpush1.bf16.msra.mxu0 %v1275
        %1383 = vmatprep.subr.bf16.mxu0 0
        %1384 = vmatpush1.bf16.msra.mxu0 %v1276
        %1385 = vmatprep.subr.bf16.mxu0 0
        %1386 = vmatpush1.bf16.msra.mxu0 %v1277
        %1387 = vmatprep.subr.bf16.mxu0 0
        %1388 = vmatpush1.bf16.msra.mxu0 %v1278
        %1389 = vmatprep.subr.bf16.mxu0 0
        %1390 = vmatpush1.bf16.msra.mxu0 %v1279
        %1391 = vmatprep.subr.bf16.mxu0 0
        %1392 = vmatpush1.bf16.msra.mxu0 %v1280
        %1393 = vmatprep.mubr.bf16.mxu0 %v1112
        %1394 = vmatmul.mubr.bf16.gmra.mrb[0].mxu0 %v1109
        %v1395 = vpop.f32.mrb[0].mxu0
        %v1396 = vadd.f32 %v1348, %v1395
        %v1397 = vpop.f32.mrb[0].mxu0
        %v1398 = vpop.f32.mrb[0].mxu0
        %v1399 = vadd.f32 %v1351, %v1398
        %v1400 = vpop.f32.mrb[0].mxu0
        %1401 = vmatprep.mubr.bf16.mxu0 %v1111
        %1402 = vmatmul.mubr.bf16.gmra.mrb[0].mxu0 %v1108
        %v1403 = vpop.f32.mrb[0].mxu0
        %v1404 = vadd.f32 %v1356, %v1403
        %v1405 = vpop.f32.mrb[0].mxu0
        %v1406 = vpop.f32.mrb[0].mxu0
        %v1407 = vpop.f32.mrb[0].mxu0
        %1408 = vdwg.mxu0
        %v1409 = vadd.f32 %v1010, %v1396
        %v1410 = vadd.f32 %v1013, %v1399
        %v1411 = vadd.f32 %v1018, %v1404
        %v1412 = vld [vmem:[%s195] sm:$0x88]
        %v1413 = vld [vmem:[%s195 + $0x8] sm:$0x88]
        %v1414 = vld [vmem:[%s195 + $0x30] sm:$0x77]
        %v1415 = vld [vmem:[%s195 + $0x38] sm:$0x77]
        %s1416 = scalar_lea.vmem %s1, 768
        %v1417 = vld [vmem:[%s1416] sm:$0xf]
        %v1418 = vld [vmem:[%s1416 + $0x4] sm:$0xf]
        %v1419 = vld [vmem:[%s1416 + $0x8] sm:$0xf]
        %v1420 = vld [vmem:[%s1416 + $0xc] sm:$0xf]
        %v1421 = vld [vmem:[%s1416 + $0x10] sm:$0xf]
        %v1422 = vld [vmem:[%s1416 + $0x14] sm:$0xf]
        %v1423 = vld [vmem:[%s1416 + $0x18] sm:$0xf]
        %v1424 = vld [vmem:[%s1416 + $0x1c] sm:$0xf]
        %v1425 = vld [vmem:[%s1416 + $0x20] sm:$0xf]
        %v1426 = vld [vmem:[%s1416 + $0x24] sm:$0xf]
        %v1427 = vld [vmem:[%s1416 + $0x28] sm:$0xf]
        %v1428 = vld [vmem:[%s1416 + $0x2c] sm:$0xf]
        %v1429 = vld [vmem:[%s1416 + $0x30] sm:$0xf]
        %v1430 = vld [vmem:[%s1416 + $0x34] sm:$0xf]
        %v1431 = vld [vmem:[%s1416 + $0x38] sm:$0xf]
        %v1432 = vld [vmem:[%s1416 + $0x3c] sm:$0xf]
        %v1433 = vld [vmem:[%s1416 + $0x40] sm:$0xf]
        %v1434 = vld [vmem:[%s1416 + $0x44] sm:$0xf]
        %v1435 = vld [vmem:[%s1416 + $0x48] sm:$0xf]
        %v1436 = vld [vmem:[%s1416 + $0x4c] sm:$0xf]
        %v1437 = vld [vmem:[%s1416 + $0x50] sm:$0xf]
        %v1438 = vld [vmem:[%s1416 + $0x54] sm:$0xf]
        %v1439 = vld [vmem:[%s1416 + $0x58] sm:$0xf]
        %v1440 = vld [vmem:[%s1416 + $0x5c] sm:$0xf]
        %v1441 = vld [vmem:[%s1416 + $0x60] sm:$0xf]
        %v1442 = vld [vmem:[%s1416 + $0x64] sm:$0xf]
        %v1443 = vld [vmem:[%s1416 + $0x68] sm:$0xf]
        %v1444 = vld [vmem:[%s1416 + $0x6c] sm:$0xf]
        %v1445 = vld [vmem:[%s1416 + $0x70] sm:$0xf]
        %v1446 = vld [vmem:[%s1416 + $0x74] sm:$0xf]
        %v1447 = vld [vmem:[%s1416 + $0x78] sm:$0xf]
        %v1448 = vld [vmem:[%s1416 + $0x7c] sm:$0xf]
        %v1449 = vld [vmem:[%s1416 + $0x80] sm:$0xf]
        %v1450 = vld [vmem:[%s1416 + $0x84] sm:$0xf]
        %v1451 = vld [vmem:[%s1416 + $0x88] sm:$0xf]
        %v1452 = vld [vmem:[%s1416 + $0x8c] sm:$0xf]
        %v1453 = vld [vmem:[%s1416 + $0x90] sm:$0xf]
        %v1454 = vld [vmem:[%s1416 + $0x94] sm:$0xf]
        %v1455 = vld [vmem:[%s1416 + $0x98] sm:$0xf]
        %v1456 = vld [vmem:[%s1416 + $0x9c] sm:$0xf]
        %v1457 = vld [vmem:[%s1416 + $0xa0] sm:$0xf]
        %v1458 = vld [vmem:[%s1416 + $0xa4] sm:$0xf]
        %v1459 = vld [vmem:[%s1416 + $0xa8] sm:$0xf]
        %v1460 = vld [vmem:[%s1416 + $0xac] sm:$0xf]
        %v1461 = vld [vmem:[%s1416 + $0xb0] sm:$0xf]
        %v1462 = vld [vmem:[%s1416 + $0xb4] sm:$0xf]
        %v1463 = vld [vmem:[%s1416 + $0xb8] sm:$0xf]
        %v1464 = vld [vmem:[%s1416 + $0xbc] sm:$0xf]
        %v1465 = vld [vmem:[%s1416 + $0xc0] sm:$0xf]
        %v1466 = vld [vmem:[%s1416 + $0xc4] sm:$0xf]
        %v1467 = vld [vmem:[%s1416 + $0xc8] sm:$0xf]
        %v1468 = vld [vmem:[%s1416 + $0xcc] sm:$0xf]
        %v1469 = vld [vmem:[%s1416 + $0xd0] sm:$0xf]
        %v1470 = vld [vmem:[%s1416 + $0xd4] sm:$0xf]
        %v1471 = vld [vmem:[%s1416 + $0xd8] sm:$0xf]
        %v1472 = vld [vmem:[%s1416 + $0xdc] sm:$0xf]
        %v1473 = vld [vmem:[%s1416 + $0xe0] sm:$0xf]
        %v1474 = vld [vmem:[%s1416 + $0xe4] sm:$0xf]
        %v1475 = vld [vmem:[%s1416 + $0xe8] sm:$0xf]
        %v1476 = vld [vmem:[%s1416 + $0xec] sm:$0xf]
        %v1477 = vld [vmem:[%s1416 + $0xf0] sm:$0xf]
        %v1478 = vld [vmem:[%s1416 + $0xf4] sm:$0xf]
        %v1479 = vld [vmem:[%s1416 + $0xf8] sm:$0xf]
        %v1480 = vld [vmem:[%s1416 + $0xfc] sm:$0xf]
        %v1485 = vunpack.c.l.b16 %v1412
        %v1486 = vunpack.c.h.b16 %v1412
        %v1487 = vunpack.c.l.b16 %v1413
        %v1488 = vunpack.c.h.b16 %v1413
        %v1489 = vunpack.c.l.b16 %v1414
        %v1490 = vunpack.c.h.b16 %v1414
        %v1491 = vunpack.c.l.b16 %v1415
        %v1492 = vunpack.c.h.b16 %v1415
        %v1493 = vpack.c.b16 %v346, %v1485
        %v1494 = vpack.c.b16 %v347, %v1486
        %v1495 = vpack.c.b16 %v348, %v1487
        %v1496 = vpack.c.b16 %v349, %v1488
        %v1497 = vpack.c.b16 %v1489, %v350
        %v1498 = vpack.c.b16 %v1490, %v351
        %v1499 = vpack.c.b16 %v1491, %v352
        %v1500 = vpack.c.b16 %v1492, %v353
        %vm1501 = vcmask 1044480
        %v1502 = vrot.slane %v1493, 3
        %v1503 = vrot.slane %v1497, 3
        %v1504 = vsel %vm1501, %v1502, %v1503
        %v1505 = vrot.slane %v1494, 3
        %v1506 = vrot.slane %v1498, 3
        %v1507 = vsel %vm1501, %v1505, %v1506
        %v1508 = vrot.slane %v1495, 3
        %v1509 = vrot.slane %v1499, 3
        %v1510 = vsel %vm1501, %v1508, %v1509
        %v1511 = vrot.slane %v1496, 3
        %v1512 = vrot.slane %v1500, 3
        %v1513 = vsel %vm1501, %v1511, %v1512
        %v1586 = vunpack.c.l.b16 %v1417
        %v1587 = vunpack.c.l.b16 %v1418
        %v1588 = vunpack.c.l.b16 %v1419
        %v1589 = vunpack.c.l.b16 %v1420
        %v1590 = vunpack.c.l.b16 %v1421
        %v1591 = vunpack.c.l.b16 %v1422
        %v1592 = vunpack.c.l.b16 %v1423
        %v1593 = vunpack.c.l.b16 %v1424
        %v1594 = vunpack.c.l.b16 %v1425
        %v1595 = vunpack.c.l.b16 %v1426
        %v1596 = vunpack.c.l.b16 %v1427
        %v1597 = vunpack.c.l.b16 %v1428
        %v1598 = vunpack.c.l.b16 %v1429
        %v1599 = vunpack.c.l.b16 %v1430
        %v1600 = vunpack.c.l.b16 %v1431
        %v1601 = vunpack.c.l.b16 %v1432
        %v1602 = vunpack.c.l.b16 %v1433
        %v1603 = vunpack.c.l.b16 %v1434
        %v1604 = vunpack.c.l.b16 %v1435
        %v1605 = vunpack.c.l.b16 %v1436
        %v1606 = vunpack.c.l.b16 %v1437
        %v1607 = vunpack.c.l.b16 %v1438
        %v1608 = vunpack.c.l.b16 %v1439
        %v1609 = vunpack.c.l.b16 %v1440
        %v1610 = vunpack.c.l.b16 %v1441
        %v1611 = vunpack.c.l.b16 %v1442
        %v1612 = vunpack.c.l.b16 %v1443
        %v1613 = vunpack.c.l.b16 %v1444
        %v1614 = vunpack.c.l.b16 %v1445
        %v1615 = vunpack.c.l.b16 %v1446
        %v1616 = vunpack.c.l.b16 %v1447
        %v1617 = vunpack.c.l.b16 %v1448
        %v1618 = vunpack.c.l.b16 %v1449
        %v1619 = vunpack.c.l.b16 %v1450
        %v1620 = vunpack.c.l.b16 %v1451
        %v1621 = vunpack.c.l.b16 %v1452
        %v1622 = vunpack.c.l.b16 %v1453
        %v1623 = vunpack.c.l.b16 %v1454
        %v1624 = vunpack.c.l.b16 %v1455
        %v1625 = vunpack.c.l.b16 %v1456
        %v1626 = vunpack.c.l.b16 %v1457
        %v1627 = vunpack.c.l.b16 %v1458
        %v1628 = vunpack.c.l.b16 %v1459
        %v1629 = vunpack.c.l.b16 %v1460
        %v1630 = vunpack.c.l.b16 %v1461
        %v1631 = vunpack.c.l.b16 %v1462
        %v1632 = vunpack.c.l.b16 %v1463
        %v1633 = vunpack.c.l.b16 %v1464
        %v1634 = vunpack.c.l.b16 %v1465
        %v1635 = vunpack.c.l.b16 %v1466
        %v1636 = vunpack.c.l.b16 %v1467
        %v1637 = vunpack.c.l.b16 %v1468
        %v1638 = vunpack.c.l.b16 %v1469
        %v1639 = vunpack.c.l.b16 %v1470
        %v1640 = vunpack.c.l.b16 %v1471
        %v1641 = vunpack.c.l.b16 %v1472
        %v1642 = vunpack.c.l.b16 %v1473
        %v1643 = vunpack.c.l.b16 %v1474
        %v1644 = vunpack.c.l.b16 %v1475
        %v1645 = vunpack.c.l.b16 %v1476
        %v1646 = vunpack.c.l.b16 %v1477
        %v1647 = vunpack.c.l.b16 %v1478
        %v1648 = vunpack.c.l.b16 %v1479
        %v1649 = vunpack.c.l.b16 %v1480
        %v1650 = vpack.c.b16 %v1587, %v1586
        %v1651 = vpack.c.b16 %v1589, %v1588
        %v1652 = vpack.c.b16 %v1591, %v1590
        %v1653 = vpack.c.b16 %v1593, %v1592
        %v1654 = vpack.c.b16 %v1595, %v1594
        %v1655 = vpack.c.b16 %v1597, %v1596
        %v1656 = vpack.c.b16 %v1599, %v1598
        %v1657 = vpack.c.b16 %v1601, %v1600
        %v1658 = vpack.c.b16 %v1603, %v1602
        %v1659 = vpack.c.b16 %v1605, %v1604
        %v1660 = vpack.c.b16 %v1607, %v1606
        %v1661 = vpack.c.b16 %v1609, %v1608
        %v1662 = vpack.c.b16 %v1611, %v1610
        %v1663 = vpack.c.b16 %v1613, %v1612
        %v1664 = vpack.c.b16 %v1615, %v1614
        %v1665 = vpack.c.b16 %v1617, %v1616
        %v1666 = vpack.c.b16 %v1619, %v1618
        %v1667 = vpack.c.b16 %v1621, %v1620
        %v1668 = vpack.c.b16 %v1623, %v1622
        %v1669 = vpack.c.b16 %v1625, %v1624
        %v1670 = vpack.c.b16 %v1627, %v1626
        %v1671 = vpack.c.b16 %v1629, %v1628
        %v1672 = vpack.c.b16 %v1631, %v1630
        %v1673 = vpack.c.b16 %v1633, %v1632
        %v1674 = vpack.c.b16 %v1635, %v1634
        %v1675 = vpack.c.b16 %v1637, %v1636
        %v1676 = vpack.c.b16 %v1639, %v1638
        %v1677 = vpack.c.b16 %v1641, %v1640
        %v1678 = vpack.c.b16 %v1643, %v1642
        %v1679 = vpack.c.b16 %v1645, %v1644
        %v1680 = vpack.c.b16 %v1647, %v1646
        %v1681 = vpack.c.b16 %v1649, %v1648
        %1714 = vmatprep.subr.bf16.mxu0 0
        %1715 = vmatpush1.bf16.msra.mxu0 %v1650
        %1716 = vmatprep.subr.bf16.mxu0 0
        %1717 = vmatpush1.bf16.msra.mxu0 %v1651
        %1718 = vmatprep.subr.bf16.mxu0 0
        %1719 = vmatpush1.bf16.msra.mxu0 %v1652
        %1720 = vmatprep.subr.bf16.mxu0 0
        %1721 = vmatpush1.bf16.msra.mxu0 %v1653
        %1722 = vmatprep.subr.bf16.mxu0 0
        %1723 = vmatpush1.bf16.msra.mxu0 %v1654
        %1724 = vmatprep.subr.bf16.mxu0 0
        %1725 = vmatpush1.bf16.msra.mxu0 %v1655
        %1726 = vmatprep.subr.bf16.mxu0 0
        %1727 = vmatpush1.bf16.msra.mxu0 %v1656
        %1728 = vmatprep.subr.bf16.mxu0 0
        %1729 = vmatpush1.bf16.msra.mxu0 %v1657
        %1730 = vmatprep.subr.bf16.mxu0 0
        %1731 = vmatpush1.bf16.msra.mxu0 %v1658
        %1732 = vmatprep.subr.bf16.mxu0 0
        %1733 = vmatpush1.bf16.msra.mxu0 %v1659
        %1734 = vmatprep.subr.bf16.mxu0 0
        %1735 = vmatpush1.bf16.msra.mxu0 %v1660
        %1736 = vmatprep.subr.bf16.mxu0 0
        %1737 = vmatpush1.bf16.msra.mxu0 %v1661
        %1738 = vmatprep.subr.bf16.mxu0 0
        %1739 = vmatpush1.bf16.msra.mxu0 %v1662
        %1740 = vmatprep.subr.bf16.mxu0 0
        %1741 = vmatpush1.bf16.msra.mxu0 %v1663
        %1742 = vmatprep.subr.bf16.mxu0 0
        %1743 = vmatpush1.bf16.msra.mxu0 %v1664
        %1744 = vmatprep.subr.bf16.mxu0 0
        %1745 = vmatpush1.bf16.msra.mxu0 %v1665
        %1746 = vmatprep.mubr.bf16.mxu0 %v1507
        %1747 = vmatmul.mubr.bf16.gmra.mrb[0].mxu0 %v1504
        %v1748 = vpop.f32.mrb[0].mxu0
        %v1749 = vadd.f32 0.0, %v1748
        %v1750 = vpop.f32.mrb[0].mxu0
        %v1751 = vpop.f32.mrb[0].mxu0
        %v1752 = vadd.f32 0.0, %v1751
        %v1753 = vpop.f32.mrb[0].mxu0
        %1754 = vmatprep.mubr.bf16.mxu0 %v1506
        %1755 = vmatmul.mubr.bf16.gmra.mrb[0].mxu0 %v1503
        %v1756 = vpop.f32.mrb[0].mxu0
        %v1757 = vadd.f32 0.0, %v1756
        %v1758 = vpop.f32.mrb[0].mxu0
        %v1759 = vpop.f32.mrb[0].mxu0
        %v1760 = vpop.f32.mrb[0].mxu0
        %1761 = vdwg.mxu0
        %1762 = vmatprep.subr.bf16.mxu0 0
        %1763 = vmatpush1.bf16.msra.mxu0 %v1666
        %1764 = vmatprep.subr.bf16.mxu0 0
        %1765 = vmatpush1.bf16.msra.mxu0 %v1667
        %1766 = vmatprep.subr.bf16.mxu0 0
        %1767 = vmatpush1.bf16.msra.mxu0 %v1668
        %1768 = vmatprep.subr.bf16.mxu0 0
        %1769 = vmatpush1.bf16.msra.mxu0 %v1669
        %1770 = vmatprep.subr.bf16.mxu0 0
        %1771 = vmatpush1.bf16.msra.mxu0 %v1670
        %1772 = vmatprep.subr.bf16.mxu0 0
        %1773 = vmatpush1.bf16.msra.mxu0 %v1671
        %1774 = vmatprep.subr.bf16.mxu0 0
        %1775 = vmatpush1.bf16.msra.mxu0 %v1672
        %1776 = vmatprep.subr.bf16.mxu0 0
        %1777 = vmatpush1.bf16.msra.mxu0 %v1673
        %1778 = vmatprep.subr.bf16.mxu0 0
        %1779 = vmatpush1.bf16.msra.mxu0 %v1674
        %1780 = vmatprep.subr.bf16.mxu0 0
        %1781 = vmatpush1.bf16.msra.mxu0 %v1675
        %1782 = vmatprep.subr.bf16.mxu0 0
        %1783 = vmatpush1.bf16.msra.mxu0 %v1676
        %1784 = vmatprep.subr.bf16.mxu0 0
        %1785 = vmatpush1.bf16.msra.mxu0 %v1677
        %1786 = vmatprep.subr.bf16.mxu0 0
        %1787 = vmatpush1.bf16.msra.mxu0 %v1678
        %1788 = vmatprep.subr.bf16.mxu0 0
        %1789 = vmatpush1.bf16.msra.mxu0 %v1679
        %1790 = vmatprep.subr.bf16.mxu0 0
        %1791 = vmatpush1.bf16.msra.mxu0 %v1680
        %1792 = vmatprep.subr.bf16.mxu0 0
        %1793 = vmatpush1.bf16.msra.mxu0 %v1681
        %1794 = vmatprep.mubr.bf16.mxu0 %v1513
        %1795 = vmatmul.mubr.bf16.gmra.mrb[0].mxu0 %v1510
        %v1796 = vpop.f32.mrb[0].mxu0
        %v1797 = vadd.f32 %v1749, %v1796
        %v1798 = vpop.f32.mrb[0].mxu0
        %v1799 = vpop.f32.mrb[0].mxu0
        %v1800 = vadd.f32 %v1752, %v1799
        %v1801 = vpop.f32.mrb[0].mxu0
        %1802 = vmatprep.mubr.bf16.mxu0 %v1512
        %1803 = vmatmul.mubr.bf16.gmra.mrb[0].mxu0 %v1509
        %v1804 = vpop.f32.mrb[0].mxu0
        %v1805 = vadd.f32 %v1757, %v1804
        %v1806 = vpop.f32.mrb[0].mxu0
        %v1807 = vpop.f32.mrb[0].mxu0
        %v1808 = vpop.f32.mrb[0].mxu0
        %1809 = vdwg.mxu0
        %v1810 = vadd.f32 %v1409, %v1797
        %v1811 = vadd.f32 %v1410, %v1800
        %v1812 = vadd.f32 %v1411, %v1805
        %v1813 = vld [vmem:[%s195 + $0x30] sm:$0xff]
        %v1814 = vld [vmem:[%s195 + $0x38] sm:$0xff]
        %s1815 = scalar_lea.vmem %s1, 1024
        %v1816 = vld [vmem:[%s1815] sm:$0xf]
        %v1817 = vld [vmem:[%s1815 + $0x4] sm:$0xf]
        %v1818 = vld [vmem:[%s1815 + $0x8] sm:$0xf]
        %v1819 = vld [vmem:[%s1815 + $0xc] sm:$0xf]
        %v1820 = vld [vmem:[%s1815 + $0x10] sm:$0xf]
        %v1821 = vld [vmem:[%s1815 + $0x14] sm:$0xf]
        %v1822 = vld [vmem:[%s1815 + $0x18] sm:$0xf]
        %v1823 = vld [vmem:[%s1815 + $0x1c] sm:$0xf]
        %v1824 = vld [vmem:[%s1815 + $0x20] sm:$0xf]
        %v1825 = vld [vmem:[%s1815 + $0x24] sm:$0xf]
        %v1826 = vld [vmem:[%s1815 + $0x28] sm:$0xf]
        %v1827 = vld [vmem:[%s1815 + $0x2c] sm:$0xf]
        %v1828 = vld [vmem:[%s1815 + $0x30] sm:$0xf]
        %v1829 = vld [vmem:[%s1815 + $0x34] sm:$0xf]
        %v1830 = vld [vmem:[%s1815 + $0x38] sm:$0xf]
        %v1831 = vld [vmem:[%s1815 + $0x3c] sm:$0xf]
        %v1832 = vld [vmem:[%s1815 + $0x40] sm:$0xf]
        %v1833 = vld [vmem:[%s1815 + $0x44] sm:$0xf]
        %v1834 = vld [vmem:[%s1815 + $0x48] sm:$0xf]
        %v1835 = vld [vmem:[%s1815 + $0x4c] sm:$0xf]
        %v1836 = vld [vmem:[%s1815 + $0x50] sm:$0xf]
        %v1837 = vld [vmem:[%s1815 + $0x54] sm:$0xf]
        %v1838 = vld [vmem:[%s1815 + $0x58] sm:$0xf]
        %v1839 = vld [vmem:[%s1815 + $0x5c] sm:$0xf]
        %v1840 = vld [vmem:[%s1815 + $0x60] sm:$0xf]
        %v1841 = vld [vmem:[%s1815 + $0x64] sm:$0xf]
        %v1842 = vld [vmem:[%s1815 + $0x68] sm:$0xf]
        %v1843 = vld [vmem:[%s1815 + $0x6c] sm:$0xf]
        %v1844 = vld [vmem:[%s1815 + $0x70] sm:$0xf]
        %v1845 = vld [vmem:[%s1815 + $0x74] sm:$0xf]
        %v1846 = vld [vmem:[%s1815 + $0x78] sm:$0xf]
        %v1847 = vld [vmem:[%s1815 + $0x7c] sm:$0xf]
        %v1848 = vld [vmem:[%s1815 + $0x80] sm:$0xf]
        %v1849 = vld [vmem:[%s1815 + $0x84] sm:$0xf]
        %v1850 = vld [vmem:[%s1815 + $0x88] sm:$0xf]
        %v1851 = vld [vmem:[%s1815 + $0x8c] sm:$0xf]
        %v1852 = vld [vmem:[%s1815 + $0x90] sm:$0xf]
        %v1853 = vld [vmem:[%s1815 + $0x94] sm:$0xf]
        %v1854 = vld [vmem:[%s1815 + $0x98] sm:$0xf]
        %v1855 = vld [vmem:[%s1815 + $0x9c] sm:$0xf]
        %v1856 = vld [vmem:[%s1815 + $0xa0] sm:$0xf]
        %v1857 = vld [vmem:[%s1815 + $0xa4] sm:$0xf]
        %v1858 = vld [vmem:[%s1815 + $0xa8] sm:$0xf]
        %v1859 = vld [vmem:[%s1815 + $0xac] sm:$0xf]
        %v1860 = vld [vmem:[%s1815 + $0xb0] sm:$0xf]
        %v1861 = vld [vmem:[%s1815 + $0xb4] sm:$0xf]
        %v1862 = vld [vmem:[%s1815 + $0xb8] sm:$0xf]
        %v1863 = vld [vmem:[%s1815 + $0xbc] sm:$0xf]
        %v1864 = vld [vmem:[%s1815 + $0xc0] sm:$0xf]
        %v1865 = vld [vmem:[%s1815 + $0xc4] sm:$0xf]
        %v1866 = vld [vmem:[%s1815 + $0xc8] sm:$0xf]
        %v1867 = vld [vmem:[%s1815 + $0xcc] sm:$0xf]
        %v1868 = vld [vmem:[%s1815 + $0xd0] sm:$0xf]
        %v1869 = vld [vmem:[%s1815 + $0xd4] sm:$0xf]
        %v1870 = vld [vmem:[%s1815 + $0xd8] sm:$0xf]
        %v1871 = vld [vmem:[%s1815 + $0xdc] sm:$0xf]
        %v1872 = vld [vmem:[%s1815 + $0xe0] sm:$0xf]
        %v1873 = vld [vmem:[%s1815 + $0xe4] sm:$0xf]
        %v1874 = vld [vmem:[%s1815 + $0xe8] sm:$0xf]
        %v1875 = vld [vmem:[%s1815 + $0xec] sm:$0xf]
        %v1876 = vld [vmem:[%s1815 + $0xf0] sm:$0xf]
        %v1877 = vld [vmem:[%s1815 + $0xf4] sm:$0xf]
        %v1878 = vld [vmem:[%s1815 + $0xf8] sm:$0xf]
        %v1879 = vld [vmem:[%s1815 + $0xfc] sm:$0xf]
        %v1882 = vunpack.c.l.b16 %v1813
        %v1883 = vunpack.c.h.b16 %v1813
        %v1884 = vunpack.c.l.b16 %v1814
        %v1885 = vunpack.c.h.b16 %v1814
        %v1886 = vpack.c.b16 %v1882, %v350
        %v1887 = vpack.c.b16 %v1883, %v351
        %v1888 = vpack.c.b16 %v1884, %v352
        %v1889 = vpack.c.b16 %v1885, %v353
        %vm1890 = vsmask.f32 4352
        %v1892 = vshrl.u32 %v1493, 16
        %v1894 = vrot.slane %v1892, 3
        %v1895 = vshll.u32 %v1493, 16
        %v1897 = vrot.slane %v1895, 4
        %v1898 = vor.u32 %v1894, %v1897
        %v1900 = vshrl.u32 %v1886, 16
        %v1902 = vrot.slane %v1900, 3
        %v1903 = vshll.u32 %v1886, 16
        %v1905 = vrot.slane %v1903, 4
        %v1906 = vor.u32 %v1902, %v1905
        %v1907 = vsel %vm1890, %v1898, %v1906
        %v1909 = vshrl.u32 %v1494, 16
        %v1911 = vrot.slane %v1909, 3
        %v1912 = vshll.u32 %v1494, 16
        %v1914 = vrot.slane %v1912, 4
        %v1915 = vor.u32 %v1911, %v1914
        %v1917 = vshrl.u32 %v1887, 16
        %v1919 = vrot.slane %v1917, 3
        %v1920 = vshll.u32 %v1887, 16
        %v1922 = vrot.slane %v1920, 4
        %v1923 = vor.u32 %v1919, %v1922
        %v1924 = vsel %vm1890, %v1915, %v1923
        %v1926 = vshrl.u32 %v1495, 16
        %v1928 = vrot.slane %v1926, 3
        %v1929 = vshll.u32 %v1495, 16
        %v1931 = vrot.slane %v1929, 4
        %v1932 = vor.u32 %v1928, %v1931
        %v1934 = vshrl.u32 %v1888, 16
        %v1936 = vrot.slane %v1934, 3
        %v1937 = vshll.u32 %v1888, 16
        %v1939 = vrot.slane %v1937, 4
        %v1940 = vor.u32 %v1936, %v1939
        %v1941 = vsel %vm1890, %v1932, %v1940
        %v1943 = vshrl.u32 %v1496, 16
        %v1945 = vrot.slane %v1943, 3
        %v1946 = vshll.u32 %v1496, 16
        %v1948 = vrot.slane %v1946, 4
        %v1949 = vor.u32 %v1945, %v1948
        %v1951 = vshrl.u32 %v1889, 16
        %v1953 = vrot.slane %v1951, 3
        %v1954 = vshll.u32 %v1889, 16
        %v1956 = vrot.slane %v1954, 4
        %v1957 = vor.u32 %v1953, %v1956
        %v1958 = vsel %vm1890, %v1949, %v1957
        %v2031 = vunpack.c.l.b16 %v1816
        %v2032 = vunpack.c.l.b16 %v1817
        %v2033 = vunpack.c.l.b16 %v1818
        %v2034 = vunpack.c.l.b16 %v1819
        %v2035 = vunpack.c.l.b16 %v1820
        %v2036 = vunpack.c.l.b16 %v1821
        %v2037 = vunpack.c.l.b16 %v1822
        %v2038 = vunpack.c.l.b16 %v1823
        %v2039 = vunpack.c.l.b16 %v1824
        %v2040 = vunpack.c.l.b16 %v1825
        %v2041 = vunpack.c.l.b16 %v1826
        %v2042 = vunpack.c.l.b16 %v1827
        %v2043 = vunpack.c.l.b16 %v1828
        %v2044 = vunpack.c.l.b16 %v1829
        %v2045 = vunpack.c.l.b16 %v1830
        %v2046 = vunpack.c.l.b16 %v1831
        %v2047 = vunpack.c.l.b16 %v1832
        %v2048 = vunpack.c.l.b16 %v1833
        %v2049 = vunpack.c.l.b16 %v1834
        %v2050 = vunpack.c.l.b16 %v1835
        %v2051 = vunpack.c.l.b16 %v1836
        %v2052 = vunpack.c.l.b16 %v1837
        %v2053 = vunpack.c.l.b16 %v1838
        %v2054 = vunpack.c.l.b16 %v1839
        %v2055 = vunpack.c.l.b16 %v1840
        %v2056 = vunpack.c.l.b16 %v1841
        %v2057 = vunpack.c.l.b16 %v1842
        %v2058 = vunpack.c.l.b16 %v1843
        %v2059 = vunpack.c.l.b16 %v1844
        %v2060 = vunpack.c.l.b16 %v1845
        %v2061 = vunpack.c.l.b16 %v1846
        %v2062 = vunpack.c.l.b16 %v1847
        %v2063 = vunpack.c.l.b16 %v1848
        %v2064 = vunpack.c.l.b16 %v1849
        %v2065 = vunpack.c.l.b16 %v1850
        %v2066 = vunpack.c.l.b16 %v1851
        %v2067 = vunpack.c.l.b16 %v1852
        %v2068 = vunpack.c.l.b16 %v1853
        %v2069 = vunpack.c.l.b16 %v1854
        %v2070 = vunpack.c.l.b16 %v1855
        %v2071 = vunpack.c.l.b16 %v1856
        %v2072 = vunpack.c.l.b16 %v1857
        %v2073 = vunpack.c.l.b16 %v1858
        %v2074 = vunpack.c.l.b16 %v1859
        %v2075 = vunpack.c.l.b16 %v1860
        %v2076 = vunpack.c.l.b16 %v1861
        %v2077 = vunpack.c.l.b16 %v1862
        %v2078 = vunpack.c.l.b16 %v1863
        %v2079 = vunpack.c.l.b16 %v1864
        %v2080 = vunpack.c.l.b16 %v1865
        %v2081 = vunpack.c.l.b16 %v1866
        %v2082 = vunpack.c.l.b16 %v1867
        %v2083 = vunpack.c.l.b16 %v1868
        %v2084 = vunpack.c.l.b16 %v1869
        %v2085 = vunpack.c.l.b16 %v1870
        %v2086 = vunpack.c.l.b16 %v1871
        %v2087 = vunpack.c.l.b16 %v1872
        %v2088 = vunpack.c.l.b16 %v1873
        %v2089 = vunpack.c.l.b16 %v1874
        %v2090 = vunpack.c.l.b16 %v1875
        %v2091 = vunpack.c.l.b16 %v1876
        %v2092 = vunpack.c.l.b16 %v1877
        %v2093 = vunpack.c.l.b16 %v1878
        %v2094 = vunpack.c.l.b16 %v1879
        %v2095 = vpack.c.b16 %v2032, %v2031
        %v2096 = vpack.c.b16 %v2034, %v2033
        %v2097 = vpack.c.b16 %v2036, %v2035
        %v2098 = vpack.c.b16 %v2038, %v2037
        %v2099 = vpack.c.b16 %v2040, %v2039
        %v2100 = vpack.c.b16 %v2042, %v2041
        %v2101 = vpack.c.b16 %v2044, %v2043
        %v2102 = vpack.c.b16 %v2046, %v2045
        %v2103 = vpack.c.b16 %v2048, %v2047
        %v2104 = vpack.c.b16 %v2050, %v2049
        %v2105 = vpack.c.b16 %v2052, %v2051
        %v2106 = vpack.c.b16 %v2054, %v2053
        %v2107 = vpack.c.b16 %v2056, %v2055
        %v2108 = vpack.c.b16 %v2058, %v2057
        %v2109 = vpack.c.b16 %v2060, %v2059
        %v2110 = vpack.c.b16 %v2062, %v2061
        %v2111 = vpack.c.b16 %v2064, %v2063
        %v2112 = vpack.c.b16 %v2066, %v2065
        %v2113 = vpack.c.b16 %v2068, %v2067
        %v2114 = vpack.c.b16 %v2070, %v2069
        %v2115 = vpack.c.b16 %v2072, %v2071
        %v2116 = vpack.c.b16 %v2074, %v2073
        %v2117 = vpack.c.b16 %v2076, %v2075
        %v2118 = vpack.c.b16 %v2078, %v2077
        %v2119 = vpack.c.b16 %v2080, %v2079
        %v2120 = vpack.c.b16 %v2082, %v2081
        %v2121 = vpack.c.b16 %v2084, %v2083
        %v2122 = vpack.c.b16 %v2086, %v2085
        %v2123 = vpack.c.b16 %v2088, %v2087
        %v2124 = vpack.c.b16 %v2090, %v2089
        %v2125 = vpack.c.b16 %v2092, %v2091
        %v2126 = vpack.c.b16 %v2094, %v2093
        %2159 = vmatprep.subr.bf16.mxu0 0
        %2160 = vmatpush1.bf16.msra.mxu0 %v2095
        %2161 = vmatprep.subr.bf16.mxu0 0
        %2162 = vmatpush1.bf16.msra.mxu0 %v2096
        %2163 = vmatprep.subr.bf16.mxu0 0
        %2164 = vmatpush1.bf16.msra.mxu0 %v2097
        %2165 = vmatprep.subr.bf16.mxu0 0
        %2166 = vmatpush1.bf16.msra.mxu0 %v2098
        %2167 = vmatprep.subr.bf16.mxu0 0
        %2168 = vmatpush1.bf16.msra.mxu0 %v2099
        %2169 = vmatprep.subr.bf16.mxu0 0
        %2170 = vmatpush1.bf16.msra.mxu0 %v2100
        %2171 = vmatprep.subr.bf16.mxu0 0
        %2172 = vmatpush1.bf16.msra.mxu0 %v2101
        %2173 = vmatprep.subr.bf16.mxu0 0
        %2174 = vmatpush1.bf16.msra.mxu0 %v2102
        %2175 = vmatprep.subr.bf16.mxu0 0
        %2176 = vmatpush1.bf16.msra.mxu0 %v2103
        %2177 = vmatprep.subr.bf16.mxu0 0
        %2178 = vmatpush1.bf16.msra.mxu0 %v2104
        %2179 = vmatprep.subr.bf16.mxu0 0
        %2180 = vmatpush1.bf16.msra.mxu0 %v2105
        %2181 = vmatprep.subr.bf16.mxu0 0
        %2182 = vmatpush1.bf16.msra.mxu0 %v2106
        %2183 = vmatprep.subr.bf16.mxu0 0
        %2184 = vmatpush1.bf16.msra.mxu0 %v2107
        %2185 = vmatprep.subr.bf16.mxu0 0
        %2186 = vmatpush1.bf16.msra.mxu0 %v2108
        %2187 = vmatprep.subr.bf16.mxu0 0
        %2188 = vmatpush1.bf16.msra.mxu0 %v2109
        %2189 = vmatprep.subr.bf16.mxu0 0
        %2190 = vmatpush1.bf16.msra.mxu0 %v2110
        %2191 = vmatprep.mubr.bf16.mxu0 %v1924
        %2192 = vmatmul.mubr.bf16.gmra.mrb[0].mxu0 %v1907
        %v2193 = vpop.f32.mrb[0].mxu0
        %v2194 = vadd.f32 0.0, %v2193
        %v2195 = vpop.f32.mrb[0].mxu0
        %v2196 = vpop.f32.mrb[0].mxu0
        %v2197 = vadd.f32 0.0, %v2196
        %v2198 = vpop.f32.mrb[0].mxu0
        %2199 = vmatprep.mubr.bf16.mxu0 %v1923
        %2200 = vmatmul.mubr.bf16.gmra.mrb[0].mxu0 %v1906
        %v2201 = vpop.f32.mrb[0].mxu0
        %v2202 = vadd.f32 0.0, %v2201
        %v2203 = vpop.f32.mrb[0].mxu0
        %v2204 = vpop.f32.mrb[0].mxu0
        %v2205 = vpop.f32.mrb[0].mxu0
        %2206 = vdwg.mxu0
        %2207 = vmatprep.subr.bf16.mxu0 0
        %2208 = vmatpush1.bf16.msra.mxu0 %v2111
        %2209 = vmatprep.subr.bf16.mxu0 0
        %2210 = vmatpush1.bf16.msra.mxu0 %v2112
        %2211 = vmatprep.subr.bf16.mxu0 0
        %2212 = vmatpush1.bf16.msra.mxu0 %v2113
        %2213 = vmatprep.subr.bf16.mxu0 0
        %2214 = vmatpush1.bf16.msra.mxu0 %v2114
        %2215 = vmatprep.subr.bf16.mxu0 0
        %2216 = vmatpush1.bf16.msra.mxu0 %v2115
        %2217 = vmatprep.subr.bf16.mxu0 0
        %2218 = vmatpush1.bf16.msra.mxu0 %v2116
        %2219 = vmatprep.subr.bf16.mxu0 0
        %2220 = vmatpush1.bf16.msra.mxu0 %v2117
        %2221 = vmatprep.subr.bf16.mxu0 0
        %2222 = vmatpush1.bf16.msra.mxu0 %v2118
        %2223 = vmatprep.subr.bf16.mxu0 0
        %2224 = vmatpush1.bf16.msra.mxu0 %v2119
        %2225 = vmatprep.subr.bf16.mxu0 0
        %2226 = vmatpush1.bf16.msra.mxu0 %v2120
        %2227 = vmatprep.subr.bf16.mxu0 0
        %2228 = vmatpush1.bf16.msra.mxu0 %v2121
        %2229 = vmatprep.subr.bf16.mxu0 0
        %2230 = vmatpush1.bf16.msra.mxu0 %v2122
        %2231 = vmatprep.subr.bf16.mxu0 0
        %2232 = vmatpush1.bf16.msra.mxu0 %v2123
        %2233 = vmatprep.subr.bf16.mxu0 0
        %2234 = vmatpush1.bf16.msra.mxu0 %v2124
        %2235 = vmatprep.subr.bf16.mxu0 0
        %2236 = vmatpush1.bf16.msra.mxu0 %v2125
        %2237 = vmatprep.subr.bf16.mxu0 0
        %2238 = vmatpush1.bf16.msra.mxu0 %v2126
        %2239 = vmatprep.mubr.bf16.mxu0 %v1958
        %2240 = vmatmul.mubr.bf16.gmra.mrb[0].mxu0 %v1941
        %v2241 = vpop.f32.mrb[0].mxu0
        %v2242 = vadd.f32 %v2194, %v2241
        %v2243 = vpop.f32.mrb[0].mxu0
        %v2244 = vpop.f32.mrb[0].mxu0
        %v2245 = vadd.f32 %v2197, %v2244
        %v2246 = vpop.f32.mrb[0].mxu0
        %2247 = vmatprep.mubr.bf16.mxu0 %v1957
        %2248 = vmatmul.mubr.bf16.gmra.mrb[0].mxu0 %v1940
        %v2249 = vpop.f32.mrb[0].mxu0
        %v2250 = vadd.f32 %v2202, %v2249
        %v2251 = vpop.f32.mrb[0].mxu0
        %v2252 = vpop.f32.mrb[0].mxu0
        %v2253 = vpop.f32.mrb[0].mxu0
        %2254 = vdwg.mxu0
        %v2255 = vadd.f32 %v1810, %v2242
        %v2256 = vadd.f32 %v1811, %v2245
        %v2257 = vadd.f32 %v1812, %v2250
        %s2258 = scalar_lea.vmem %s1, 1280
        %v2259 = vld [vmem:[%s2258] sm:$0xf]
        %v2260 = vld [vmem:[%s2258 + $0x4] sm:$0xf]
        %v2261 = vld [vmem:[%s2258 + $0x8] sm:$0xf]
        %v2262 = vld [vmem:[%s2258 + $0xc] sm:$0xf]
        %v2263 = vld [vmem:[%s2258 + $0x10] sm:$0xf]
        %v2264 = vld [vmem:[%s2258 + $0x14] sm:$0xf]
        %v2265 = vld [vmem:[%s2258 + $0x18] sm:$0xf]
        %v2266 = vld [vmem:[%s2258 + $0x1c] sm:$0xf]
        %v2267 = vld [vmem:[%s2258 + $0x20] sm:$0xf]
        %v2268 = vld [vmem:[%s2258 + $0x24] sm:$0xf]
        %v2269 = vld [vmem:[%s2258 + $0x28] sm:$0xf]
        %v2270 = vld [vmem:[%s2258 + $0x2c] sm:$0xf]
        %v2271 = vld [vmem:[%s2258 + $0x30] sm:$0xf]
        %v2272 = vld [vmem:[%s2258 + $0x34] sm:$0xf]
        %v2273 = vld [vmem:[%s2258 + $0x38] sm:$0xf]
        %v2274 = vld [vmem:[%s2258 + $0x3c] sm:$0xf]
        %v2275 = vld [vmem:[%s2258 + $0x40] sm:$0xf]
        %v2276 = vld [vmem:[%s2258 + $0x44] sm:$0xf]
        %v2277 = vld [vmem:[%s2258 + $0x48] sm:$0xf]
        %v2278 = vld [vmem:[%s2258 + $0x4c] sm:$0xf]
        %v2279 = vld [vmem:[%s2258 + $0x50] sm:$0xf]
        %v2280 = vld [vmem:[%s2258 + $0x54] sm:$0xf]
        %v2281 = vld [vmem:[%s2258 + $0x58] sm:$0xf]
        %v2282 = vld [vmem:[%s2258 + $0x5c] sm:$0xf]
        %v2283 = vld [vmem:[%s2258 + $0x60] sm:$0xf]
        %v2284 = vld [vmem:[%s2258 + $0x64] sm:$0xf]
        %v2285 = vld [vmem:[%s2258 + $0x68] sm:$0xf]
        %v2286 = vld [vmem:[%s2258 + $0x6c] sm:$0xf]
        %v2287 = vld [vmem:[%s2258 + $0x70] sm:$0xf]
        %v2288 = vld [vmem:[%s2258 + $0x74] sm:$0xf]
        %v2289 = vld [vmem:[%s2258 + $0x78] sm:$0xf]
        %v2290 = vld [vmem:[%s2258 + $0x7c] sm:$0xf]
        %v2291 = vld [vmem:[%s2258 + $0x80] sm:$0xf]
        %v2292 = vld [vmem:[%s2258 + $0x84] sm:$0xf]
        %v2293 = vld [vmem:[%s2258 + $0x88] sm:$0xf]
        %v2294 = vld [vmem:[%s2258 + $0x8c] sm:$0xf]
        %v2295 = vld [vmem:[%s2258 + $0x90] sm:$0xf]
        %v2296 = vld [vmem:[%s2258 + $0x94] sm:$0xf]
        %v2297 = vld [vmem:[%s2258 + $0x98] sm:$0xf]
        %v2298 = vld [vmem:[%s2258 + $0x9c] sm:$0xf]
        %v2299 = vld [vmem:[%s2258 + $0xa0] sm:$0xf]
        %v2300 = vld [vmem:[%s2258 + $0xa4] sm:$0xf]
        %v2301 = vld [vmem:[%s2258 + $0xa8] sm:$0xf]
        %v2302 = vld [vmem:[%s2258 + $0xac] sm:$0xf]
        %v2303 = vld [vmem:[%s2258 + $0xb0] sm:$0xf]
        %v2304 = vld [vmem:[%s2258 + $0xb4] sm:$0xf]
        %v2305 = vld [vmem:[%s2258 + $0xb8] sm:$0xf]
        %v2306 = vld [vmem:[%s2258 + $0xbc] sm:$0xf]
        %v2307 = vld [vmem:[%s2258 + $0xc0] sm:$0xf]
        %v2308 = vld [vmem:[%s2258 + $0xc4] sm:$0xf]
        %v2309 = vld [vmem:[%s2258 + $0xc8] sm:$0xf]
        %v2310 = vld [vmem:[%s2258 + $0xcc] sm:$0xf]
        %v2311 = vld [vmem:[%s2258 + $0xd0] sm:$0xf]
        %v2312 = vld [vmem:[%s2258 + $0xd4] sm:$0xf]
        %v2313 = vld [vmem:[%s2258 + $0xd8] sm:$0xf]
        %v2314 = vld [vmem:[%s2258 + $0xdc] sm:$0xf]
        %v2315 = vld [vmem:[%s2258 + $0xe0] sm:$0xf]
        %v2316 = vld [vmem:[%s2258 + $0xe4] sm:$0xf]
        %v2317 = vld [vmem:[%s2258 + $0xe8] sm:$0xf]
        %v2318 = vld [vmem:[%s2258 + $0xec] sm:$0xf]
        %v2319 = vld [vmem:[%s2258 + $0xf0] sm:$0xf]
        %v2320 = vld [vmem:[%s2258 + $0xf4] sm:$0xf]
        %v2321 = vld [vmem:[%s2258 + $0xf8] sm:$0xf]
        %v2322 = vld [vmem:[%s2258 + $0xfc] sm:$0xf]
        %v2323 = vpack.c.b16 %v350, %v346
        %v2324 = vpack.c.b16 %v351, %v347
        %v2325 = vpack.c.b16 %v352, %v348
        %v2326 = vpack.c.b16 %v353, %v349
        %v2327 = vpack.c.b16 %v1882, %v1882
        %v2328 = vpack.c.b16 %v1883, %v1883
        %v2329 = vpack.c.b16 %v1884, %v1884
        %v2330 = vpack.c.b16 %v1885, %v1885
        %v2403 = vunpack.c.l.b16 %v2259
        %v2404 = vunpack.c.l.b16 %v2260
        %v2405 = vunpack.c.l.b16 %v2261
        %v2406 = vunpack.c.l.b16 %v2262
        %v2407 = vunpack.c.l.b16 %v2263
        %v2408 = vunpack.c.l.b16 %v2264
        %v2409 = vunpack.c.l.b16 %v2265
        %v2410 = vunpack.c.l.b16 %v2266
        %v2411 = vunpack.c.l.b16 %v2267
        %v2412 = vunpack.c.l.b16 %v2268
        %v2413 = vunpack.c.l.b16 %v2269
        %v2414 = vunpack.c.l.b16 %v2270
        %v2415 = vunpack.c.l.b16 %v2271
        %v2416 = vunpack.c.l.b16 %v2272
        %v2417 = vunpack.c.l.b16 %v2273
        %v2418 = vunpack.c.l.b16 %v2274
        %v2419 = vunpack.c.l.b16 %v2275
        %v2420 = vunpack.c.l.b16 %v2276
        %v2421 = vunpack.c.l.b16 %v2277
        %v2422 = vunpack.c.l.b16 %v2278
        %v2423 = vunpack.c.l.b16 %v2279
        %v2424 = vunpack.c.l.b16 %v2280
        %v2425 = vunpack.c.l.b16 %v2281
        %v2426 = vunpack.c.l.b16 %v2282
        %v2427 = vunpack.c.l.b16 %v2283
        %v2428 = vunpack.c.l.b16 %v2284
        %v2429 = vunpack.c.l.b16 %v2285
        %v2430 = vunpack.c.l.b16 %v2286
        %v2431 = vunpack.c.l.b16 %v2287
        %v2432 = vunpack.c.l.b16 %v2288
        %v2433 = vunpack.c.l.b16 %v2289
        %v2434 = vunpack.c.l.b16 %v2290
        %v2435 = vunpack.c.l.b16 %v2291
        %v2436 = vunpack.c.l.b16 %v2292
        %v2437 = vunpack.c.l.b16 %v2293
        %v2438 = vunpack.c.l.b16 %v2294
        %v2439 = vunpack.c.l.b16 %v2295
        %v2440 = vunpack.c.l.b16 %v2296
        %v2441 = vunpack.c.l.b16 %v2297
        %v2442 = vunpack.c.l.b16 %v2298
        %v2443 = vunpack.c.l.b16 %v2299
        %v2444 = vunpack.c.l.b16 %v2300
        %v2445 = vunpack.c.l.b16 %v2301
        %v2446 = vunpack.c.l.b16 %v2302
        %v2447 = vunpack.c.l.b16 %v2303
        %v2448 = vunpack.c.l.b16 %v2304
        %v2449 = vunpack.c.l.b16 %v2305
        %v2450 = vunpack.c.l.b16 %v2306
        %v2451 = vunpack.c.l.b16 %v2307
        %v2452 = vunpack.c.l.b16 %v2308
        %v2453 = vunpack.c.l.b16 %v2309
        %v2454 = vunpack.c.l.b16 %v2310
        %v2455 = vunpack.c.l.b16 %v2311
        %v2456 = vunpack.c.l.b16 %v2312
        %v2457 = vunpack.c.l.b16 %v2313
        %v2458 = vunpack.c.l.b16 %v2314
        %v2459 = vunpack.c.l.b16 %v2315
        %v2460 = vunpack.c.l.b16 %v2316
        %v2461 = vunpack.c.l.b16 %v2317
        %v2462 = vunpack.c.l.b16 %v2318
        %v2463 = vunpack.c.l.b16 %v2319
        %v2464 = vunpack.c.l.b16 %v2320
        %v2465 = vunpack.c.l.b16 %v2321
        %v2466 = vunpack.c.l.b16 %v2322
        %v2467 = vpack.c.b16 %v2404, %v2403
        %v2468 = vpack.c.b16 %v2406, %v2405
        %v2469 = vpack.c.b16 %v2408, %v2407
        %v2470 = vpack.c.b16 %v2410, %v2409
        %v2471 = vpack.c.b16 %v2412, %v2411
        %v2472 = vpack.c.b16 %v2414, %v2413
        %v2473 = vpack.c.b16 %v2416, %v2415
        %v2474 = vpack.c.b16 %v2418, %v2417
        %v2475 = vpack.c.b16 %v2420, %v2419
        %v2476 = vpack.c.b16 %v2422, %v2421
        %v2477 = vpack.c.b16 %v2424, %v2423
        %v2478 = vpack.c.b16 %v2426, %v2425
        %v2479 = vpack.c.b16 %v2428, %v2427
        %v2480 = vpack.c.b16 %v2430, %v2429
        %v2481 = vpack.c.b16 %v2432, %v2431
        %v2482 = vpack.c.b16 %v2434, %v2433
        %v2483 = vpack.c.b16 %v2436, %v2435
        %v2484 = vpack.c.b16 %v2438, %v2437
        %v2485 = vpack.c.b16 %v2440, %v2439
        %v2486 = vpack.c.b16 %v2442, %v2441
        %v2487 = vpack.c.b16 %v2444, %v2443
        %v2488 = vpack.c.b16 %v2446, %v2445
        %v2489 = vpack.c.b16 %v2448, %v2447
        %v2490 = vpack.c.b16 %v2450, %v2449
        %v2491 = vpack.c.b16 %v2452, %v2451
        %v2492 = vpack.c.b16 %v2454, %v2453
        %v2493 = vpack.c.b16 %v2456, %v2455
        %v2494 = vpack.c.b16 %v2458, %v2457
        %v2495 = vpack.c.b16 %v2460, %v2459
        %v2496 = vpack.c.b16 %v2462, %v2461
        %v2497 = vpack.c.b16 %v2464, %v2463
        %v2498 = vpack.c.b16 %v2466, %v2465
        %2531 = vmatprep.subr.bf16.mxu0 0
        %2532 = vmatpush1.bf16.msra.mxu0 %v2467
        %2533 = vmatprep.subr.bf16.mxu0 0
        %2534 = vmatpush1.bf16.msra.mxu0 %v2468
        %2535 = vmatprep.subr.bf16.mxu0 0
        %2536 = vmatpush1.bf16.msra.mxu0 %v2469
        %2537 = vmatprep.subr.bf16.mxu0 0
        %2538 = vmatpush1.bf16.msra.mxu0 %v2470
        %2539 = vmatprep.subr.bf16.mxu0 0
        %2540 = vmatpush1.bf16.msra.mxu0 %v2471
        %2541 = vmatprep.subr.bf16.mxu0 0
        %2542 = vmatpush1.bf16.msra.mxu0 %v2472
        %2543 = vmatprep.subr.bf16.mxu0 0
        %2544 = vmatpush1.bf16.msra.mxu0 %v2473
        %2545 = vmatprep.subr.bf16.mxu0 0
        %2546 = vmatpush1.bf16.msra.mxu0 %v2474
        %2547 = vmatprep.subr.bf16.mxu0 0
        %2548 = vmatpush1.bf16.msra.mxu0 %v2475
        %2549 = vmatprep.subr.bf16.mxu0 0
        %2550 = vmatpush1.bf16.msra.mxu0 %v2476
        %2551 = vmatprep.subr.bf16.mxu0 0
        %2552 = vmatpush1.bf16.msra.mxu0 %v2477
        %2553 = vmatprep.subr.bf16.mxu0 0
        %2554 = vmatpush1.bf16.msra.mxu0 %v2478
        %2555 = vmatprep.subr.bf16.mxu0 0
        %2556 = vmatpush1.bf16.msra.mxu0 %v2479
        %2557 = vmatprep.subr.bf16.mxu0 0
        %2558 = vmatpush1.bf16.msra.mxu0 %v2480
        %2559 = vmatprep.subr.bf16.mxu0 0
        %2560 = vmatpush1.bf16.msra.mxu0 %v2481
        %2561 = vmatprep.subr.bf16.mxu0 0
        %2562 = vmatpush1.bf16.msra.mxu0 %v2482
        %2563 = vmatprep.mubr.bf16.mxu0 %v2324
        %2564 = vmatmul.mubr.bf16.gmra.mrb[0].mxu0 %v2323
        %v2565 = vpop.f32.mrb[0].mxu0
        %v2566 = vadd.f32 0.0, %v2565
        %v2567 = vpop.f32.mrb[0].mxu0
        %v2568 = vpop.f32.mrb[0].mxu0
        %v2569 = vadd.f32 0.0, %v2568
        %v2570 = vpop.f32.mrb[0].mxu0
        %2571 = vmatprep.mubr.bf16.mxu0 %v2328
        %2572 = vmatmul.mubr.bf16.gmra.mrb[0].mxu0 %v2327
        %v2573 = vpop.f32.mrb[0].mxu0
        %v2574 = vadd.f32 0.0, %v2573
        %v2575 = vpop.f32.mrb[0].mxu0
        %v2576 = vpop.f32.mrb[0].mxu0
        %v2577 = vpop.f32.mrb[0].mxu0
        %2578 = vdwg.mxu0
        %2579 = vmatprep.subr.bf16.mxu0 0
        %2580 = vmatpush1.bf16.msra.mxu0 %v2483
        %2581 = vmatprep.subr.bf16.mxu0 0
        %2582 = vmatpush1.bf16.msra.mxu0 %v2484
        %2583 = vmatprep.subr.bf16.mxu0 0
        %2584 = vmatpush1.bf16.msra.mxu0 %v2485
        %2585 = vmatprep.subr.bf16.mxu0 0
        %2586 = vmatpush1.bf16.msra.mxu0 %v2486
        %2587 = vmatprep.subr.bf16.mxu0 0
        %2588 = vmatpush1.bf16.msra.mxu0 %v2487
        %2589 = vmatprep.subr.bf16.mxu0 0
        %2590 = vmatpush1.bf16.msra.mxu0 %v2488
        %2591 = vmatprep.subr.bf16.mxu0 0
        %2592 = vmatpush1.bf16.msra.mxu0 %v2489
        %2593 = vmatprep.subr.bf16.mxu0 0
        %2594 = vmatpush1.bf16.msra.mxu0 %v2490
        %2595 = vmatprep.subr.bf16.mxu0 0
        %2596 = vmatpush1.bf16.msra.mxu0 %v2491
        %2597 = vmatprep.subr.bf16.mxu0 0
        %2598 = vmatpush1.bf16.msra.mxu0 %v2492
        %2599 = vmatprep.subr.bf16.mxu0 0
        %2600 = vmatpush1.bf16.msra.mxu0 %v2493
        %2601 = vmatprep.subr.bf16.mxu0 0
        %2602 = vmatpush1.bf16.msra.mxu0 %v2494
        %2603 = vmatprep.subr.bf16.mxu0 0
        %2604 = vmatpush1.bf16.msra.mxu0 %v2495
        %2605 = vmatprep.subr.bf16.mxu0 0
        %2606 = vmatpush1.bf16.msra.mxu0 %v2496
        %2607 = vmatprep.subr.bf16.mxu0 0
        %2608 = vmatpush1.bf16.msra.mxu0 %v2497
        %2609 = vmatprep.subr.bf16.mxu0 0
        %2610 = vmatpush1.bf16.msra.mxu0 %v2498
        %2611 = vmatprep.mubr.bf16.mxu0 %v2326
        %2612 = vmatmul.mubr.bf16.gmra.mrb[0].mxu0 %v2325
        %v2613 = vpop.f32.mrb[0].mxu0
        %v2614 = vadd.f32 %v2566, %v2613
        %v2615 = vpop.f32.mrb[0].mxu0
        %v2616 = vpop.f32.mrb[0].mxu0
        %v2617 = vadd.f32 %v2569, %v2616
        %v2618 = vpop.f32.mrb[0].mxu0
        %2619 = vmatprep.mubr.bf16.mxu0 %v2330
        %2620 = vmatmul.mubr.bf16.gmra.mrb[0].mxu0 %v2329
        %v2621 = vpop.f32.mrb[0].mxu0
        %v2622 = vadd.f32 %v2574, %v2621
        %v2623 = vpop.f32.mrb[0].mxu0
        %v2624 = vpop.f32.mrb[0].mxu0
        %v2625 = vpop.f32.mrb[0].mxu0
        %2626 = vdwg.mxu0
        %v2627 = vadd.f32 %v2255, %v2614
        %v2628 = vadd.f32 %v2256, %v2617
        %v2629 = vadd.f32 %v2257, %v2622
        %v2630 = vld [vmem:[%s195 + $0x10] sm:$0xcc]
        %v2631 = vld [vmem:[%s195 + $0x18] sm:$0xcc]
        %v2632 = vld [vmem:[%s195 + $0x20] sm:$0xff]
        %v2633 = vld [vmem:[%s195 + $0x28] sm:$0xff]
        %v2634 = vld [vmem:[%s195 + $0x30] sm:$0xff]
        %v2635 = vld [vmem:[%s195 + $0x38] sm:$0xff]
        %v2636 = vld [vmem:[%s195 + $0x40] sm:$0x33]
        %v2637 = vld [vmem:[%s195 + $0x48] sm:$0x33]
        %s2638 = scalar_lea.vmem %s1, 1536
        %v2639 = vld [vmem:[%s2638] sm:$0xf]
        %v2640 = vld [vmem:[%s2638 + $0x4] sm:$0xf]
        %v2641 = vld [vmem:[%s2638 + $0x8] sm:$0xf]
        %v2642 = vld [vmem:[%s2638 + $0xc] sm:$0xf]
        %v2643 = vld [vmem:[%s2638 + $0x10] sm:$0xf]
        %v2644 = vld [vmem:[%s2638 + $0x14] sm:$0xf]
        %v2645 = vld [vmem:[%s2638 + $0x18] sm:$0xf]
        %v2646 = vld [vmem:[%s2638 + $0x1c] sm:$0xf]
        %v2647 = vld [vmem:[%s2638 + $0x20] sm:$0xf]
        %v2648 = vld [vmem:[%s2638 + $0x24] sm:$0xf]
        %v2649 = vld [vmem:[%s2638 + $0x28] sm:$0xf]
        %v2650 = vld [vmem:[%s2638 + $0x2c] sm:$0xf]
        %v2651 = vld [vmem:[%s2638 + $0x30] sm:$0xf]
        %v2652 = vld [vmem:[%s2638 + $0x34] sm:$0xf]
        %v2653 = vld [vmem:[%s2638 + $0x38] sm:$0xf]
        %v2654 = vld [vmem:[%s2638 + $0x3c] sm:$0xf]
        %v2655 = vld [vmem:[%s2638 + $0x40] sm:$0xf]
        %v2656 = vld [vmem:[%s2638 + $0x44] sm:$0xf]
        %v2657 = vld [vmem:[%s2638 + $0x48] sm:$0xf]
        %v2658 = vld [vmem:[%s2638 + $0x4c] sm:$0xf]
        %v2659 = vld [vmem:[%s2638 + $0x50] sm:$0xf]
        %v2660 = vld [vmem:[%s2638 + $0x54] sm:$0xf]
        %v2661 = vld [vmem:[%s2638 + $0x58] sm:$0xf]
        %v2662 = vld [vmem:[%s2638 + $0x5c] sm:$0xf]
        %v2663 = vld [vmem:[%s2638 + $0x60] sm:$0xf]
        %v2664 = vld [vmem:[%s2638 + $0x64] sm:$0xf]
        %v2665 = vld [vmem:[%s2638 + $0x68] sm:$0xf]
        %v2666 = vld [vmem:[%s2638 + $0x6c] sm:$0xf]
        %v2667 = vld [vmem:[%s2638 + $0x70] sm:$0xf]
        %v2668 = vld [vmem:[%s2638 + $0x74] sm:$0xf]
        %v2669 = vld [vmem:[%s2638 + $0x78] sm:$0xf]
        %v2670 = vld [vmem:[%s2638 + $0x7c] sm:$0xf]
        %v2671 = vld [vmem:[%s2638 + $0x80] sm:$0xf]
        %v2672 = vld [vmem:[%s2638 + $0x84] sm:$0xf]
        %v2673 = vld [vmem:[%s2638 + $0x88] sm:$0xf]
        %v2674 = vld [vmem:[%s2638 + $0x8c] sm:$0xf]
        %v2675 = vld [vmem:[%s2638 + $0x90] sm:$0xf]
        %v2676 = vld [vmem:[%s2638 + $0x94] sm:$0xf]
        %v2677 = vld [vmem:[%s2638 + $0x98] sm:$0xf]
        %v2678 = vld [vmem:[%s2638 + $0x9c] sm:$0xf]
        %v2679 = vld [vmem:[%s2638 + $0xa0] sm:$0xf]
        %v2680 = vld [vmem:[%s2638 + $0xa4] sm:$0xf]
        %v2681 = vld [vmem:[%s2638 + $0xa8] sm:$0xf]
        %v2682 = vld [vmem:[%s2638 + $0xac] sm:$0xf]
        %v2683 = vld [vmem:[%s2638 + $0xb0] sm:$0xf]
        %v2684 = vld [vmem:[%s2638 + $0xb4] sm:$0xf]
        %v2685 = vld [vmem:[%s2638 + $0xb8] sm:$0xf]
        %v2686 = vld [vmem:[%s2638 + $0xbc] sm:$0xf]
        %v2687 = vld [vmem:[%s2638 + $0xc0] sm:$0xf]
        %v2688 = vld [vmem:[%s2638 + $0xc4] sm:$0xf]
        %v2689 = vld [vmem:[%s2638 + $0xc8] sm:$0xf]
        %v2690 = vld [vmem:[%s2638 + $0xcc] sm:$0xf]
        %v2691 = vld [vmem:[%s2638 + $0xd0] sm:$0xf]
        %v2692 = vld [vmem:[%s2638 + $0xd4] sm:$0xf]
        %v2693 = vld [vmem:[%s2638 + $0xd8] sm:$0xf]
        %v2694 = vld [vmem:[%s2638 + $0xdc] sm:$0xf]
        %v2695 = vld [vmem:[%s2638 + $0xe0] sm:$0xf]
        %v2696 = vld [vmem:[%s2638 + $0xe4] sm:$0xf]
        %v2697 = vld [vmem:[%s2638 + $0xe8] sm:$0xf]
        %v2698 = vld [vmem:[%s2638 + $0xec] sm:$0xf]
        %v2699 = vld [vmem:[%s2638 + $0xf0] sm:$0xf]
        %v2700 = vld [vmem:[%s2638 + $0xf4] sm:$0xf]
        %v2701 = vld [vmem:[%s2638 + $0xf8] sm:$0xf]
        %v2702 = vld [vmem:[%s2638 + $0xfc] sm:$0xf]
        %v2711 = vunpack.c.l.b16 %v2630
        %v2712 = vunpack.c.h.b16 %v2630
        %v2713 = vunpack.c.l.b16 %v2631
        %v2714 = vunpack.c.h.b16 %v2631
        %v2715 = vunpack.c.l.b16 %v2632
        %v2716 = vunpack.c.h.b16 %v2632
        %v2717 = vunpack.c.l.b16 %v2633
        %v2718 = vunpack.c.h.b16 %v2633
        %v2719 = vunpack.c.l.b16 %v2634
        %v2720 = vunpack.c.h.b16 %v2634
        %v2721 = vunpack.c.l.b16 %v2635
        %v2722 = vunpack.c.h.b16 %v2635
        %v2723 = vunpack.c.l.b16 %v2636
        %v2724 = vunpack.c.h.b16 %v2636
        %v2725 = vunpack.c.l.b16 %v2637
        %v2726 = vunpack.c.h.b16 %v2637
        %v2727 = vpack.c.b16 %v2715, %v2711
        %v2728 = vpack.c.b16 %v2716, %v2712
        %v2729 = vpack.c.b16 %v2717, %v2713
        %v2730 = vpack.c.b16 %v2718, %v2714
        %v2731 = vpack.c.b16 %v2723, %v2719
        %v2732 = vpack.c.b16 %v2724, %v2720
        %v2733 = vpack.c.b16 %v2725, %v2721
        %v2734 = vpack.c.b16 %v2726, %v2722
        %vm2735 = vcmask 1045504
        %v2736 = vrot.slane %v2727, 2
        %v2737 = vrot.slane %v2731, 2
        %v2738 = vsel %vm2735, %v2736, %v2737
        %v2739 = vrot.slane %v2728, 2
        %v2740 = vrot.slane %v2732, 2
        %v2741 = vsel %vm2735, %v2739, %v2740
        %v2742 = vrot.slane %v2729, 2
        %v2743 = vrot.slane %v2733, 2
        %v2744 = vsel %vm2735, %v2742, %v2743
        %v2745 = vrot.slane %v2730, 2
        %v2746 = vrot.slane %v2734, 2
        %v2747 = vsel %vm2735, %v2745, %v2746
        %v2820 = vunpack.c.l.b16 %v2639
        %v2821 = vunpack.c.l.b16 %v2640
        %v2822 = vunpack.c.l.b16 %v2641
        %v2823 = vunpack.c.l.b16 %v2642
        %v2824 = vunpack.c.l.b16 %v2643
        %v2825 = vunpack.c.l.b16 %v2644
        %v2826 = vunpack.c.l.b16 %v2645
        %v2827 = vunpack.c.l.b16 %v2646
        %v2828 = vunpack.c.l.b16 %v2647
        %v2829 = vunpack.c.l.b16 %v2648
        %v2830 = vunpack.c.l.b16 %v2649
        %v2831 = vunpack.c.l.b16 %v2650
        %v2832 = vunpack.c.l.b16 %v2651
        %v2833 = vunpack.c.l.b16 %v2652
        %v2834 = vunpack.c.l.b16 %v2653
        %v2835 = vunpack.c.l.b16 %v2654
        %v2836 = vunpack.c.l.b16 %v2655
        %v2837 = vunpack.c.l.b16 %v2656
        %v2838 = vunpack.c.l.b16 %v2657
        %v2839 = vunpack.c.l.b16 %v2658
        %v2840 = vunpack.c.l.b16 %v2659
        %v2841 = vunpack.c.l.b16 %v2660
        %v2842 = vunpack.c.l.b16 %v2661
        %v2843 = vunpack.c.l.b16 %v2662
        %v2844 = vunpack.c.l.b16 %v2663
        %v2845 = vunpack.c.l.b16 %v2664
        %v2846 = vunpack.c.l.b16 %v2665
        %v2847 = vunpack.c.l.b16 %v2666
        %v2848 = vunpack.c.l.b16 %v2667
        %v2849 = vunpack.c.l.b16 %v2668
        %v2850 = vunpack.c.l.b16 %v2669
        %v2851 = vunpack.c.l.b16 %v2670
        %v2852 = vunpack.c.l.b16 %v2671
        %v2853 = vunpack.c.l.b16 %v2672
        %v2854 = vunpack.c.l.b16 %v2673
        %v2855 = vunpack.c.l.b16 %v2674
        %v2856 = vunpack.c.l.b16 %v2675
        %v2857 = vunpack.c.l.b16 %v2676
        %v2858 = vunpack.c.l.b16 %v2677
        %v2859 = vunpack.c.l.b16 %v2678
        %v2860 = vunpack.c.l.b16 %v2679
        %v2861 = vunpack.c.l.b16 %v2680
        %v2862 = vunpack.c.l.b16 %v2681
        %v2863 = vunpack.c.l.b16 %v2682
        %v2864 = vunpack.c.l.b16 %v2683
        %v2865 = vunpack.c.l.b16 %v2684
        %v2866 = vunpack.c.l.b16 %v2685
        %v2867 = vunpack.c.l.b16 %v2686
        %v2868 = vunpack.c.l.b16 %v2687
        %v2869 = vunpack.c.l.b16 %v2688
        %v2870 = vunpack.c.l.b16 %v2689
        %v2871 = vunpack.c.l.b16 %v2690
        %v2872 = vunpack.c.l.b16 %v2691
        %v2873 = vunpack.c.l.b16 %v2692
        %v2874 = vunpack.c.l.b16 %v2693
        %v2875 = vunpack.c.l.b16 %v2694
        %v2876 = vunpack.c.l.b16 %v2695
        %v2877 = vunpack.c.l.b16 %v2696
        %v2878 = vunpack.c.l.b16 %v2697
        %v2879 = vunpack.c.l.b16 %v2698
        %v2880 = vunpack.c.l.b16 %v2699
        %v2881 = vunpack.c.l.b16 %v2700
        %v2882 = vunpack.c.l.b16 %v2701
        %v2883 = vunpack.c.l.b16 %v2702
        %v2884 = vpack.c.b16 %v2821, %v2820
        %v2885 = vpack.c.b16 %v2823, %v2822
        %v2886 = vpack.c.b16 %v2825, %v2824
        %v2887 = vpack.c.b16 %v2827, %v2826
        %v2888 = vpack.c.b16 %v2829, %v2828
        %v2889 = vpack.c.b16 %v2831, %v2830
        %v2890 = vpack.c.b16 %v2833, %v2832
        %v2891 = vpack.c.b16 %v2835, %v2834
        %v2892 = vpack.c.b16 %v2837, %v2836
        %v2893 = vpack.c.b16 %v2839, %v2838
        %v2894 = vpack.c.b16 %v2841, %v2840
        %v2895 = vpack.c.b16 %v2843, %v2842
        %v2896 = vpack.c.b16 %v2845, %v2844
        %v2897 = vpack.c.b16 %v2847, %v2846
        %v2898 = vpack.c.b16 %v2849, %v2848
        %v2899 = vpack.c.b16 %v2851, %v2850
        %v2900 = vpack.c.b16 %v2853, %v2852
        %v2901 = vpack.c.b16 %v2855, %v2854
        %v2902 = vpack.c.b16 %v2857, %v2856
        %v2903 = vpack.c.b16 %v2859, %v2858
        %v2904 = vpack.c.b16 %v2861, %v2860
        %v2905 = vpack.c.b16 %v2863, %v2862
        %v2906 = vpack.c.b16 %v2865, %v2864
        %v2907 = vpack.c.b16 %v2867, %v2866
        %v2908 = vpack.c.b16 %v2869, %v2868
        %v2909 = vpack.c.b16 %v2871, %v2870
        %v2910 = vpack.c.b16 %v2873, %v2872
        %v2911 = vpack.c.b16 %v2875, %v2874
        %v2912 = vpack.c.b16 %v2877, %v2876
        %v2913 = vpack.c.b16 %v2879, %v2878
        %v2914 = vpack.c.b16 %v2881, %v2880
        %v2915 = vpack.c.b16 %v2883, %v2882
        %2948 = vmatprep.subr.bf16.mxu0 0
        %2949 = vmatpush1.bf16.msra.mxu0 %v2884
        %2950 = vmatprep.subr.bf16.mxu0 0
        %2951 = vmatpush1.bf16.msra.mxu0 %v2885
        %2952 = vmatprep.subr.bf16.mxu0 0
        %2953 = vmatpush1.bf16.msra.mxu0 %v2886
        %2954 = vmatprep.subr.bf16.mxu0 0
        %2955 = vmatpush1.bf16.msra.mxu0 %v2887
        %2956 = vmatprep.subr.bf16.mxu0 0
        %2957 = vmatpush1.bf16.msra.mxu0 %v2888
        %2958 = vmatprep.subr.bf16.mxu0 0
        %2959 = vmatpush1.bf16.msra.mxu0 %v2889
        %2960 = vmatprep.subr.bf16.mxu0 0
        %2961 = vmatpush1.bf16.msra.mxu0 %v2890
        %2962 = vmatprep.subr.bf16.mxu0 0
        %2963 = vmatpush1.bf16.msra.mxu0 %v2891
        %2964 = vmatprep.subr.bf16.mxu0 0
        %2965 = vmatpush1.bf16.msra.mxu0 %v2892
        %2966 = vmatprep.subr.bf16.mxu0 0
        %2967 = vmatpush1.bf16.msra.mxu0 %v2893
        %2968 = vmatprep.subr.bf16.mxu0 0
        %2969 = vmatpush1.bf16.msra.mxu0 %v2894
        %2970 = vmatprep.subr.bf16.mxu0 0
        %2971 = vmatpush1.bf16.msra.mxu0 %v2895
        %2972 = vmatprep.subr.bf16.mxu0 0
        %2973 = vmatpush1.bf16.msra.mxu0 %v2896
        %2974 = vmatprep.subr.bf16.mxu0 0
        %2975 = vmatpush1.bf16.msra.mxu0 %v2897
        %2976 = vmatprep.subr.bf16.mxu0 0
        %2977 = vmatpush1.bf16.msra.mxu0 %v2898
        %2978 = vmatprep.subr.bf16.mxu0 0
        %2979 = vmatpush1.bf16.msra.mxu0 %v2899
        %2980 = vmatprep.mubr.bf16.mxu0 %v2741
        %2981 = vmatmul.mubr.bf16.gmra.mrb[0].mxu0 %v2738
        %v2982 = vpop.f32.mrb[0].mxu0
        %v2983 = vadd.f32 0.0, %v2982
        %v2984 = vpop.f32.mrb[0].mxu0
        %v2985 = vpop.f32.mrb[0].mxu0
        %v2986 = vadd.f32 0.0, %v2985
        %v2987 = vpop.f32.mrb[0].mxu0
        %2988 = vmatprep.mubr.bf16.mxu0 %v2740
        %2989 = vmatmul.mubr.bf16.gmra.mrb[0].mxu0 %v2737
        %v2990 = vpop.f32.mrb[0].mxu0
        %v2991 = vadd.f32 0.0, %v2990
        %v2992 = vpop.f32.mrb[0].mxu0
        %v2993 = vpop.f32.mrb[0].mxu0
        %v2994 = vpop.f32.mrb[0].mxu0
        %2995 = vdwg.mxu0
        %2996 = vmatprep.subr.bf16.mxu0 0
        %2997 = vmatpush1.bf16.msra.mxu0 %v2900
        %2998 = vmatprep.subr.bf16.mxu0 0
        %2999 = vmatpush1.bf16.msra.mxu0 %v2901
        %3000 = vmatprep.subr.bf16.mxu0 0
        %3001 = vmatpush1.bf16.msra.mxu0 %v2902
        %3002 = vmatprep.subr.bf16.mxu0 0
        %3003 = vmatpush1.bf16.msra.mxu0 %v2903
        %3004 = vmatprep.subr.bf16.mxu0 0
        %3005 = vmatpush1.bf16.msra.mxu0 %v2904
        %3006 = vmatprep.subr.bf16.mxu0 0
        %3007 = vmatpush1.bf16.msra.mxu0 %v2905
        %3008 = vmatprep.subr.bf16.mxu0 0
        %3009 = vmatpush1.bf16.msra.mxu0 %v2906
        %3010 = vmatprep.subr.bf16.mxu0 0
        %3011 = vmatpush1.bf16.msra.mxu0 %v2907
        %3012 = vmatprep.subr.bf16.mxu0 0
        %3013 = vmatpush1.bf16.msra.mxu0 %v2908
        %3014 = vmatprep.subr.bf16.mxu0 0
        %3015 = vmatpush1.bf16.msra.mxu0 %v2909
        %3016 = vmatprep.subr.bf16.mxu0 0
        %3017 = vmatpush1.bf16.msra.mxu0 %v2910
        %3018 = vmatprep.subr.bf16.mxu0 0
        %3019 = vmatpush1.bf16.msra.mxu0 %v2911
        %3020 = vmatprep.subr.bf16.mxu0 0
        %3021 = vmatpush1.bf16.msra.mxu0 %v2912
        %3022 = vmatprep.subr.bf16.mxu0 0
        %3023 = vmatpush1.bf16.msra.mxu0 %v2913
        %3024 = vmatprep.subr.bf16.mxu0 0
        %3025 = vmatpush1.bf16.msra.mxu0 %v2914
        %3026 = vmatprep.subr.bf16.mxu0 0
        %3027 = vmatpush1.bf16.msra.mxu0 %v2915
        %3028 = vmatprep.mubr.bf16.mxu0 %v2747
        %3029 = vmatmul.mubr.bf16.gmra.mrb[0].mxu0 %v2744
        %v3030 = vpop.f32.mrb[0].mxu0
        %v3031 = vadd.f32 %v2983, %v3030
        %v3032 = vpop.f32.mrb[0].mxu0
        %v3033 = vpop.f32.mrb[0].mxu0
        %v3034 = vadd.f32 %v2986, %v3033
        %v3035 = vpop.f32.mrb[0].mxu0
        %3036 = vmatprep.mubr.bf16.mxu0 %v2746
        %3037 = vmatmul.mubr.bf16.gmra.mrb[0].mxu0 %v2743
        %v3038 = vpop.f32.mrb[0].mxu0
        %v3039 = vadd.f32 %v2991, %v3038
        %v3040 = vpop.f32.mrb[0].mxu0
        %v3041 = vpop.f32.mrb[0].mxu0
        %v3042 = vpop.f32.mrb[0].mxu0
        %3043 = vdwg.mxu0
        %v3044 = vadd.f32 %v2627, %v3031
        %v3045 = vadd.f32 %v2628, %v3034
        %v3046 = vadd.f32 %v2629, %v3039
        %v3047 = vld [vmem:[%s195 + $0x40] sm:$0x77]
        %v3048 = vld [vmem:[%s195 + $0x48] sm:$0x77]
        %s3049 = scalar_lea.vmem %s1, 1792
        %v3050 = vld [vmem:[%s3049] sm:$0xf]
        %v3051 = vld [vmem:[%s3049 + $0x4] sm:$0xf]
        %v3052 = vld [vmem:[%s3049 + $0x8] sm:$0xf]
        %v3053 = vld [vmem:[%s3049 + $0xc] sm:$0xf]
        %v3054 = vld [vmem:[%s3049 + $0x10] sm:$0xf]
        %v3055 = vld [vmem:[%s3049 + $0x14] sm:$0xf]
        %v3056 = vld [vmem:[%s3049 + $0x18] sm:$0xf]
        %v3057 = vld [vmem:[%s3049 + $0x1c] sm:$0xf]
        %v3058 = vld [vmem:[%s3049 + $0x20] sm:$0xf]
        %v3059 = vld [vmem:[%s3049 + $0x24] sm:$0xf]
        %v3060 = vld [vmem:[%s3049 + $0x28] sm:$0xf]
        %v3061 = vld [vmem:[%s3049 + $0x2c] sm:$0xf]
        %v3062 = vld [vmem:[%s3049 + $0x30] sm:$0xf]
        %v3063 = vld [vmem:[%s3049 + $0x34] sm:$0xf]
        %v3064 = vld [vmem:[%s3049 + $0x38] sm:$0xf]
        %v3065 = vld [vmem:[%s3049 + $0x3c] sm:$0xf]
        %v3066 = vld [vmem:[%s3049 + $0x40] sm:$0xf]
        %v3067 = vld [vmem:[%s3049 + $0x44] sm:$0xf]
        %v3068 = vld [vmem:[%s3049 + $0x48] sm:$0xf]
        %v3069 = vld [vmem:[%s3049 + $0x4c] sm:$0xf]
        %v3070 = vld [vmem:[%s3049 + $0x50] sm:$0xf]
        %v3071 = vld [vmem:[%s3049 + $0x54] sm:$0xf]
        %v3072 = vld [vmem:[%s3049 + $0x58] sm:$0xf]
        %v3073 = vld [vmem:[%s3049 + $0x5c] sm:$0xf]
        %v3074 = vld [vmem:[%s3049 + $0x60] sm:$0xf]
        %v3075 = vld [vmem:[%s3049 + $0x64] sm:$0xf]
        %v3076 = vld [vmem:[%s3049 + $0x68] sm:$0xf]
        %v3077 = vld [vmem:[%s3049 + $0x6c] sm:$0xf]
        %v3078 = vld [vmem:[%s3049 + $0x70] sm:$0xf]
        %v3079 = vld [vmem:[%s3049 + $0x74] sm:$0xf]
        %v3080 = vld [vmem:[%s3049 + $0x78] sm:$0xf]
        %v3081 = vld [vmem:[%s3049 + $0x7c] sm:$0xf]
        %v3082 = vld [vmem:[%s3049 + $0x80] sm:$0xf]
        %v3083 = vld [vmem:[%s3049 + $0x84] sm:$0xf]
        %v3084 = vld [vmem:[%s3049 + $0x88] sm:$0xf]
        %v3085 = vld [vmem:[%s3049 + $0x8c] sm:$0xf]
        %v3086 = vld [vmem:[%s3049 + $0x90] sm:$0xf]
        %v3087 = vld [vmem:[%s3049 + $0x94] sm:$0xf]
        %v3088 = vld [vmem:[%s3049 + $0x98] sm:$0xf]
        %v3089 = vld [vmem:[%s3049 + $0x9c] sm:$0xf]
        %v3090 = vld [vmem:[%s3049 + $0xa0] sm:$0xf]
        %v3091 = vld [vmem:[%s3049 + $0xa4] sm:$0xf]
        %v3092 = vld [vmem:[%s3049 + $0xa8] sm:$0xf]
        %v3093 = vld [vmem:[%s3049 + $0xac] sm:$0xf]
        %v3094 = vld [vmem:[%s3049 + $0xb0] sm:$0xf]
        %v3095 = vld [vmem:[%s3049 + $0xb4] sm:$0xf]
        %v3096 = vld [vmem:[%s3049 + $0xb8] sm:$0xf]
        %v3097 = vld [vmem:[%s3049 + $0xbc] sm:$0xf]
        %v3098 = vld [vmem:[%s3049 + $0xc0] sm:$0xf]
        %v3099 = vld [vmem:[%s3049 + $0xc4] sm:$0xf]
        %v3100 = vld [vmem:[%s3049 + $0xc8] sm:$0xf]
        %v3101 = vld [vmem:[%s3049 + $0xcc] sm:$0xf]
        %v3102 = vld [vmem:[%s3049 + $0xd0] sm:$0xf]
        %v3103 = vld [vmem:[%s3049 + $0xd4] sm:$0xf]
        %v3104 = vld [vmem:[%s3049 + $0xd8] sm:$0xf]
        %v3105 = vld [vmem:[%s3049 + $0xdc] sm:$0xf]
        %v3106 = vld [vmem:[%s3049 + $0xe0] sm:$0xf]
        %v3107 = vld [vmem:[%s3049 + $0xe4] sm:$0xf]
        %v3108 = vld [vmem:[%s3049 + $0xe8] sm:$0xf]
        %v3109 = vld [vmem:[%s3049 + $0xec] sm:$0xf]
        %v3110 = vld [vmem:[%s3049 + $0xf0] sm:$0xf]
        %v3111 = vld [vmem:[%s3049 + $0xf4] sm:$0xf]
        %v3112 = vld [vmem:[%s3049 + $0xf8] sm:$0xf]
        %v3113 = vld [vmem:[%s3049 + $0xfc] sm:$0xf]
        %v3116 = vunpack.c.l.b16 %v3047
        %v3117 = vunpack.c.h.b16 %v3047
        %v3118 = vunpack.c.l.b16 %v3048
        %v3119 = vunpack.c.h.b16 %v3048
        %v3120 = vpack.c.b16 %v3116, %v2719
        %v3121 = vpack.c.b16 %v3117, %v2720
        %v3122 = vpack.c.b16 %v3118, %v2721
        %v3123 = vpack.c.b16 %v3119, %v2722
        %vm3124 = vsmask.f32 5376
        %v3126 = vshrl.u32 %v2727, 16
        %v3128 = vrot.slane %v3126, 2
        %v3129 = vshll.u32 %v2727, 16
        %v3131 = vrot.slane %v3129, 3
        %v3132 = vor.u32 %v3128, %v3131
        %v3134 = vshrl.u32 %v3120, 16
        %v3136 = vrot.slane %v3134, 2
        %v3137 = vshll.u32 %v3120, 16
        %v3139 = vrot.slane %v3137, 3
        %v3140 = vor.u32 %v3136, %v3139
        %v3141 = vsel %vm3124, %v3132, %v3140
        %v3143 = vshrl.u32 %v2728, 16
        %v3145 = vrot.slane %v3143, 2
        %v3146 = vshll.u32 %v2728, 16
        %v3148 = vrot.slane %v3146, 3
        %v3149 = vor.u32 %v3145, %v3148
        %v3151 = vshrl.u32 %v3121, 16
        %v3153 = vrot.slane %v3151, 2
        %v3154 = vshll.u32 %v3121, 16
        %v3156 = vrot.slane %v3154, 3
        %v3157 = vor.u32 %v3153, %v3156
        %v3158 = vsel %vm3124, %v3149, %v3157
        %v3160 = vshrl.u32 %v2729, 16
        %v3162 = vrot.slane %v3160, 2
        %v3163 = vshll.u32 %v2729, 16
        %v3165 = vrot.slane %v3163, 3
        %v3166 = vor.u32 %v3162, %v3165
        %v3168 = vshrl.u32 %v3122, 16
        %v3170 = vrot.slane %v3168, 2
        %v3171 = vshll.u32 %v3122, 16
        %v3173 = vrot.slane %v3171, 3
        %v3174 = vor.u32 %v3170, %v3173
        %v3175 = vsel %vm3124, %v3166, %v3174
        %v3177 = vshrl.u32 %v2730, 16
        %v3179 = vrot.slane %v3177, 2
        %v3180 = vshll.u32 %v2730, 16
        %v3182 = vrot.slane %v3180, 3
        %v3183 = vor.u32 %v3179, %v3182
        %v3185 = vshrl.u32 %v3123, 16
        %v3187 = vrot.slane %v3185, 2
        %v3188 = vshll.u32 %v3123, 16
        %v3190 = vrot.slane %v3188, 3
        %v3191 = vor.u32 %v3187, %v3190
        %v3192 = vsel %vm3124, %v3183, %v3191
        %v3265 = vunpack.c.l.b16 %v3050
        %v3266 = vunpack.c.l.b16 %v3051
        %v3267 = vunpack.c.l.b16 %v3052
        %v3268 = vunpack.c.l.b16 %v3053
        %v3269 = vunpack.c.l.b16 %v3054
        %v3270 = vunpack.c.l.b16 %v3055
        %v3271 = vunpack.c.l.b16 %v3056
        %v3272 = vunpack.c.l.b16 %v3057
        %v3273 = vunpack.c.l.b16 %v3058
        %v3274 = vunpack.c.l.b16 %v3059
        %v3275 = vunpack.c.l.b16 %v3060
        %v3276 = vunpack.c.l.b16 %v3061
        %v3277 = vunpack.c.l.b16 %v3062
        %v3278 = vunpack.c.l.b16 %v3063
        %v3279 = vunpack.c.l.b16 %v3064
        %v3280 = vunpack.c.l.b16 %v3065
        %v3281 = vunpack.c.l.b16 %v3066
        %v3282 = vunpack.c.l.b16 %v3067
        %v3283 = vunpack.c.l.b16 %v3068
        %v3284 = vunpack.c.l.b16 %v3069
        %v3285 = vunpack.c.l.b16 %v3070
        %v3286 = vunpack.c.l.b16 %v3071
        %v3287 = vunpack.c.l.b16 %v3072
        %v3288 = vunpack.c.l.b16 %v3073
        %v3289 = vunpack.c.l.b16 %v3074
        %v3290 = vunpack.c.l.b16 %v3075
        %v3291 = vunpack.c.l.b16 %v3076
        %v3292 = vunpack.c.l.b16 %v3077
        %v3293 = vunpack.c.l.b16 %v3078
        %v3294 = vunpack.c.l.b16 %v3079
        %v3295 = vunpack.c.l.b16 %v3080
        %v3296 = vunpack.c.l.b16 %v3081
        %v3297 = vunpack.c.l.b16 %v3082
        %v3298 = vunpack.c.l.b16 %v3083
        %v3299 = vunpack.c.l.b16 %v3084
        %v3300 = vunpack.c.l.b16 %v3085
        %v3301 = vunpack.c.l.b16 %v3086
        %v3302 = vunpack.c.l.b16 %v3087
        %v3303 = vunpack.c.l.b16 %v3088
        %v3304 = vunpack.c.l.b16 %v3089
        %v3305 = vunpack.c.l.b16 %v3090
        %v3306 = vunpack.c.l.b16 %v3091
        %v3307 = vunpack.c.l.b16 %v3092
        %v3308 = vunpack.c.l.b16 %v3093
        %v3309 = vunpack.c.l.b16 %v3094
        %v3310 = vunpack.c.l.b16 %v3095
        %v3311 = vunpack.c.l.b16 %v3096
        %v3312 = vunpack.c.l.b16 %v3097
        %v3313 = vunpack.c.l.b16 %v3098
        %v3314 = vunpack.c.l.b16 %v3099
        %v3315 = vunpack.c.l.b16 %v3100
        %v3316 = vunpack.c.l.b16 %v3101
        %v3317 = vunpack.c.l.b16 %v3102
        %v3318 = vunpack.c.l.b16 %v3103
        %v3319 = vunpack.c.l.b16 %v3104
        %v3320 = vunpack.c.l.b16 %v3105
        %v3321 = vunpack.c.l.b16 %v3106
        %v3322 = vunpack.c.l.b16 %v3107
        %v3323 = vunpack.c.l.b16 %v3108
        %v3324 = vunpack.c.l.b16 %v3109
        %v3325 = vunpack.c.l.b16 %v3110
        %v3326 = vunpack.c.l.b16 %v3111
        %v3327 = vunpack.c.l.b16 %v3112
        %v3328 = vunpack.c.l.b16 %v3113
        %v3329 = vpack.c.b16 %v3266, %v3265
        %v3330 = vpack.c.b16 %v3268, %v3267
        %v3331 = vpack.c.b16 %v3270, %v3269
        %v3332 = vpack.c.b16 %v3272, %v3271
        %v3333 = vpack.c.b16 %v3274, %v3273
        %v3334 = vpack.c.b16 %v3276, %v3275
        %v3335 = vpack.c.b16 %v3278, %v3277
        %v3336 = vpack.c.b16 %v3280, %v3279
        %v3337 = vpack.c.b16 %v3282, %v3281
        %v3338 = vpack.c.b16 %v3284, %v3283
        %v3339 = vpack.c.b16 %v3286, %v3285
        %v3340 = vpack.c.b16 %v3288, %v3287
        %v3341 = vpack.c.b16 %v3290, %v3289
        %v3342 = vpack.c.b16 %v3292, %v3291
        %v3343 = vpack.c.b16 %v3294, %v3293
        %v3344 = vpack.c.b16 %v3296, %v3295
        %v3345 = vpack.c.b16 %v3298, %v3297
        %v3346 = vpack.c.b16 %v3300, %v3299
        %v3347 = vpack.c.b16 %v3302, %v3301
        %v3348 = vpack.c.b16 %v3304, %v3303
        %v3349 = vpack.c.b16 %v3306, %v3305
        %v3350 = vpack.c.b16 %v3308, %v3307
        %v3351 = vpack.c.b16 %v3310, %v3309
        %v3352 = vpack.c.b16 %v3312, %v3311
        %v3353 = vpack.c.b16 %v3314, %v3313
        %v3354 = vpack.c.b16 %v3316, %v3315
        %v3355 = vpack.c.b16 %v3318, %v3317
        %v3356 = vpack.c.b16 %v3320, %v3319
        %v3357 = vpack.c.b16 %v3322, %v3321
        %v3358 = vpack.c.b16 %v3324, %v3323
        %v3359 = vpack.c.b16 %v3326, %v3325
        %v3360 = vpack.c.b16 %v3328, %v3327
        %3393 = vmatprep.subr.bf16.mxu0 0
        %3394 = vmatpush1.bf16.msra.mxu0 %v3329
        %3395 = vmatprep.subr.bf16.mxu0 0
        %3396 = vmatpush1.bf16.msra.mxu0 %v3330
        %3397 = vmatprep.subr.bf16.mxu0 0
        %3398 = vmatpush1.bf16.msra.mxu0 %v3331
        %3399 = vmatprep.subr.bf16.mxu0 0
        %3400 = vmatpush1.bf16.msra.mxu0 %v3332
        %3401 = vmatprep.subr.bf16.mxu0 0
        %3402 = vmatpush1.bf16.msra.mxu0 %v3333
        %3403 = vmatprep.subr.bf16.mxu0 0
        %3404 = vmatpush1.bf16.msra.mxu0 %v3334
        %3405 = vmatprep.subr.bf16.mxu0 0
        %3406 = vmatpush1.bf16.msra.mxu0 %v3335
        %3407 = vmatprep.subr.bf16.mxu0 0
        %3408 = vmatpush1.bf16.msra.mxu0 %v3336
        %3409 = vmatprep.subr.bf16.mxu0 0
        %3410 = vmatpush1.bf16.msra.mxu0 %v3337
        %3411 = vmatprep.subr.bf16.mxu0 0
        %3412 = vmatpush1.bf16.msra.mxu0 %v3338
        %3413 = vmatprep.subr.bf16.mxu0 0
        %3414 = vmatpush1.bf16.msra.mxu0 %v3339
        %3415 = vmatprep.subr.bf16.mxu0 0
        %3416 = vmatpush1.bf16.msra.mxu0 %v3340
        %3417 = vmatprep.subr.bf16.mxu0 0
        %3418 = vmatpush1.bf16.msra.mxu0 %v3341
        %3419 = vmatprep.subr.bf16.mxu0 0
        %3420 = vmatpush1.bf16.msra.mxu0 %v3342
        %3421 = vmatprep.subr.bf16.mxu0 0
        %3422 = vmatpush1.bf16.msra.mxu0 %v3343
        %3423 = vmatprep.subr.bf16.mxu0 0
        %3424 = vmatpush1.bf16.msra.mxu0 %v3344
        %3425 = vmatprep.mubr.bf16.mxu0 %v3158
        %3426 = vmatmul.mubr.bf16.gmra.mrb[0].mxu0 %v3141
        %v3427 = vpop.f32.mrb[0].mxu0
        %v3428 = vadd.f32 0.0, %v3427
        %v3429 = vpop.f32.mrb[0].mxu0
        %v3430 = vpop.f32.mrb[0].mxu0
        %v3431 = vadd.f32 0.0, %v3430
        %v3432 = vpop.f32.mrb[0].mxu0
        %3433 = vmatprep.mubr.bf16.mxu0 %v3157
        %3434 = vmatmul.mubr.bf16.gmra.mrb[0].mxu0 %v3140
        %v3435 = vpop.f32.mrb[0].mxu0
        %v3436 = vadd.f32 0.0, %v3435
        %v3437 = vpop.f32.mrb[0].mxu0
        %v3438 = vpop.f32.mrb[0].mxu0
        %v3439 = vpop.f32.mrb[0].mxu0
        %3440 = vdwg.mxu0
        %3441 = vmatprep.subr.bf16.mxu0 0
        %3442 = vmatpush1.bf16.msra.mxu0 %v3345
        %3443 = vmatprep.subr.bf16.mxu0 0
        %3444 = vmatpush1.bf16.msra.mxu0 %v3346
        %3445 = vmatprep.subr.bf16.mxu0 0
        %3446 = vmatpush1.bf16.msra.mxu0 %v3347
        %3447 = vmatprep.subr.bf16.mxu0 0
        %3448 = vmatpush1.bf16.msra.mxu0 %v3348
        %3449 = vmatprep.subr.bf16.mxu0 0
        %3450 = vmatpush1.bf16.msra.mxu0 %v3349
        %3451 = vmatprep.subr.bf16.mxu0 0
        %3452 = vmatpush1.bf16.msra.mxu0 %v3350
        %3453 = vmatprep.subr.bf16.mxu0 0
        %3454 = vmatpush1.bf16.msra.mxu0 %v3351
        %3455 = vmatprep.subr.bf16.mxu0 0
        %3456 = vmatpush1.bf16.msra.mxu0 %v3352
        %3457 = vmatprep.subr.bf16.mxu0 0
        %3458 = vmatpush1.bf16.msra.mxu0 %v3353
        %3459 = vmatprep.subr.bf16.mxu0 0
        %3460 = vmatpush1.bf16.msra.mxu0 %v3354
        %3461 = vmatprep.subr.bf16.mxu0 0
        %3462 = vmatpush1.bf16.msra.mxu0 %v3355
        %3463 = vmatprep.subr.bf16.mxu0 0
        %3464 = vmatpush1.bf16.msra.mxu0 %v3356
        %3465 = vmatprep.subr.bf16.mxu0 0
        %3466 = vmatpush1.bf16.msra.mxu0 %v3357
        %3467 = vmatprep.subr.bf16.mxu0 0
        %3468 = vmatpush1.bf16.msra.mxu0 %v3358
        %3469 = vmatprep.subr.bf16.mxu0 0
        %3470 = vmatpush1.bf16.msra.mxu0 %v3359
        %3471 = vmatprep.subr.bf16.mxu0 0
        %3472 = vmatpush1.bf16.msra.mxu0 %v3360
        %3473 = vmatprep.mubr.bf16.mxu0 %v3192
        %3474 = vmatmul.mubr.bf16.gmra.mrb[0].mxu0 %v3175
        %v3475 = vpop.f32.mrb[0].mxu0
        %v3476 = vadd.f32 %v3428, %v3475
        %v3477 = vpop.f32.mrb[0].mxu0
        %v3478 = vpop.f32.mrb[0].mxu0
        %v3479 = vadd.f32 %v3431, %v3478
        %v3480 = vpop.f32.mrb[0].mxu0
        %3481 = vmatprep.mubr.bf16.mxu0 %v3191
        %3482 = vmatmul.mubr.bf16.gmra.mrb[0].mxu0 %v3174
        %v3483 = vpop.f32.mrb[0].mxu0
        %v3484 = vadd.f32 %v3436, %v3483
        %v3485 = vpop.f32.mrb[0].mxu0
        %v3486 = vpop.f32.mrb[0].mxu0
        %v3487 = vpop.f32.mrb[0].mxu0
        %3488 = vdwg.mxu0
        %v3489 = vadd.f32 %v3044, %v3476
        %v3490 = vadd.f32 %v3045, %v3479
        %v3491 = vadd.f32 %v3046, %v3484
        %v3492 = vld [vmem:[%s195 + $0x10] sm:$0x88]
        %v3493 = vld [vmem:[%s195 + $0x18] sm:$0x88]
        %s3494 = scalar_lea.vmem %s1, 2048
        %v3495 = vld [vmem:[%s3494] sm:$0xf]
        %v3496 = vld [vmem:[%s3494 + $0x4] sm:$0xf]
        %v3497 = vld [vmem:[%s3494 + $0x8] sm:$0xf]
        %v3498 = vld [vmem:[%s3494 + $0xc] sm:$0xf]
        %v3499 = vld [vmem:[%s3494 + $0x10] sm:$0xf]
        %v3500 = vld [vmem:[%s3494 + $0x14] sm:$0xf]
        %v3501 = vld [vmem:[%s3494 + $0x18] sm:$0xf]
        %v3502 = vld [vmem:[%s3494 + $0x1c] sm:$0xf]
        %v3503 = vld [vmem:[%s3494 + $0x20] sm:$0xf]
        %v3504 = vld [vmem:[%s3494 + $0x24] sm:$0xf]
        %v3505 = vld [vmem:[%s3494 + $0x28] sm:$0xf]
        %v3506 = vld [vmem:[%s3494 + $0x2c] sm:$0xf]
        %v3507 = vld [vmem:[%s3494 + $0x30] sm:$0xf]
        %v3508 = vld [vmem:[%s3494 + $0x34] sm:$0xf]
        %v3509 = vld [vmem:[%s3494 + $0x38] sm:$0xf]
        %v3510 = vld [vmem:[%s3494 + $0x3c] sm:$0xf]
        %v3511 = vld [vmem:[%s3494 + $0x40] sm:$0xf]
        %v3512 = vld [vmem:[%s3494 + $0x44] sm:$0xf]
        %v3513 = vld [vmem:[%s3494 + $0x48] sm:$0xf]
        %v3514 = vld [vmem:[%s3494 + $0x4c] sm:$0xf]
        %v3515 = vld [vmem:[%s3494 + $0x50] sm:$0xf]
        %v3516 = vld [vmem:[%s3494 + $0x54] sm:$0xf]
        %v3517 = vld [vmem:[%s3494 + $0x58] sm:$0xf]
        %v3518 = vld [vmem:[%s3494 + $0x5c] sm:$0xf]
        %v3519 = vld [vmem:[%s3494 + $0x60] sm:$0xf]
        %v3520 = vld [vmem:[%s3494 + $0x64] sm:$0xf]
        %v3521 = vld [vmem:[%s3494 + $0x68] sm:$0xf]
        %v3522 = vld [vmem:[%s3494 + $0x6c] sm:$0xf]
        %v3523 = vld [vmem:[%s3494 + $0x70] sm:$0xf]
        %v3524 = vld [vmem:[%s3494 + $0x74] sm:$0xf]
        %v3525 = vld [vmem:[%s3494 + $0x78] sm:$0xf]
        %v3526 = vld [vmem:[%s3494 + $0x7c] sm:$0xf]
        %v3527 = vld [vmem:[%s3494 + $0x80] sm:$0xf]
        %v3528 = vld [vmem:[%s3494 + $0x84] sm:$0xf]
        %v3529 = vld [vmem:[%s3494 + $0x88] sm:$0xf]
        %v3530 = vld [vmem:[%s3494 + $0x8c] sm:$0xf]
        %v3531 = vld [vmem:[%s3494 + $0x90] sm:$0xf]
        %v3532 = vld [vmem:[%s3494 + $0x94] sm:$0xf]
        %v3533 = vld [vmem:[%s3494 + $0x98] sm:$0xf]
        %v3534 = vld [vmem:[%s3494 + $0x9c] sm:$0xf]
        %v3535 = vld [vmem:[%s3494 + $0xa0] sm:$0xf]
        %v3536 = vld [vmem:[%s3494 + $0xa4] sm:$0xf]
        %v3537 = vld [vmem:[%s3494 + $0xa8] sm:$0xf]
        %v3538 = vld [vmem:[%s3494 + $0xac] sm:$0xf]
        %v3539 = vld [vmem:[%s3494 + $0xb0] sm:$0xf]
        %v3540 = vld [vmem:[%s3494 + $0xb4] sm:$0xf]
        %v3541 = vld [vmem:[%s3494 + $0xb8] sm:$0xf]
        %v3542 = vld [vmem:[%s3494 + $0xbc] sm:$0xf]
        %v3543 = vld [vmem:[%s3494 + $0xc0] sm:$0xf]
        %v3544 = vld [vmem:[%s3494 + $0xc4] sm:$0xf]
        %v3545 = vld [vmem:[%s3494 + $0xc8] sm:$0xf]
        %v3546 = vld [vmem:[%s3494 + $0xcc] sm:$0xf]
        %v3547 = vld [vmem:[%s3494 + $0xd0] sm:$0xf]
        %v3548 = vld [vmem:[%s3494 + $0xd4] sm:$0xf]
        %v3549 = vld [vmem:[%s3494 + $0xd8] sm:$0xf]
        %v3550 = vld [vmem:[%s3494 + $0xdc] sm:$0xf]
        %v3551 = vld [vmem:[%s3494 + $0xe0] sm:$0xf]
        %v3552 = vld [vmem:[%s3494 + $0xe4] sm:$0xf]
        %v3553 = vld [vmem:[%s3494 + $0xe8] sm:$0xf]
        %v3554 = vld [vmem:[%s3494 + $0xec] sm:$0xf]
        %v3555 = vld [vmem:[%s3494 + $0xf0] sm:$0xf]
        %v3556 = vld [vmem:[%s3494 + $0xf4] sm:$0xf]
        %v3557 = vld [vmem:[%s3494 + $0xf8] sm:$0xf]
        %v3558 = vld [vmem:[%s3494 + $0xfc] sm:$0xf]
        %v3561 = vunpack.c.l.b16 %v3492
        %v3562 = vunpack.c.h.b16 %v3492
        %v3563 = vunpack.c.l.b16 %v3493
        %v3564 = vunpack.c.h.b16 %v3493
        %v3565 = vpack.c.b16 %v2715, %v3561
        %v3566 = vpack.c.b16 %v2716, %v3562
        %v3567 = vpack.c.b16 %v2717, %v3563
        %v3568 = vpack.c.b16 %v2718, %v3564
        %v3569 = vrot.slane %v3565, 3
        %v3570 = vrot.slane %v3120, 3
        %v3571 = vsel %vm1501, %v3569, %v3570
        %v3572 = vrot.slane %v3566, 3
        %v3573 = vrot.slane %v3121, 3
        %v3574 = vsel %vm1501, %v3572, %v3573
        %v3575 = vrot.slane %v3567, 3
        %v3576 = vrot.slane %v3122, 3
        %v3577 = vsel %vm1501, %v3575, %v3576
        %v3578 = vrot.slane %v3568, 3
        %v3579 = vrot.slane %v3123, 3
        %v3580 = vsel %vm1501, %v3578, %v3579
        %v3653 = vunpack.c.l.b16 %v3495
        %v3654 = vunpack.c.l.b16 %v3496
        %v3655 = vunpack.c.l.b16 %v3497
        %v3656 = vunpack.c.l.b16 %v3498
        %v3657 = vunpack.c.l.b16 %v3499
        %v3658 = vunpack.c.l.b16 %v3500
        %v3659 = vunpack.c.l.b16 %v3501
        %v3660 = vunpack.c.l.b16 %v3502
        %v3661 = vunpack.c.l.b16 %v3503
        %v3662 = vunpack.c.l.b16 %v3504
        %v3663 = vunpack.c.l.b16 %v3505
        %v3664 = vunpack.c.l.b16 %v3506
        %v3665 = vunpack.c.l.b16 %v3507
        %v3666 = vunpack.c.l.b16 %v3508
        %v3667 = vunpack.c.l.b16 %v3509
        %v3668 = vunpack.c.l.b16 %v3510
        %v3669 = vunpack.c.l.b16 %v3511
        %v3670 = vunpack.c.l.b16 %v3512
        %v3671 = vunpack.c.l.b16 %v3513
        %v3672 = vunpack.c.l.b16 %v3514
        %v3673 = vunpack.c.l.b16 %v3515
        %v3674 = vunpack.c.l.b16 %v3516
        %v3675 = vunpack.c.l.b16 %v3517
        %v3676 = vunpack.c.l.b16 %v3518
        %v3677 = vunpack.c.l.b16 %v3519
        %v3678 = vunpack.c.l.b16 %v3520
        %v3679 = vunpack.c.l.b16 %v3521
        %v3680 = vunpack.c.l.b16 %v3522
        %v3681 = vunpack.c.l.b16 %v3523
        %v3682 = vunpack.c.l.b16 %v3524
        %v3683 = vunpack.c.l.b16 %v3525
        %v3684 = vunpack.c.l.b16 %v3526
        %v3685 = vunpack.c.l.b16 %v3527
        %v3686 = vunpack.c.l.b16 %v3528
        %v3687 = vunpack.c.l.b16 %v3529
        %v3688 = vunpack.c.l.b16 %v3530
        %v3689 = vunpack.c.l.b16 %v3531
        %v3690 = vunpack.c.l.b16 %v3532
        %v3691 = vunpack.c.l.b16 %v3533
        %v3692 = vunpack.c.l.b16 %v3534
        %v3693 = vunpack.c.l.b16 %v3535
        %v3694 = vunpack.c.l.b16 %v3536
        %v3695 = vunpack.c.l.b16 %v3537
        %v3696 = vunpack.c.l.b16 %v3538
        %v3697 = vunpack.c.l.b16 %v3539
        %v3698 = vunpack.c.l.b16 %v3540
        %v3699 = vunpack.c.l.b16 %v3541
        %v3700 = vunpack.c.l.b16 %v3542
        %v3701 = vunpack.c.l.b16 %v3543
        %v3702 = vunpack.c.l.b16 %v3544
        %v3703 = vunpack.c.l.b16 %v3545
        %v3704 = vunpack.c.l.b16 %v3546
        %v3705 = vunpack.c.l.b16 %v3547
        %v3706 = vunpack.c.l.b16 %v3548
        %v3707 = vunpack.c.l.b16 %v3549
        %v3708 = vunpack.c.l.b16 %v3550
        %v3709 = vunpack.c.l.b16 %v3551
        %v3710 = vunpack.c.l.b16 %v3552
        %v3711 = vunpack.c.l.b16 %v3553
        %v3712 = vunpack.c.l.b16 %v3554
        %v3713 = vunpack.c.l.b16 %v3555
        %v3714 = vunpack.c.l.b16 %v3556
        %v3715 = vunpack.c.l.b16 %v3557
        %v3716 = vunpack.c.l.b16 %v3558
        %v3717 = vpack.c.b16 %v3654, %v3653
        %v3718 = vpack.c.b16 %v3656, %v3655
        %v3719 = vpack.c.b16 %v3658, %v3657
        %v3720 = vpack.c.b16 %v3660, %v3659
        %v3721 = vpack.c.b16 %v3662, %v3661
        %v3722 = vpack.c.b16 %v3664, %v3663
        %v3723 = vpack.c.b16 %v3666, %v3665
        %v3724 = vpack.c.b16 %v3668, %v3667
        %v3725 = vpack.c.b16 %v3670, %v3669
        %v3726 = vpack.c.b16 %v3672, %v3671
        %v3727 = vpack.c.b16 %v3674, %v3673
        %v3728 = vpack.c.b16 %v3676, %v3675
        %v3729 = vpack.c.b16 %v3678, %v3677
        %v3730 = vpack.c.b16 %v3680, %v3679
        %v3731 = vpack.c.b16 %v3682, %v3681
        %v3732 = vpack.c.b16 %v3684, %v3683
        %v3733 = vpack.c.b16 %v3686, %v3685
        %v3734 = vpack.c.b16 %v3688, %v3687
        %v3735 = vpack.c.b16 %v3690, %v3689
        %v3736 = vpack.c.b16 %v3692, %v3691
        %v3737 = vpack.c.b16 %v3694, %v3693
        %v3738 = vpack.c.b16 %v3696, %v3695
        %v3739 = vpack.c.b16 %v3698, %v3697
        %v3740 = vpack.c.b16 %v3700, %v3699
        %v3741 = vpack.c.b16 %v3702, %v3701
        %v3742 = vpack.c.b16 %v3704, %v3703
        %v3743 = vpack.c.b16 %v3706, %v3705
        %v3744 = vpack.c.b16 %v3708, %v3707
        %v3745 = vpack.c.b16 %v3710, %v3709
        %v3746 = vpack.c.b16 %v3712, %v3711
        %v3747 = vpack.c.b16 %v3714, %v3713
        %v3748 = vpack.c.b16 %v3716, %v3715
        %3781 = vmatprep.subr.bf16.mxu0 0
        %3782 = vmatpush1.bf16.msra.mxu0 %v3717
        %3783 = vmatprep.subr.bf16.mxu0 0
        %3784 = vmatpush1.bf16.msra.mxu0 %v3718
        %3785 = vmatprep.subr.bf16.mxu0 0
        %3786 = vmatpush1.bf16.msra.mxu0 %v3719
        %3787 = vmatprep.subr.bf16.mxu0 0
        %3788 = vmatpush1.bf16.msra.mxu0 %v3720
        %3789 = vmatprep.subr.bf16.mxu0 0
        %3790 = vmatpush1.bf16.msra.mxu0 %v3721
        %3791 = vmatprep.subr.bf16.mxu0 0
        %3792 = vmatpush1.bf16.msra.mxu0 %v3722
        %3793 = vmatprep.subr.bf16.mxu0 0
        %3794 = vmatpush1.bf16.msra.mxu0 %v3723
        %3795 = vmatprep.subr.bf16.mxu0 0
        %3796 = vmatpush1.bf16.msra.mxu0 %v3724
        %3797 = vmatprep.subr.bf16.mxu0 0
        %3798 = vmatpush1.bf16.msra.mxu0 %v3725
        %3799 = vmatprep.subr.bf16.mxu0 0
        %3800 = vmatpush1.bf16.msra.mxu0 %v3726
        %3801 = vmatprep.subr.bf16.mxu0 0
        %3802 = vmatpush1.bf16.msra.mxu0 %v3727
        %3803 = vmatprep.subr.bf16.mxu0 0
        %3804 = vmatpush1.bf16.msra.mxu0 %v3728
        %3805 = vmatprep.subr.bf16.mxu0 0
        %3806 = vmatpush1.bf16.msra.mxu0 %v3729
        %3807 = vmatprep.subr.bf16.mxu0 0
        %3808 = vmatpush1.bf16.msra.mxu0 %v3730
        %3809 = vmatprep.subr.bf16.mxu0 0
        %3810 = vmatpush1.bf16.msra.mxu0 %v3731
        %3811 = vmatprep.subr.bf16.mxu0 0
        %3812 = vmatpush1.bf16.msra.mxu0 %v3732
        %3813 = vmatprep.mubr.bf16.mxu0 %v3574
        %3814 = vmatmul.mubr.bf16.gmra.mrb[0].mxu0 %v3571
        %v3815 = vpop.f32.mrb[0].mxu0
        %v3816 = vadd.f32 0.0, %v3815
        %v3817 = vpop.f32.mrb[0].mxu0
        %v3818 = vpop.f32.mrb[0].mxu0
        %v3819 = vadd.f32 0.0, %v3818
        %v3820 = vpop.f32.mrb[0].mxu0
        %3821 = vmatprep.mubr.bf16.mxu0 %v3573
        %3822 = vmatmul.mubr.bf16.gmra.mrb[0].mxu0 %v3570
        %v3823 = vpop.f32.mrb[0].mxu0
        %v3824 = vadd.f32 0.0, %v3823
        %v3825 = vpop.f32.mrb[0].mxu0
        %v3826 = vpop.f32.mrb[0].mxu0
        %v3827 = vpop.f32.mrb[0].mxu0
        %3828 = vdwg.mxu0
        %3829 = vmatprep.subr.bf16.mxu0 0
        %3830 = vmatpush1.bf16.msra.mxu0 %v3733
        %3831 = vmatprep.subr.bf16.mxu0 0
        %3832 = vmatpush1.bf16.msra.mxu0 %v3734
        %3833 = vmatprep.subr.bf16.mxu0 0
        %3834 = vmatpush1.bf16.msra.mxu0 %v3735
        %3835 = vmatprep.subr.bf16.mxu0 0
        %3836 = vmatpush1.bf16.msra.mxu0 %v3736
        %3837 = vmatprep.subr.bf16.mxu0 0
        %3838 = vmatpush1.bf16.msra.mxu0 %v3737
        %3839 = vmatprep.subr.bf16.mxu0 0
        %3840 = vmatpush1.bf16.msra.mxu0 %v3738
        %3841 = vmatprep.subr.bf16.mxu0 0
        %3842 = vmatpush1.bf16.msra.mxu0 %v3739
        %3843 = vmatprep.subr.bf16.mxu0 0
        %3844 = vmatpush1.bf16.msra.mxu0 %v3740
        %3845 = vmatprep.subr.bf16.mxu0 0
        %3846 = vmatpush1.bf16.msra.mxu0 %v3741
        %3847 = vmatprep.subr.bf16.mxu0 0
        %3848 = vmatpush1.bf16.msra.mxu0 %v3742
        %3849 = vmatprep.subr.bf16.mxu0 0
        %3850 = vmatpush1.bf16.msra.mxu0 %v3743
        %3851 = vmatprep.subr.bf16.mxu0 0
        %3852 = vmatpush1.bf16.msra.mxu0 %v3744
        %3853 = vmatprep.subr.bf16.mxu0 0
        %3854 = vmatpush1.bf16.msra.mxu0 %v3745
        %3855 = vmatprep.subr.bf16.mxu0 0
        %3856 = vmatpush1.bf16.msra.mxu0 %v3746
        %3857 = vmatprep.subr.bf16.mxu0 0
        %3858 = vmatpush1.bf16.msra.mxu0 %v3747
        %3859 = vmatprep.subr.bf16.mxu0 0
        %3860 = vmatpush1.bf16.msra.mxu0 %v3748
        %3861 = vmatprep.mubr.bf16.mxu0 %v3580
        %3862 = vmatmul.mubr.bf16.gmra.mrb[0].mxu0 %v3577
        %v3863 = vpop.f32.mrb[0].mxu0
        %v3864 = vadd.f32 %v3816, %v3863
        %v3865 = vpop.f32.mrb[0].mxu0
        %v3866 = vpop.f32.mrb[0].mxu0
        %v3867 = vadd.f32 %v3819, %v3866
        %v3868 = vpop.f32.mrb[0].mxu0
        %3869 = vmatprep.mubr.bf16.mxu0 %v3579
        %3870 = vmatmul.mubr.bf16.gmra.mrb[0].mxu0 %v3576
        %v3871 = vpop.f32.mrb[0].mxu0
        %v3872 = vadd.f32 %v3824, %v3871
        %v3873 = vpop.f32.mrb[0].mxu0
        %v3874 = vpop.f32.mrb[0].mxu0
        %v3875 = vpop.f32.mrb[0].mxu0
        %3876 = vdwg.mxu0
        %v3877 = vadd.f32 %v3489, %v3864
        %v3878 = vadd.f32 %v3490, %v3867
        %v3879 = vadd.f32 %v3491, %v3872
        %v3880 = vld [vmem:[%s2] sm:$0x1]
        %v3882 = vlaneseq
        %v3883 = vshrl.u32 %v3882, 7
        %v3884 = vsub.s32 0, %v3883
        %v3885 = vrot.slane %v3880, %v3884
        %v3887 = vmul.f32 %v3877, %v3885
        %v3888 = vmul.f32 %v3878, %v3885
        %v3889 = vmul.f32 %v3879, %v3885
        %v3890 = vld [vmem:[%s3] sm:$0x1]
        %v3892 = vlaneseq
        %v3893 = vshrl.u32 %v3892, 7
        %v3894 = vsub.s32 0, %v3893
        %v3895 = vrot.slane %v3890, %v3894
        %v3897 = vadd.f32 %v3887, %v3895
        %v3898 = vadd.f32 %v3888, %v3895
        %v3899 = vadd.f32 %v3889, %v3895
        %v3900 = vmax.f32 %v3897, 0.0
        %v3901 = vmax.f32 %v3898, 0.0
        %v3902 = vmax.f32 %v3899, 0.0
        %vm3903 = vcmask 523264
        %3904 = vst.msk [vmem:[%s190] sm:$0xff] %vm3903, %v3900
        %3905 = vst.msk [vmem:[%s190 + $0x8] sm:$0xff] %vm3903, %v3901
        %3906 = vst.msk [vmem:[%s190 + $0x10] sm:$0xff] %vm3903, %v3902
        %s3907 = sand.u32 %s115, 1
        %s3908 = scalar_lea.sflag [#allocation3], %s3907
        %s3909 = sand.u32 %s115, 1
        %s3910 = smul.addr %s3909, 24
        %s3911 = scalar_lea.vmem [#allocation2], %s3910
        // Predicated region
        $region37: #{tpu_custom_call.1} parent=35 // pred_check
          %p3912 = pneg %p125
        $region38: #{tpu_custom_call.1} parent=35 // pred_check_branch
          %3914 = sbr.rel (%p3912) target = $region40
        $region39: #{tpu_custom_call.1} parent=35 // pred_region
          %s3916 = ssub.s32 384, 384
          %3917 = vsyncadd %s3908, %s3916
          %s3918 = smul.addr %s18, 3
          %s3919 = smul.addr %s3918, 128
          %s3920 = scalar_lea.hbm %s4, %s3919
          %s3921 = sshll.u32 %s3911, 4
          %s3922 = int_to_ptr.vmem [resolvable:$true] %s3921
          %3927 = dma.vmem_to_hbm [thread:$0]  %s3922, 384, %s3920, %s3908, 128, 128, 8
        $region40: #{tpu_custom_call.1} parent=35 // pred_fallthru
          _
      $region36: #{tpu_custom_call.1} parent=5 // pred_fallthru
        _
      %p3928 = scmp.le.s32.totalorder 2, %s13
      // Predicated region
      $region41: #{tpu_custom_call.1} parent=5 // pred_check
        %p3929 = pneg %p3928
      $region42: #{tpu_custom_call.1} parent=5 // pred_check_branch
        %3931 = sbr.rel (%p3929) target = $region44
      $region43: #{tpu_custom_call.1} parent=5 // pred_region
        %s3932 = ssub.s32 %s13, 2
        // Predicated region
        $region45: #{tpu_custom_call.1} parent=43 // pred_check
          %p3933 = pneg %p131
        $region46: #{tpu_custom_call.1} parent=43 // pred_check_branch
          %3935 = sbr.rel (%p3933) target = $region48
        $region47: #{tpu_custom_call.1} parent=43 // pred_region
          %s3936 = sand.u32 %s116, 1
          %s3937 = scalar_lea.sflag [#allocation3], %s3936
          %s3938 = sand.u32 %s116, 1
          %s3939 = smul.addr %s3938, 24
          %s3940 = scalar_lea.vmem [#allocation2], %s3939
          %3941 = dma.done %s3937, 384
        $region48: #{tpu_custom_call.1} parent=43 // pred_fallthru
          _
      $region44: #{tpu_custom_call.1} parent=5 // pred_fallthru
        _
    $region6: #{tpu_custom_call.1} parent=1 // loop_footer
      %s17 = sadd.s32 1, %s13
    $region7: #{tpu_custom_call.1} parent=1 // loop_footer_branch
      %12 = sbr.rel target = $region3
    $region8: #{tpu_custom_call.1} parent=1 // loop_exit
      _
    %3942 = vsyncpa [#allocation3], 1
    %s3943 = scalar_lea.sflag [#allocation3], 1
    %3944 = vsyncpa %s3943, 1

</llo_original>
